<compile_context>
chip_gen: v5e
topology: v5e:2x2
jax: 0.10.0
libtpu: 0.0.40
codegen_flags: <defaults>
</compile_context>

<pallas_src>
from functools import partial

import jax
import jax.numpy as jnp
from jax.experimental import pallas as pl
from jax.experimental.pallas import tpu as pltpu


# (Cin, Cout, K, pad) per Conv1d layer, matching the two branches of __init__.
ADVERSARY_CFG = [
    (1, 5, 3, 0), (5, 10, 3, 0), (10, 15, 3, 1),
    (15, 20, 3, 1), (20, 25, 3, 1), (25, 30, 3, 0),
]
AGENT_CFG = [
    (1, 4, 3, 0), (4, 8, 3, 0), (8, 16, 3, 0), (16, 32, 1, 0),
]

FC_DIM = 100
NUM_ACTIONS = 5
OUT_W = 1 + NUM_ACTIONS + NUM_ACTIONS   # [V | A | Q] merged output row
BATCH_BLOCK = 8                          # batch elements per grid step


def _cfgs(agent_name):
    return ADVERSARY_CFG if agent_name == 'adversary_0' else AGENT_CFG


def _ceil8(n):
    return -(-n // 8) * 8


def _build_layout(cfgs, L):
    """Static packing layout (row offsets into the (rows,128) param buffer)."""
    row = 0

    def alloc(nrows):
        nonlocal row
        off = row
        row += _ceil8(nrows)
        return off

    conv_w, conv_b, lens = [], [], []
    lin = L
    for (cin, cout, k, pad) in cfgs:
        conv_w.append([alloc(cin) for _ in range(k)])   # one (cin, cout) block per tap
        conv_b.append(alloc(1))
        lin = lin + 2 * pad - k + 1
        lens.append(lin)
    lout, c_last = lens[-1], cfgs[-1][1]
    fc_w = [alloc(c_last) for _ in range(lout)]          # (c_last, 100) block per position
    fc_b = alloc(1)
    va_w = alloc(FC_DIM)                                 # (100, 6) = [V | A] weights
    va_b = alloc(1)
    return dict(conv_w=conv_w, conv_b=conv_b, fc_w=fc_w, fc_b=fc_b,
                va_w=va_w, va_b=va_b, lens=lens, lout=lout,
                c_last=c_last, total_rows=row)


def init_params(key, obs_dim, agent_name):
    """Deterministic synthetic parameters with the same shapes as the PyTorch module."""
    cfgs = _cfgs(agent_name)
    convs = []
    for (cin, cout, k, pad) in cfgs:
        key, k1, k2 = jax.random.split(key, 3)
        bound = 1.0 / (cin * k) ** 0.5
        w = jax.random.uniform(k1, (cout, cin, k), jnp.float32, -bound, bound)
        b = jax.random.uniform(k2, (cout,), jnp.float32, -bound, bound)
        convs.append((w, b))

    def linear(k, fin, fout):
        k1, k2 = jax.random.split(k)
        bound = 1.0 / fin ** 0.5
        w = jax.random.uniform(k1, (fout, fin), jnp.float32, -bound, bound)
        b = jax.random.uniform(k2, (fout,), jnp.float32, -bound, bound)
        return w, b

    feat = (obs_dim - 6) * cfgs[-1][1]
    key, kfc, kv, ka = jax.random.split(key, 4)
    return {
        'convs': convs,
        'fc': linear(kfc, feat, FC_DIM),
        'V': linear(kv, FC_DIM, 1),
        'A': linear(ka, FC_DIM, NUM_ACTIONS),
    }


def pack_params(params, obs_dim, agent_name):
    """Pack all weights/biases into one (rows,128) f32 buffer. Done ONCE per model."""
    cfgs = _cfgs(agent_name)
    lay = _build_layout(cfgs, obs_dim)
    P = jnp.zeros((lay['total_rows'], 128), jnp.float32)

    # Conv taps: tap t of layer i stored as (cin, cout) = w[:, :, t].T, plus bias row.
    for (w, b), offs_w, off_b, (cin, cout, k, pad) in zip(
            params['convs'], lay['conv_w'], lay['conv_b'], cfgs):
        for t in range(k):
            P = P.at[offs_w[t]:offs_w[t] + cin, :cout].set(jnp.transpose(w[:, :, t]))
        P = P.at[off_b:off_b + 1, :cout].set(b.reshape(1, cout))

    # FC weight: permute from PyTorch channel-major flatten (c*L + l) to the conv
    # kernel's channels-last order: block l is W_l[c, o] = wfc[o, c*lout + l].
    wfc, bfc = params['fc']
    lout, c_last = lay['lout'], lay['c_last']
    wfc_lm = jnp.transpose(wfc.T.reshape(c_last, lout, FC_DIM), (1, 0, 2))  # (lout, C, 100)
    for l in range(lout):
        off = lay['fc_w'][l]
        P = P.at[off:off + c_last, :FC_DIM].set(wfc_lm[l])
    P = P.at[lay['fc_b']:lay['fc_b'] + 1, :FC_DIM].set(bfc.reshape(1, FC_DIM))

    # V and A heads fused into one (100, 6) matmul: col 0 = V, cols 1..5 = A.
    wv, bv = params['V']
    wa, ba = params['A']
    wva = jnp.concatenate([wv.T, wa.T], axis=1)                 # (100, 6)
    bva = jnp.concatenate([bv, ba]).reshape(1, 1 + NUM_ACTIONS)  # (1, 6)
    P = P.at[lay['va_w']:lay['va_w'] + FC_DIM, :1 + NUM_ACTIONS].set(wva)
    P = P.at[lay['va_b']:lay['va_b'] + 1, :1 + NUM_ACTIONS].set(bva)
    return P


def _make_fused_kernel(cfgs, L, lay, BB):
    """Whole network for a block of BB batch elements: conv stack + FC + heads."""
    lout, c_last = lay['lout'], lay['c_last']
    FDT = jnp.float32

    def kernel(x_ref, p_ref, out_ref, acc_ref):

        def one_element(bi):
            x = x_ref[bi].astype(FDT)            # (L, 1) channels-last input
            lin = L
            for li, (cin, cout, k, pad) in enumerate(cfgs):
                lo = lin + 2 * pad - k + 1
                w_offs = lay['conv_w'][li]
                b_off = lay['conv_b'][li]

                def tap(t, n, i0, _x=x, _cin=cin, _cout=cout, _w_offs=w_offs):
                    w = p_ref[_w_offs[t]:_w_offs[t] + _cin, 0:_cout]   # (cin, cout)
                    xs = _x[i0:i0 + n, :]                              # (n, cin)
                    if _cin == 1:
                        return xs * w                                  # outer product on VPU
                    return jnp.dot(xs, w, preferred_element_type=FDT)  # MXU

                if pad == 0:
                    # every tap covers the full output range -> pure vreg accumulation
                    acc = tap(0, lo, 0)
                    for t in range(1, k):
                        acc = acc + tap(t, lo, t)
                    pre = acc
                else:
                    # full-coverage tap (t == pad) initializes the scratch accumulator;
                    # boundary taps accumulate into offset sub-ranges (no concat/zero-pad)
                    acc_ref[0:lo, 0:cout] = tap(pad, lo, 0)
                    for t in range(k):
                        if t == pad:
                            continue
                        o0 = max(0, pad - t)
                        o1 = min(lo, lin + pad - t)
                        i0 = o0 + t - pad
                        acc_ref[o0:o1, 0:cout] = (acc_ref[o0:o1, 0:cout]
                                                  + tap(t, o1 - o0, i0))
                    pre = acc_ref[0:lo, 0:cout]

                bias = p_ref[b_off:b_off + 1, 0:cout]                  # (1, cout)
                x = jnp.maximum(pre + bias, 0.0)                       # bias + ReLU
                lin = lo

            # ---- fc(100) + ReLU: consumes channels-last conv output directly ----
            off0 = lay['fc_w'][0]
            h = jnp.dot(x[0:1, :], p_ref[off0:off0 + c_last, 0:FC_DIM],
                        preferred_element_type=FDT)
            for l in range(1, lout):
                off = lay['fc_w'][l]
                h = h + jnp.dot(x[l:l + 1, :], p_ref[off:off + c_last, 0:FC_DIM],
                                preferred_element_type=FDT)
            h = jnp.maximum(h + p_ref[lay['fc_b']:lay['fc_b'] + 1, 0:FC_DIM], 0.0)

            # ---- V / A heads (single matmul) + dueling combine ----
            va = (jnp.dot(h, p_ref[lay['va_w']:lay['va_w'] + FC_DIM,
                                   0:1 + NUM_ACTIONS],
                          preferred_element_type=FDT)
                  + p_ref[lay['va_b']:lay['va_b'] + 1, 0:1 + NUM_ACTIONS])  # (1, 6)
            v = va[:, 0:1]
            a = va[:, 1:1 + NUM_ACTIONS]
            q = v + (a - jnp.mean(a, axis=1, keepdims=True))

            out_ref[bi, 0:1, 0:1] = v
            out_ref[bi, 0:1, 1:1 + NUM_ACTIONS] = a
            out_ref[bi, 0:1, 1 + NUM_ACTIONS:OUT_W] = q

        # statically unrolled batch block (amortizes grid-step / DMA overhead)
        for bi in range(BB):
            one_element(bi)

    return kernel


@partial(jax.jit, static_argnames=('agent_name',))
def dddqn_forward(packed_params, obs, agent_name):
    """obs: (B, 1, obs_dim) float32, NCW like PyTorch. Returns (V, A, Q)."""
    cfgs = _cfgs(agent_name)
    B, _, L = obs.shape
    lay = _build_layout(cfgs, L)

    # Batch blocking: BB elements per grid step; pad batch to a multiple of BB.
    BB = B if B <= BATCH_BLOCK else BATCH_BLOCK
    B_pad = -(-B // BB) * BB

    # (B,1,L) -> (B,L,1) is a free reshape (identical row-major order).
    x_cl = obs.reshape(B, L, 1).astype(jnp.float32)
    if B_pad != B:
        x_cl = jnp.concatenate(
            [x_cl, jnp.zeros((B_pad - B, L, 1), jnp.float32)], axis=0)

    acc_rows = _ceil8(max(max(lay['lens']), 8))

    out = pl.pallas_call(
        _make_fused_kernel(cfgs, L, lay, BB),
        out_shape=jax.ShapeDtypeStruct((B_pad, 1, OUT_W), jnp.float32),
        grid=(B_pad // BB,),
        in_specs=[
            pl.BlockSpec((BB, L, 1), lambda b: (b, 0, 0)),               # BB obs rows / step
            pl.BlockSpec((lay['total_rows'], 128), lambda b: (0, 0)),    # packed params (1 DMA)
        ],
        out_specs=pl.BlockSpec((BB, 1, OUT_W), lambda b: (b, 0, 0)),     # merged [V|A|Q] tiles
        scratch_shapes=[pltpu.VMEM((acc_rows, 128), jnp.float32)],       # padded-conv accumulator
        compiler_params=pltpu.CompilerParams(
            dimension_semantics=("parallel",)),                          # megacore on v7x
    )(x_cl, packed_params)

    V = out[:B, 0, 0:1]
    A = out[:B, 0, 1:1 + NUM_ACTIONS]
    Q = out[:B, 0, 1 + NUM_ACTIONS:OUT_W]
    return V, A, Q


def _reference_forward(params, obs, agent_name):
    """Pure-JAX reference matching the PyTorch module exactly (for validation)."""
    cfgs = _cfgs(agent_name)
    B = obs.shape[0]
    x = obs.astype(jnp.float32)                                   # (B, 1, L) NCW
    hi = jax.lax.Precision.HIGHEST
    for (w, b), (cin, cout, k, pad) in zip(params['convs'], cfgs):
        x = jax.lax.conv_general_dilated(
            x, w, window_strides=(1,), padding=[(pad, pad)],
            dimension_numbers=('NCH', 'OIH', 'NCH'), precision=hi)
        x = jax.nn.relu(x + b[None, :, None])
    flat = x.reshape(B, -1)                                       # channel-major flatten
    wfc, bfc = params['fc']
    h = jax.nn.relu(jnp.dot(flat, wfc.T, precision=hi) + bfc)
    wv, bv = params['V']
    wa, ba = params['A']
    V = jnp.dot(h, wv.T, precision=hi) + bv
    A = jnp.dot(h, wa.T, precision=hi) + ba
    Q = V + (A - A.mean(axis=1, keepdims=True))
    return V, A, Q


if __name__ == "__main__":
    key = jax.random.PRNGKey(0)
    B, obs_dim = 2, 16
    kp, kx = jax.random.split(key)
    obs = jax.random.normal(kx, (B, 1, obs_dim), jnp.float32)

    for agent_name in ('adversary_0', 'agent_0'):
        params = init_params(kp, obs_dim, agent_name)
        packed = pack_params(params, obs_dim, agent_name)        # one-time packing
        V, A, Q = dddqn_forward(packed, obs, agent_name)
        jax.block_until_ready((V, A, Q))
        assert V.shape == (B, 1) and A.shape == (B, NUM_ACTIONS) and Q.shape == (B, NUM_ACTIONS)

        Vr, Ar, Qr = _reference_forward(params, obs, agent_name)
        assert bool(jnp.allclose(V, Vr, rtol=2e-2, atol=1e-2)), "V mismatch"
        assert bool(jnp.allclose(A, Ar, rtol=2e-2, atol=1e-2)), "A mismatch"
        assert bool(jnp.allclose(Q, Qr, rtol=2e-2, atol=1e-2)), "Q mismatch"

    print("KERNEL_OK")
</pallas_src>

<mosaic_0001>
module attributes {stable_mosaic.version = 11 : i64} {
  func.func @kernel(%arg0: i32, %arg1: memref<2x16x1xf32, #tpu.memory_space<vmem>>, %arg2: memref<800x128xf32, #tpu.memory_space<vmem>>, %arg3: memref<2x1x11xf32, #tpu.memory_space<vmem>>, %arg4: memref<16x128xf32, #tpu.memory_space<vmem>>) attributes {dimension_semantics = [#tpu.dimension_semantics<parallel>], iteration_bounds = array<i64: 1>, scalar_prefetch = 0 : i64, scratch_operands = 1 : i64, tpu.core_type = #tpu.core_type<tc>, window_params = [{transform_indices = @transform_0, window_bounds = array<i64: 2, 16, 1>}, {pipeline_mode = #tpu.pipeline_mode<synchronous>, transform_indices = @transform_1, window_bounds = array<i64: 800, 128>}, {transform_indices = @transform_2, window_bounds = array<i64: 2, 1, 11>}]} {
    %c0 = arith.constant 0 : index
    %c0_0 = arith.constant 0 : index
    %c0_1 = arith.constant 0 : index
    %0 = vector.load %arg1[%c0, %c0_0, %c0_1] : memref<2x16x1xf32, #tpu.memory_space<vmem>>, vector<1x16x1xf32>
    %1 = vector.shape_cast %0 : vector<1x16x1xf32> to vector<16x1xf32>
    %c0_2 = arith.constant 0 : index
    %c0_3 = arith.constant 0 : index
    %2 = vector.load %arg2[%c0_2, %c0_3] : memref<800x128xf32, #tpu.memory_space<vmem>>, vector<1x5xf32>
    %3 = vector.extract_strided_slice %1 {offsets = [0, 0], sizes = [14, 1], strides = [1, 1]} : vector<16x1xf32> to vector<14x1xf32>
    %4 = vector.broadcast %3 : vector<14x1xf32> to vector<14x5xf32>
    %5 = vector.broadcast %2 : vector<1x5xf32> to vector<14x5xf32>
    %6 = arith.mulf %4, %5 : vector<14x5xf32>
    %c8 = arith.constant 8 : index
    %c0_4 = arith.constant 0 : index
    %7 = vector.load %arg2[%c8, %c0_4] : memref<800x128xf32, #tpu.memory_space<vmem>>, vector<1x5xf32>
    %8 = vector.extract_strided_slice %1 {offsets = [1, 0], sizes = [14, 1], strides = [1, 1]} : vector<16x1xf32> to vector<14x1xf32>
    %9 = vector.broadcast %8 : vector<14x1xf32> to vector<14x5xf32>
    %10 = vector.broadcast %7 : vector<1x5xf32> to vector<14x5xf32>
    %11 = arith.mulf %9, %10 : vector<14x5xf32>
    %12 = arith.addf %6, %11 : vector<14x5xf32>
    %c16 = arith.constant 16 : index
    %c0_5 = arith.constant 0 : index
    %13 = vector.load %arg2[%c16, %c0_5] : memref<800x128xf32, #tpu.memory_space<vmem>>, vector<1x5xf32>
    %14 = vector.extract_strided_slice %1 {offsets = [2, 0], sizes = [14, 1], strides = [1, 1]} : vector<16x1xf32> to vector<14x1xf32>
    %15 = vector.broadcast %14 : vector<14x1xf32> to vector<14x5xf32>
    %16 = vector.broadcast %13 : vector<1x5xf32> to vector<14x5xf32>
    %17 = arith.mulf %15, %16 : vector<14x5xf32>
    %18 = arith.addf %12, %17 : vector<14x5xf32>
    %c24 = arith.constant 24 : index
    %c0_6 = arith.constant 0 : index
    %19 = vector.load %arg2[%c24, %c0_6] : memref<800x128xf32, #tpu.memory_space<vmem>>, vector<1x5xf32>
    %20 = vector.broadcast %19 : vector<1x5xf32> to vector<14x5xf32>
    %21 = arith.addf %18, %20 : vector<14x5xf32>
    %cst = arith.constant 0.000000e+00 : f32
    %22 = vector.broadcast %cst : f32 to vector<14x5xf32>
    %23 = arith.maximumf %21, %22 : vector<14x5xf32>
    %c32 = arith.constant 32 : index
    %c0_7 = arith.constant 0 : index
    %24 = vector.load %arg2[%c32, %c0_7] : memref<800x128xf32, #tpu.memory_space<vmem>>, vector<5x10xf32>
    %25 = vector.extract_strided_slice %23 {offsets = [0, 0], sizes = [12, 5], strides = [1, 1]} : vector<14x5xf32> to vector<12x5xf32>
    %cst_8 = arith.constant dense<0.000000e+00> : vector<12x10xf32>
    %26 = tpu.matmul %25, %24, %cst_8 {dimension_numbers = #tpu.dot_dimension_numbers<[1], [0], [0], [1], [0, 0, 1, 1], [], []>} : vector<12x5xf32>, vector<5x10xf32>, vector<12x10xf32> -> vector<12x10xf32>
    %c40 = arith.constant 40 : index
    %c0_9 = arith.constant 0 : index
    %27 = vector.load %arg2[%c40, %c0_9] : memref<800x128xf32, #tpu.memory_space<vmem>>, vector<5x10xf32>
    %28 = vector.extract_strided_slice %23 {offsets = [1, 0], sizes = [12, 5], strides = [1, 1]} : vector<14x5xf32> to vector<12x5xf32>
    %cst_10 = arith.constant dense<0.000000e+00> : vector<12x10xf32>
    %29 = tpu.matmul %28, %27, %cst_10 {dimension_numbers = #tpu.dot_dimension_numbers<[1], [0], [0], [1], [0, 0, 1, 1], [], []>} : vector<12x5xf32>, vector<5x10xf32>, vector<12x10xf32> -> vector<12x10xf32>
    %30 = arith.addf %26, %29 : vector<12x10xf32>
    %c48 = arith.constant 48 : index
    %c0_11 = arith.constant 0 : index
    %31 = vector.load %arg2[%c48, %c0_11] : memref<800x128xf32, #tpu.memory_space<vmem>>, vector<5x10xf32>
    %32 = vector.extract_strided_slice %23 {offsets = [2, 0], sizes = [12, 5], strides = [1, 1]} : vector<14x5xf32> to vector<12x5xf32>
    %cst_12 = arith.constant dense<0.000000e+00> : vector<12x10xf32>
    %33 = tpu.matmul %32, %31, %cst_12 {dimension_numbers = #tpu.dot_dimension_numbers<[1], [0], [0], [1], [0, 0, 1, 1], [], []>} : vector<12x5xf32>, vector<5x10xf32>, vector<12x10xf32> -> vector<12x10xf32>
    %34 = arith.addf %30, %33 : vector<12x10xf32>
    %c56 = arith.constant 56 : index
    %c0_13 = arith.constant 0 : index
    %35 = vector.load %arg2[%c56, %c0_13] : memref<800x128xf32, #tpu.memory_space<vmem>>, vector<1x10xf32>
    %36 = vector.broadcast %35 : vector<1x10xf32> to vector<12x10xf32>
    %37 = arith.addf %34, %36 : vector<12x10xf32>
    %cst_14 = arith.constant 0.000000e+00 : f32
    %38 = vector.broadcast %cst_14 : f32 to vector<12x10xf32>
    %39 = arith.maximumf %37, %38 : vector<12x10xf32>
    %c80 = arith.constant 80 : index
    %c0_15 = arith.constant 0 : index
    %40 = vector.load %arg2[%c80, %c0_15] : memref<800x128xf32, #tpu.memory_space<vmem>>, vector<10x15xf32>
    %cst_16 = arith.constant dense<0.000000e+00> : vector<12x15xf32>
    %41 = tpu.matmul %39, %40, %cst_16 {dimension_numbers = #tpu.dot_dimension_numbers<[1], [0], [0], [1], [0, 0, 1, 1], [], []>} : vector<12x10xf32>, vector<10x15xf32>, vector<12x15xf32> -> vector<12x15xf32>
    %c0_17 = arith.constant 0 : index
    %c0_18 = arith.constant 0 : index
    %42 = vector.load %arg4[%c0_17, %c0_18] : memref<16x128xf32, #tpu.memory_space<vmem>>, vector<12x15xf32>
    tpu.vector_store %arg4[%c0_17, %c0_18], %41 {strides = array<i32>} : memref<16x128xf32, #tpu.memory_space<vmem>>, vector<12x15xf32>,
    %c1 = arith.constant 1 : index
    %c0_19 = arith.constant 0 : index
    %43 = vector.load %arg4[%c1, %c0_19] : memref<16x128xf32, #tpu.memory_space<vmem>>, vector<11x15xf32>
    %c64 = arith.constant 64 : index
    %c0_20 = arith.constant 0 : index
    %44 = vector.load %arg2[%c64, %c0_20] : memref<800x128xf32, #tpu.memory_space<vmem>>, vector<10x15xf32>
    %45 = vector.extract_strided_slice %39 {offsets = [0, 0], sizes = [11, 10], strides = [1, 1]} : vector<12x10xf32> to vector<11x10xf32>
    %cst_21 = arith.constant dense<0.000000e+00> : vector<11x15xf32>
    %46 = tpu.matmul %45, %44, %cst_21 {dimension_numbers = #tpu.dot_dimension_numbers<[1], [0], [0], [1], [0, 0, 1, 1], [], []>} : vector<11x10xf32>, vector<10x15xf32>, vector<11x15xf32> -> vector<11x15xf32>
    %47 = arith.addf %43, %46 : vector<11x15xf32>
    %c1_22 = arith.constant 1 : index
    %c0_23 = arith.constant 0 : index
    %48 = vector.load %arg4[%c1_22, %c0_23] : memref<16x128xf32, #tpu.memory_space<vmem>>, vector<11x15xf32>
    tpu.vector_store %arg4[%c1_22, %c0_23], %47 {strides = array<i32>} : memref<16x128xf32, #tpu.memory_space<vmem>>, vector<11x15xf32>,
    %c0_24 = arith.constant 0 : index
    %c0_25 = arith.constant 0 : index
    %49 = vector.load %arg4[%c0_24, %c0_25] : memref<16x128xf32, #tpu.memory_space<vmem>>, vector<11x15xf32>
    %c96 = arith.constant 96 : index
    %c0_26 = arith.constant 0 : index
    %50 = vector.load %arg2[%c96, %c0_26] : memref<800x128xf32, #tpu.memory_space<vmem>>, vector<10x15xf32>
    %51 = vector.extract_strided_slice %39 {offsets = [1, 0], sizes = [11, 10], strides = [1, 1]} : vector<12x10xf32> to vector<11x10xf32>
    %cst_27 = arith.constant dense<0.000000e+00> : vector<11x15xf32>
    %52 = tpu.matmul %51, %50, %cst_27 {dimension_numbers = #tpu.dot_dimension_numbers<[1], [0], [0], [1], [0, 0, 1, 1], [], []>} : vector<11x10xf32>, vector<10x15xf32>, vector<11x15xf32> -> vector<11x15xf32>
    %53 = arith.addf %49, %52 : vector<11x15xf32>
    %c0_28 = arith.constant 0 : index
    %c0_29 = arith.constant 0 : index
    %54 = vector.load %arg4[%c0_28, %c0_29] : memref<16x128xf32, #tpu.memory_space<vmem>>, vector<11x15xf32>
    tpu.vector_store %arg4[%c0_28, %c0_29], %53 {strides = array<i32>} : memref<16x128xf32, #tpu.memory_space<vmem>>, vector<11x15xf32>,
    %c0_30 = arith.constant 0 : index
    %c0_31 = arith.constant 0 : index
    %55 = vector.load %arg4[%c0_30, %c0_31] : memref<16x128xf32, #tpu.memory_space<vmem>>, vector<12x15xf32>
    %c112 = arith.constant 112 : index
    %c0_32 = arith.constant 0 : index
    %56 = vector.load %arg2[%c112, %c0_32] : memref<800x128xf32, #tpu.memory_space<vmem>>, vector<1x15xf32>
    %57 = vector.broadcast %56 : vector<1x15xf32> to vector<12x15xf32>
    %58 = arith.addf %55, %57 : vector<12x15xf32>
    %cst_33 = arith.constant 0.000000e+00 : f32
    %59 = vector.broadcast %cst_33 : f32 to vector<12x15xf32>
    %60 = arith.maximumf %58, %59 : vector<12x15xf32>
    %c136 = arith.constant 136 : index
    %c0_34 = arith.constant 0 : index
    %61 = vector.load %arg2[%c136, %c0_34] : memref<800x128xf32, #tpu.memory_space<vmem>>, vector<15x20xf32>
    %cst_35 = arith.constant dense<0.000000e+00> : vector<12x20xf32>
    %62 = tpu.matmul %60, %61, %cst_35 {dimension_numbers = #tpu.dot_dimension_numbers<[1], [0], [0], [1], [0, 0, 1, 1], [], []>} : vector<12x15xf32>, vector<15x20xf32>, vector<12x20xf32> -> vector<12x20xf32>
    %c0_36 = arith.constant 0 : index
    %c0_37 = arith.constant 0 : index
    %63 = vector.load %arg4[%c0_36, %c0_37] : memref<16x128xf32, #tpu.memory_space<vmem>>, vector<12x20xf32>
    tpu.vector_store %arg4[%c0_36, %c0_37], %62 {strides = array<i32>} : memref<16x128xf32, #tpu.memory_space<vmem>>, vector<12x20xf32>,
    %c1_38 = arith.constant 1 : index
    %c0_39 = arith.constant 0 : index
    %64 = vector.load %arg4[%c1_38, %c0_39] : memref<16x128xf32, #tpu.memory_space<vmem>>, vector<11x20xf32>
    %c120 = arith.constant 120 : index
    %c0_40 = arith.constant 0 : index
    %65 = vector.load %arg2[%c120, %c0_40] : memref<800x128xf32, #tpu.memory_space<vmem>>, vector<15x20xf32>
    %66 = vector.extract_strided_slice %60 {offsets = [0, 0], sizes = [11, 15], strides = [1, 1]} : vector<12x15xf32> to vector<11x15xf32>
    %cst_41 = arith.constant dense<0.000000e+00> : vector<11x20xf32>
    %67 = tpu.matmul %66, %65, %cst_41 {dimension_numbers = #tpu.dot_dimension_numbers<[1], [0], [0], [1], [0, 0, 1, 1], [], []>} : vector<11x15xf32>, vector<15x20xf32>, vector<11x20xf32> -> vector<11x20xf32>
    %68 = arith.addf %64, %67 : vector<11x20xf32>
    %c1_42 = arith.constant 1 : index
    %c0_43 = arith.constant 0 : index
    %69 = vector.load %arg4[%c1_42, %c0_43] : memref<16x128xf32, #tpu.memory_space<vmem>>, vector<11x20xf32>
    tpu.vector_store %arg4[%c1_42, %c0_43], %68 {strides = array<i32>} : memref<16x128xf32, #tpu.memory_space<vmem>>, vector<11x20xf32>,
    %c0_44 = arith.constant 0 : index
    %c0_45 = arith.constant 0 : index
    %70 = vector.load %arg4[%c0_44, %c0_45] : memref<16x128xf32, #tpu.memory_space<vmem>>, vector<11x20xf32>
    %c152 = arith.constant 152 : index
    %c0_46 = arith.constant 0 : index
    %71 = vector.load %arg2[%c152, %c0_46] : memref<800x128xf32, #tpu.memory_space<vmem>>, vector<15x20xf32>
    %72 = vector.extract_strided_slice %60 {offsets = [1, 0], sizes = [11, 15], strides = [1, 1]} : vector<12x15xf32> to vector<11x15xf32>
    %cst_47 = arith.constant dense<0.000000e+00> : vector<11x20xf32>
    %73 = tpu.matmul %72, %71, %cst_47 {dimension_numbers = #tpu.dot_dimension_numbers<[1], [0], [0], [1], [0, 0, 1, 1], [], []>} : vector<11x15xf32>, vector<15x20xf32>, vector<11x20xf32> -> vector<11x20xf32>
    %74 = arith.addf %70, %73 : vector<11x20xf32>
    %c0_48 = arith.constant 0 : index
    %c0_49 = arith.constant 0 : index
    %75 = vector.load %arg4[%c0_48, %c0_49] : memref<16x128xf32, #tpu.memory_space<vmem>>, vector<11x20xf32>
    tpu.vector_store %arg4[%c0_48, %c0_49], %74 {strides = array<i32>} : memref<16x128xf32, #tpu.memory_space<vmem>>, vector<11x20xf32>,
    %c0_50 = arith.constant 0 : index
    %c0_51 = arith.constant 0 : index
    %76 = vector.load %arg4[%c0_50, %c0_51] : memref<16x128xf32, #tpu.memory_space<vmem>>, vector<12x20xf32>
    %c168 = arith.constant 168 : index
    %c0_52 = arith.constant 0 : index
    %77 = vector.load %arg2[%c168, %c0_52] : memref<800x128xf32, #tpu.memory_space<vmem>>, vector<1x20xf32>
    %78 = vector.broadcast %77 : vector<1x20xf32> to vector<12x20xf32>
    %79 = arith.addf %76, %78 : vector<12x20xf32>
    %cst_53 = arith.constant 0.000000e+00 : f32
    %80 = vector.broadcast %cst_53 : f32 to vector<12x20xf32>
    %81 = arith.maximumf %79, %80 : vector<12x20xf32>
    %c200 = arith.constant 200 : index
    %c0_54 = arith.constant 0 : index
    %82 = vector.load %arg2[%c200, %c0_54] : memref<800x128xf32, #tpu.memory_space<vmem>>, vector<20x25xf32>
    %cst_55 = arith.constant dense<0.000000e+00> : vector<12x25xf32>
    %83 = tpu.matmul %81, %82, %cst_55 {dimension_numbers = #tpu.dot_dimension_numbers<[1], [0], [0], [1], [0, 0, 1, 1], [], []>} : vector<12x20xf32>, vector<20x25xf32>, vector<12x25xf32> -> vector<12x25xf32>
    %c0_56 = arith.constant 0 : index
    %c0_57 = arith.constant 0 : index
    %84 = vector.load %arg4[%c0_56, %c0_57] : memref<16x128xf32, #tpu.memory_space<vmem>>, vector<12x25xf32>
    tpu.vector_store %arg4[%c0_56, %c0_57], %83 {strides = array<i32>} : memref<16x128xf32, #tpu.memory_space<vmem>>, vector<12x25xf32>,
    %c1_58 = arith.constant 1 : index
    %c0_59 = arith.constant 0 : index
    %85 = vector.load %arg4[%c1_58, %c0_59] : memref<16x128xf32, #tpu.memory_space<vmem>>, vector<11x25xf32>
    %c176 = arith.constant 176 : index
    %c0_60 = arith.constant 0 : index
    %86 = vector.load %arg2[%c176, %c0_60] : memref<800x128xf32, #tpu.memory_space<vmem>>, vector<20x25xf32>
    %87 = vector.extract_strided_slice %81 {offsets = [0, 0], sizes = [11, 20], strides = [1, 1]} : vector<12x20xf32> to vector<11x20xf32>
    %cst_61 = arith.constant dense<0.000000e+00> : vector<11x25xf32>
    %88 = tpu.matmul %87, %86, %cst_61 {dimension_numbers = #tpu.dot_dimension_numbers<[1], [0], [0], [1], [0, 0, 1, 1], [], []>} : vector<11x20xf32>, vector<20x25xf32>, vector<11x25xf32> -> vector<11x25xf32>
    %89 = arith.addf %85, %88 : vector<11x25xf32>
    %c1_62 = arith.constant 1 : index
    %c0_63 = arith.constant 0 : index
    %90 = vector.load %arg4[%c1_62, %c0_63] : memref<16x128xf32, #tpu.memory_space<vmem>>, vector<11x25xf32>
    tpu.vector_store %arg4[%c1_62, %c0_63], %89 {strides = array<i32>} : memref<16x128xf32, #tpu.memory_space<vmem>>, vector<11x25xf32>,
    %c0_64 = arith.constant 0 : index
    %c0_65 = arith.constant 0 : index
    %91 = vector.load %arg4[%c0_64, %c0_65] : memref<16x128xf32, #tpu.memory_space<vmem>>, vector<11x25xf32>
    %c224 = arith.constant 224 : index
    %c0_66 = arith.constant 0 : index
    %92 = vector.load %arg2[%c224, %c0_66] : memref<800x128xf32, #tpu.memory_space<vmem>>, vector<20x25xf32>
    %93 = vector.extract_strided_slice %81 {offsets = [1, 0], sizes = [11, 20], strides = [1, 1]} : vector<12x20xf32> to vector<11x20xf32>
    %cst_67 = arith.constant dense<0.000000e+00> : vector<11x25xf32>
    %94 = tpu.matmul %93, %92, %cst_67 {dimension_numbers = #tpu.dot_dimension_numbers<[1], [0], [0], [1], [0, 0, 1, 1], [], []>} : vector<11x20xf32>, vector<20x25xf32>, vector<11x25xf32> -> vector<11x25xf32>
    %95 = arith.addf %91, %94 : vector<11x25xf32>
    %c0_68 = arith.constant 0 : index
    %c0_69 = arith.constant 0 : index
    %96 = vector.load %arg4[%c0_68, %c0_69] : memref<16x128xf32, #tpu.memory_space<vmem>>, vector<11x25xf32>
    tpu.vector_store %arg4[%c0_68, %c0_69], %95 {strides = array<i32>} : memref<16x128xf32, #tpu.memory_space<vmem>>, vector<11x25xf32>,
    %c0_70 = arith.constant 0 : index
    %c0_71 = arith.constant 0 : index
    %97 = vector.load %arg4[%c0_70, %c0_71] : memref<16x128xf32, #tpu.memory_space<vmem>>, vector<12x25xf32>
    %c248 = arith.constant 248 : index
    %c0_72 = arith.constant 0 : index
    %98 = vector.load %arg2[%c248, %c0_72] : memref<800x128xf32, #tpu.memory_space<vmem>>, vector<1x25xf32>
    %99 = vector.broadcast %98 : vector<1x25xf32> to vector<12x25xf32>
    %100 = arith.addf %97, %99 : vector<12x25xf32>
    %cst_73 = arith.constant 0.000000e+00 : f32
    %101 = vector.broadcast %cst_73 : f32 to vector<12x25xf32>
    %102 = arith.maximumf %100, %101 : vector<12x25xf32>
    %c256 = arith.constant 256 : index
    %c0_74 = arith.constant 0 : index
    %103 = vector.load %arg2[%c256, %c0_74] : memref<800x128xf32, #tpu.memory_space<vmem>>, vector<25x30xf32>
    %104 = vector.extract_strided_slice %102 {offsets = [0, 0], sizes = [10, 25], strides = [1, 1]} : vector<12x25xf32> to vector<10x25xf32>
    %cst_75 = arith.constant dense<0.000000e+00> : vector<10x30xf32>
    %105 = tpu.matmul %104, %103, %cst_75 {dimension_numbers = #tpu.dot_dimension_numbers<[1], [0], [0], [1], [0, 0, 1, 1], [], []>} : vector<10x25xf32>, vector<25x30xf32>, vector<10x30xf32> -> vector<10x30xf32>
    %c288 = arith.constant 288 : index
    %c0_76 = arith.constant 0 : index
    %106 = vector.load %arg2[%c288, %c0_76] : memref<800x128xf32, #tpu.memory_space<vmem>>, vector<25x30xf32>
    %107 = vector.extract_strided_slice %102 {offsets = [1, 0], sizes = [10, 25], strides = [1, 1]} : vector<12x25xf32> to vector<10x25xf32>
    %cst_77 = arith.constant dense<0.000000e+00> : vector<10x30xf32>
    %108 = tpu.matmul %107, %106, %cst_77 {dimension_numbers = #tpu.dot_dimension_numbers<[1], [0], [0], [1], [0, 0, 1, 1], [], []>} : vector<10x25xf32>, vector<25x30xf32>, vector<10x30xf32> -> vector<10x30xf32>
    %109 = arith.addf %105, %108 : vector<10x30xf32>
    %c320 = arith.constant 320 : index
    %c0_78 = arith.constant 0 : index
    %110 = vector.load %arg2[%c320, %c0_78] : memref<800x128xf32, #tpu.memory_space<vmem>>, vector<25x30xf32>
    %111 = vector.extract_strided_slice %102 {offsets = [2, 0], sizes = [10, 25], strides = [1, 1]} : vector<12x25xf32> to vector<10x25xf32>
    %cst_79 = arith.constant dense<0.000000e+00> : vector<10x30xf32>
    %112 = tpu.matmul %111, %110, %cst_79 {dimension_numbers = #tpu.dot_dimension_numbers<[1], [0], [0], [1], [0, 0, 1, 1], [], []>} : vector<10x25xf32>, vector<25x30xf32>, vector<10x30xf32> -> vector<10x30xf32>
    %113 = arith.addf %109, %112 : vector<10x30xf32>
    %c352 = arith.constant 352 : index
    %c0_80 = arith.constant 0 : index
    %114 = vector.load %arg2[%c352, %c0_80] : memref<800x128xf32, #tpu.memory_space<vmem>>, vector<1x30xf32>
    %115 = vector.broadcast %114 : vector<1x30xf32> to vector<10x30xf32>
    %116 = arith.addf %113, %115 : vector<10x30xf32>
    %cst_81 = arith.constant 0.000000e+00 : f32
    %117 = vector.broadcast %cst_81 : f32 to vector<10x30xf32>
    %118 = arith.maximumf %116, %117 : vector<10x30xf32>
    %119 = vector.extract_strided_slice %118 {offsets = [0, 0], sizes = [1, 30], strides = [1, 1]} : vector<10x30xf32> to vector<1x30xf32>
    %c360 = arith.constant 360 : index
    %c0_82 = arith.constant 0 : index
    %120 = vector.load %arg2[%c360, %c0_82] : memref<800x128xf32, #tpu.memory_space<vmem>>, vector<30x100xf32>
    %cst_83 = arith.constant dense<0.000000e+00> : vector<1x100xf32>
    %121 = tpu.matmul %119, %120, %cst_83 {dimension_numbers = #tpu.dot_dimension_numbers<[1], [0], [0], [1], [0, 0, 1, 1], [], []>} : vector<1x30xf32>, vector<30x100xf32>, vector<1x100xf32> -> vector<1x100xf32>
    %122 = vector.extract_strided_slice %118 {offsets = [1, 0], sizes = [1, 30], strides = [1, 1]} : vector<10x30xf32> to vector<1x30xf32>
    %c392 = arith.constant 392 : index
    %c0_84 = arith.constant 0 : index
    %123 = vector.load %arg2[%c392, %c0_84] : memref<800x128xf32, #tpu.memory_space<vmem>>, vector<30x100xf32>
    %cst_85 = arith.constant dense<0.000000e+00> : vector<1x100xf32>
    %124 = tpu.matmul %122, %123, %cst_85 {dimension_numbers = #tpu.dot_dimension_numbers<[1], [0], [0], [1], [0, 0, 1, 1], [], []>} : vector<1x30xf32>, vector<30x100xf32>, vector<1x100xf32> -> vector<1x100xf32>
    %125 = arith.addf %121, %124 : vector<1x100xf32>
    %126 = vector.extract_strided_slice %118 {offsets = [2, 0], sizes = [1, 30], strides = [1, 1]} : vector<10x30xf32> to vector<1x30xf32>
    %c424 = arith.constant 424 : index
    %c0_86 = arith.constant 0 : index
    %127 = vector.load %arg2[%c424, %c0_86] : memref<800x128xf32, #tpu.memory_space<vmem>>, vector<30x100xf32>
    %cst_87 = arith.constant dense<0.000000e+00> : vector<1x100xf32>
    %128 = tpu.matmul %126, %127, %cst_87 {dimension_numbers = #tpu.dot_dimension_numbers<[1], [0], [0], [1], [0, 0, 1, 1], [], []>} : vector<1x30xf32>, vector<30x100xf32>, vector<1x100xf32> -> vector<1x100xf32>
    %129 = arith.addf %125, %128 : vector<1x100xf32>
    %130 = vector.extract_strided_slice %118 {offsets = [3, 0], sizes = [1, 30], strides = [1, 1]} : vector<10x30xf32> to vector<1x30xf32>
    %c456 = arith.constant 456 : index
    %c0_88 = arith.constant 0 : index
    %131 = vector.load %arg2[%c456, %c0_88] : memref<800x128xf32, #tpu.memory_space<vmem>>, vector<30x100xf32>
    %cst_89 = arith.constant dense<0.000000e+00> : vector<1x100xf32>
    %132 = tpu.matmul %130, %131, %cst_89 {dimension_numbers = #tpu.dot_dimension_numbers<[1], [0], [0], [1], [0, 0, 1, 1], [], []>} : vector<1x30xf32>, vector<30x100xf32>, vector<1x100xf32> -> vector<1x100xf32>
    %133 = arith.addf %129, %132 : vector<1x100xf32>
    %134 = vector.extract_strided_slice %118 {offsets = [4, 0], sizes = [1, 30], strides = [1, 1]} : vector<10x30xf32> to vector<1x30xf32>
    %c488 = arith.constant 488 : index
    %c0_90 = arith.constant 0 : index
    %135 = vector.load %arg2[%c488, %c0_90] : memref<800x128xf32, #tpu.memory_space<vmem>>, vector<30x100xf32>
    %cst_91 = arith.constant dense<0.000000e+00> : vector<1x100xf32>
    %136 = tpu.matmul %134, %135, %cst_91 {dimension_numbers = #tpu.dot_dimension_numbers<[1], [0], [0], [1], [0, 0, 1, 1], [], []>} : vector<1x30xf32>, vector<30x100xf32>, vector<1x100xf32> -> vector<1x100xf32>
    %137 = arith.addf %133, %136 : vector<1x100xf32>
    %138 = vector.extract_strided_slice %118 {offsets = [5, 0], sizes = [1, 30], strides = [1, 1]} : vector<10x30xf32> to vector<1x30xf32>
    %c520 = arith.constant 520 : index
    %c0_92 = arith.constant 0 : index
    %139 = vector.load %arg2[%c520, %c0_92] : memref<800x128xf32, #tpu.memory_space<vmem>>, vector<30x100xf32>
    %cst_93 = arith.constant dense<0.000000e+00> : vector<1x100xf32>
    %140 = tpu.matmul %138, %139, %cst_93 {dimension_numbers = #tpu.dot_dimension_numbers<[1], [0], [0], [1], [0, 0, 1, 1], [], []>} : vector<1x30xf32>, vector<30x100xf32>, vector<1x100xf32> -> vector<1x100xf32>
    %141 = arith.addf %137, %140 : vector<1x100xf32>
    %142 = vector.extract_strided_slice %118 {offsets = [6, 0], sizes = [1, 30], strides = [1, 1]} : vector<10x30xf32> to vector<1x30xf32>
    %c552 = arith.constant 552 : index
    %c0_94 = arith.constant 0 : index
    %143 = vector.load %arg2[%c552, %c0_94] : memref<800x128xf32, #tpu.memory_space<vmem>>, vector<30x100xf32>
    %cst_95 = arith.constant dense<0.000000e+00> : vector<1x100xf32>
    %144 = tpu.matmul %142, %143, %cst_95 {dimension_numbers = #tpu.dot_dimension_numbers<[1], [0], [0], [1], [0, 0, 1, 1], [], []>} : vector<1x30xf32>, vector<30x100xf32>, vector<1x100xf32> -> vector<1x100xf32>
    %145 = arith.addf %141, %144 : vector<1x100xf32>
    %146 = vector.extract_strided_slice %118 {offsets = [7, 0], sizes = [1, 30], strides = [1, 1]} : vector<10x30xf32> to vector<1x30xf32>
    %c584 = arith.constant 584 : index
    %c0_96 = arith.constant 0 : index
    %147 = vector.load %arg2[%c584, %c0_96] : memref<800x128xf32, #tpu.memory_space<vmem>>, vector<30x100xf32>
    %cst_97 = arith.constant dense<0.000000e+00> : vector<1x100xf32>
    %148 = tpu.matmul %146, %147, %cst_97 {dimension_numbers = #tpu.dot_dimension_numbers<[1], [0], [0], [1], [0, 0, 1, 1], [], []>} : vector<1x30xf32>, vector<30x100xf32>, vector<1x100xf32> -> vector<1x100xf32>
    %149 = arith.addf %145, %148 : vector<1x100xf32>
    %150 = vector.extract_strided_slice %118 {offsets = [8, 0], sizes = [1, 30], strides = [1, 1]} : vector<10x30xf32> to vector<1x30xf32>
    %c616 = arith.constant 616 : index
    %c0_98 = arith.constant 0 : index
    %151 = vector.load %arg2[%c616, %c0_98] : memref<800x128xf32, #tpu.memory_space<vmem>>, vector<30x100xf32>
    %cst_99 = arith.constant dense<0.000000e+00> : vector<1x100xf32>
    %152 = tpu.matmul %150, %151, %cst_99 {dimension_numbers = #tpu.dot_dimension_numbers<[1], [0], [0], [1], [0, 0, 1, 1], [], []>} : vector<1x30xf32>, vector<30x100xf32>, vector<1x100xf32> -> vector<1x100xf32>
    %153 = arith.addf %149, %152 : vector<1x100xf32>
    %154 = vector.extract_strided_slice %118 {offsets = [9, 0], sizes = [1, 30], strides = [1, 1]} : vector<10x30xf32> to vector<1x30xf32>
    %c648 = arith.constant 648 : index
    %c0_100 = arith.constant 0 : index
    %155 = vector.load %arg2[%c648, %c0_100] : memref<800x128xf32, #tpu.memory_space<vmem>>, vector<30x100xf32>
    %cst_101 = arith.constant dense<0.000000e+00> : vector<1x100xf32>
    %156 = tpu.matmul %154, %155, %cst_101 {dimension_numbers = #tpu.dot_dimension_numbers<[1], [0], [0], [1], [0, 0, 1, 1], [], []>} : vector<1x30xf32>, vector<30x100xf32>, vector<1x100xf32> -> vector<1x100xf32>
    %157 = arith.addf %153, %156 : vector<1x100xf32>
    %c680 = arith.constant 680 : index
    %c0_102 = arith.constant 0 : index
    %158 = vector.load %arg2[%c680, %c0_102] : memref<800x128xf32, #tpu.memory_space<vmem>>, vector<1x100xf32>
    %159 = arith.addf %157, %158 : vector<1x100xf32>
    %cst_103 = arith.constant 0.000000e+00 : f32
    %160 = vector.broadcast %cst_103 : f32 to vector<1x100xf32>
    %161 = arith.maximumf %159, %160 : vector<1x100xf32>
    %c688 = arith.constant 688 : index
    %c0_104 = arith.constant 0 : index
    %162 = vector.load %arg2[%c688, %c0_104] : memref<800x128xf32, #tpu.memory_space<vmem>>, vector<100x6xf32>
    %cst_105 = arith.constant dense<0.000000e+00> : vector<1x6xf32>
    %163 = tpu.matmul %161, %162, %cst_105 {dimension_numbers = #tpu.dot_dimension_numbers<[1], [0], [0], [1], [0, 0, 1, 1], [], []>} : vector<1x100xf32>, vector<100x6xf32>, vector<1x6xf32> -> vector<1x6xf32>
    %c792 = arith.constant 792 : index
    %c0_106 = arith.constant 0 : index
    %164 = vector.load %arg2[%c792, %c0_106] : memref<800x128xf32, #tpu.memory_space<vmem>>, vector<1x6xf32>
    %165 = arith.addf %163, %164 : vector<1x6xf32>
    %166 = vector.extract_strided_slice %165 {offsets = [0, 0], sizes = [1, 1], strides = [1, 1]} : vector<1x6xf32> to vector<1x1xf32>
    %167 = vector.extract_strided_slice %165 {offsets = [0, 1], sizes = [1, 5], strides = [1, 1]} : vector<1x6xf32> to vector<1x5xf32>
    %cst_107 = arith.constant dense<0.000000e+00> : vector<1xf32>
    %168 = vector.multi_reduction <add>, %167, %cst_107 [1] : vector<1x5xf32> to vector<1xf32>
    %169 = vector.shape_cast %168 : vector<1xf32> to vector<1x1xf32>
    %cst_108 = arith.constant 5.000000e+00 : f32
    %170 = vector.broadcast %cst_108 : f32 to vector<1x1xf32>
    %171 = arith.divf %169, %170 : vector<1x1xf32>
    %172 = vector.broadcast %171 : vector<1x1xf32> to vector<1x5xf32>
    %173 = arith.subf %167, %172 : vector<1x5xf32>
    %174 = vector.broadcast %166 : vector<1x1xf32> to vector<1x5xf32>
    %175 = arith.addf %174, %173 : vector<1x5xf32>
    %c0_109 = arith.constant 0 : index
    %c0_110 = arith.constant 0 : index
    %c0_111 = arith.constant 0 : index
    %176 = vector.load %arg3[%c0_109, %c0_110, %c0_111] : memref<2x1x11xf32, #tpu.memory_space<vmem>>, vector<1x1x1xf32>
    %177 = vector.shape_cast %176 : vector<1x1x1xf32> to vector<1x1xf32>
    %178 = vector.shape_cast %166 : vector<1x1xf32> to vector<1x1x1xf32>
    tpu.vector_store %arg3[%c0_109, %c0_110, %c0_111], %178 {strides = array<i32>} : memref<2x1x11xf32, #tpu.memory_space<vmem>>, vector<1x1x1xf32>,
    %c0_112 = arith.constant 0 : index
    %c0_113 = arith.constant 0 : index
    %c1_114 = arith.constant 1 : index
    %179 = vector.load %arg3[%c0_112, %c0_113, %c1_114] : memref<2x1x11xf32, #tpu.memory_space<vmem>>, vector<1x1x5xf32>
    %180 = vector.shape_cast %179 : vector<1x1x5xf32> to vector<1x5xf32>
    %181 = vector.shape_cast %167 : vector<1x5xf32> to vector<1x1x5xf32>
    tpu.vector_store %arg3[%c0_112, %c0_113, %c1_114], %181 {strides = array<i32>} : memref<2x1x11xf32, #tpu.memory_space<vmem>>, vector<1x1x5xf32>,
    %c0_115 = arith.constant 0 : index
    %c0_116 = arith.constant 0 : index
    %c6 = arith.constant 6 : index
    %182 = vector.load %arg3[%c0_115, %c0_116, %c6] : memref<2x1x11xf32, #tpu.memory_space<vmem>>, vector<1x1x5xf32>
    %183 = vector.shape_cast %182 : vector<1x1x5xf32> to vector<1x5xf32>
    %184 = vector.shape_cast %175 : vector<1x5xf32> to vector<1x1x5xf32>
    tpu.vector_store %arg3[%c0_115, %c0_116, %c6], %184 {strides = array<i32>} : memref<2x1x11xf32, #tpu.memory_space<vmem>>, vector<1x1x5xf32>,
    %c1_117 = arith.constant 1 : index
    %c0_118 = arith.constant 0 : index
    %c0_119 = arith.constant 0 : index
    %185 = vector.load %arg1[%c1_117, %c0_118, %c0_119] : memref<2x16x1xf32, #tpu.memory_space<vmem>>, vector<1x16x1xf32>
    %186 = vector.shape_cast %185 : vector<1x16x1xf32> to vector<16x1xf32>
    %c0_120 = arith.constant 0 : index
    %c0_121 = arith.constant 0 : index
    %187 = vector.load %arg2[%c0_120, %c0_121] : memref<800x128xf32, #tpu.memory_space<vmem>>, vector<1x5xf32>
    %188 = vector.extract_strided_slice %186 {offsets = [0, 0], sizes = [14, 1], strides = [1, 1]} : vector<16x1xf32> to vector<14x1xf32>
    %189 = vector.broadcast %188 : vector<14x1xf32> to vector<14x5xf32>
    %190 = vector.broadcast %187 : vector<1x5xf32> to vector<14x5xf32>
    %191 = arith.mulf %189, %190 : vector<14x5xf32>
    %c8_122 = arith.constant 8 : index
    %c0_123 = arith.constant 0 : index
    %192 = vector.load %arg2[%c8_122, %c0_123] : memref<800x128xf32, #tpu.memory_space<vmem>>, vector<1x5xf32>
    %193 = vector.extract_strided_slice %186 {offsets = [1, 0], sizes = [14, 1], strides = [1, 1]} : vector<16x1xf32> to vector<14x1xf32>
    %194 = vector.broadcast %193 : vector<14x1xf32> to vector<14x5xf32>
    %195 = vector.broadcast %192 : vector<1x5xf32> to vector<14x5xf32>
    %196 = arith.mulf %194, %195 : vector<14x5xf32>
    %197 = arith.addf %191, %196 : vector<14x5xf32>
    %c16_124 = arith.constant 16 : index
    %c0_125 = arith.constant 0 : index
    %198 = vector.load %arg2[%c16_124, %c0_125] : memref<800x128xf32, #tpu.memory_space<vmem>>, vector<1x5xf32>
    %199 = vector.extract_strided_slice %186 {offsets = [2, 0], sizes = [14, 1], strides = [1, 1]} : vector<16x1xf32> to vector<14x1xf32>
    %200 = vector.broadcast %199 : vector<14x1xf32> to vector<14x5xf32>
    %201 = vector.broadcast %198 : vector<1x5xf32> to vector<14x5xf32>
    %202 = arith.mulf %200, %201 : vector<14x5xf32>
    %203 = arith.addf %197, %202 : vector<14x5xf32>
    %c24_126 = arith.constant 24 : index
    %c0_127 = arith.constant 0 : index
    %204 = vector.load %arg2[%c24_126, %c0_127] : memref<800x128xf32, #tpu.memory_space<vmem>>, vector<1x5xf32>
    %205 = vector.broadcast %204 : vector<1x5xf32> to vector<14x5xf32>
    %206 = arith.addf %203, %205 : vector<14x5xf32>
    %cst_128 = arith.constant 0.000000e+00 : f32
    %207 = vector.broadcast %cst_128 : f32 to vector<14x5xf32>
    %208 = arith.maximumf %206, %207 : vector<14x5xf32>
    %c32_129 = arith.constant 32 : index
    %c0_130 = arith.constant 0 : index
    %209 = vector.load %arg2[%c32_129, %c0_130] : memref<800x128xf32, #tpu.memory_space<vmem>>, vector<5x10xf32>
    %210 = vector.extract_strided_slice %208 {offsets = [0, 0], sizes = [12, 5], strides = [1, 1]} : vector<14x5xf32> to vector<12x5xf32>
    %cst_131 = arith.constant dense<0.000000e+00> : vector<12x10xf32>
    %211 = tpu.matmul %210, %209, %cst_131 {dimension_numbers = #tpu.dot_dimension_numbers<[1], [0], [0], [1], [0, 0, 1, 1], [], []>} : vector<12x5xf32>, vector<5x10xf32>, vector<12x10xf32> -> vector<12x10xf32>
    %c40_132 = arith.constant 40 : index
    %c0_133 = arith.constant 0 : index
    %212 = vector.load %arg2[%c40_132, %c0_133] : memref<800x128xf32, #tpu.memory_space<vmem>>, vector<5x10xf32>
    %213 = vector.extract_strided_slice %208 {offsets = [1, 0], sizes = [12, 5], strides = [1, 1]} : vector<14x5xf32> to vector<12x5xf32>
    %cst_134 = arith.constant dense<0.000000e+00> : vector<12x10xf32>
    %214 = tpu.matmul %213, %212, %cst_134 {dimension_numbers = #tpu.dot_dimension_numbers<[1], [0], [0], [1], [0, 0, 1, 1], [], []>} : vector<12x5xf32>, vector<5x10xf32>, vector<12x10xf32> -> vector<12x10xf32>
    %215 = arith.addf %211, %214 : vector<12x10xf32>
    %c48_135 = arith.constant 48 : index
    %c0_136 = arith.constant 0 : index
    %216 = vector.load %arg2[%c48_135, %c0_136] : memref<800x128xf32, #tpu.memory_space<vmem>>, vector<5x10xf32>
    %217 = vector.extract_strided_slice %208 {offsets = [2, 0], sizes = [12, 5], strides = [1, 1]} : vector<14x5xf32> to vector<12x5xf32>
    %cst_137 = arith.constant dense<0.000000e+00> : vector<12x10xf32>
    %218 = tpu.matmul %217, %216, %cst_137 {dimension_numbers = #tpu.dot_dimension_numbers<[1], [0], [0], [1], [0, 0, 1, 1], [], []>} : vector<12x5xf32>, vector<5x10xf32>, vector<12x10xf32> -> vector<12x10xf32>
    %219 = arith.addf %215, %218 : vector<12x10xf32>
    %c56_138 = arith.constant 56 : index
    %c0_139 = arith.constant 0 : index
    %220 = vector.load %arg2[%c56_138, %c0_139] : memref<800x128xf32, #tpu.memory_space<vmem>>, vector<1x10xf32>
    %221 = vector.broadcast %220 : vector<1x10xf32> to vector<12x10xf32>
    %222 = arith.addf %219, %221 : vector<12x10xf32>
    %cst_140 = arith.constant 0.000000e+00 : f32
    %223 = vector.broadcast %cst_140 : f32 to vector<12x10xf32>
    %224 = arith.maximumf %222, %223 : vector<12x10xf32>
    %c80_141 = arith.constant 80 : index
    %c0_142 = arith.constant 0 : index
    %225 = vector.load %arg2[%c80_141, %c0_142] : memref<800x128xf32, #tpu.memory_space<vmem>>, vector<10x15xf32>
    %cst_143 = arith.constant dense<0.000000e+00> : vector<12x15xf32>
    %226 = tpu.matmul %224, %225, %cst_143 {dimension_numbers = #tpu.dot_dimension_numbers<[1], [0], [0], [1], [0, 0, 1, 1], [], []>} : vector<12x10xf32>, vector<10x15xf32>, vector<12x15xf32> -> vector<12x15xf32>
    %c0_144 = arith.constant 0 : index
    %c0_145 = arith.constant 0 : index
    %227 = vector.load %arg4[%c0_144, %c0_145] : memref<16x128xf32, #tpu.memory_space<vmem>>, vector<12x15xf32>
    tpu.vector_store %arg4[%c0_144, %c0_145], %226 {strides = array<i32>} : memref<16x128xf32, #tpu.memory_space<vmem>>, vector<12x15xf32>,
    %c1_146 = arith.constant 1 : index
    %c0_147 = arith.constant 0 : index
    %228 = vector.load %arg4[%c1_146, %c0_147] : memref<16x128xf32, #tpu.memory_space<vmem>>, vector<11x15xf32>
    %c64_148 = arith.constant 64 : index
    %c0_149 = arith.constant 0 : index
    %229 = vector.load %arg2[%c64_148, %c0_149] : memref<800x128xf32, #tpu.memory_space<vmem>>, vector<10x15xf32>
    %230 = vector.extract_strided_slice %224 {offsets = [0, 0], sizes = [11, 10], strides = [1, 1]} : vector<12x10xf32> to vector<11x10xf32>
    %cst_150 = arith.constant dense<0.000000e+00> : vector<11x15xf32>
    %231 = tpu.matmul %230, %229, %cst_150 {dimension_numbers = #tpu.dot_dimension_numbers<[1], [0], [0], [1], [0, 0, 1, 1], [], []>} : vector<11x10xf32>, vector<10x15xf32>, vector<11x15xf32> -> vector<11x15xf32>
    %232 = arith.addf %228, %231 : vector<11x15xf32>
    %c1_151 = arith.constant 1 : index
    %c0_152 = arith.constant 0 : index
    %233 = vector.load %arg4[%c1_151, %c0_152] : memref<16x128xf32, #tpu.memory_space<vmem>>, vector<11x15xf32>
    tpu.vector_store %arg4[%c1_151, %c0_152], %232 {strides = array<i32>} : memref<16x128xf32, #tpu.memory_space<vmem>>, vector<11x15xf32>,
    %c0_153 = arith.constant 0 : index
    %c0_154 = arith.constant 0 : index
    %234 = vector.load %arg4[%c0_153, %c0_154] : memref<16x128xf32, #tpu.memory_space<vmem>>, vector<11x15xf32>
    %c96_155 = arith.constant 96 : index
    %c0_156 = arith.constant 0 : index
    %235 = vector.load %arg2[%c96_155, %c0_156] : memref<800x128xf32, #tpu.memory_space<vmem>>, vector<10x15xf32>
    %236 = vector.extract_strided_slice %224 {offsets = [1, 0], sizes = [11, 10], strides = [1, 1]} : vector<12x10xf32> to vector<11x10xf32>
    %cst_157 = arith.constant dense<0.000000e+00> : vector<11x15xf32>
    %237 = tpu.matmul %236, %235, %cst_157 {dimension_numbers = #tpu.dot_dimension_numbers<[1], [0], [0], [1], [0, 0, 1, 1], [], []>} : vector<11x10xf32>, vector<10x15xf32>, vector<11x15xf32> -> vector<11x15xf32>
    %238 = arith.addf %234, %237 : vector<11x15xf32>
    %c0_158 = arith.constant 0 : index
    %c0_159 = arith.constant 0 : index
    %239 = vector.load %arg4[%c0_158, %c0_159] : memref<16x128xf32, #tpu.memory_space<vmem>>, vector<11x15xf32>
    tpu.vector_store %arg4[%c0_158, %c0_159], %238 {strides = array<i32>} : memref<16x128xf32, #tpu.memory_space<vmem>>, vector<11x15xf32>,
    %c0_160 = arith.constant 0 : index
    %c0_161 = arith.constant 0 : index
    %240 = vector.load %arg4[%c0_160, %c0_161] : memref<16x128xf32, #tpu.memory_space<vmem>>, vector<12x15xf32>
    %c112_162 = arith.constant 112 : index
    %c0_163 = arith.constant 0 : index
    %241 = vector.load %arg2[%c112_162, %c0_163] : memref<800x128xf32, #tpu.memory_space<vmem>>, vector<1x15xf32>
    %242 = vector.broadcast %241 : vector<1x15xf32> to vector<12x15xf32>
    %243 = arith.addf %240, %242 : vector<12x15xf32>
    %cst_164 = arith.constant 0.000000e+00 : f32
    %244 = vector.broadcast %cst_164 : f32 to vector<12x15xf32>
    %245 = arith.maximumf %243, %244 : vector<12x15xf32>
    %c136_165 = arith.constant 136 : index
    %c0_166 = arith.constant 0 : index
    %246 = vector.load %arg2[%c136_165, %c0_166] : memref<800x128xf32, #tpu.memory_space<vmem>>, vector<15x20xf32>
    %cst_167 = arith.constant dense<0.000000e+00> : vector<12x20xf32>
    %247 = tpu.matmul %245, %246, %cst_167 {dimension_numbers = #tpu.dot_dimension_numbers<[1], [0], [0], [1], [0, 0, 1, 1], [], []>} : vector<12x15xf32>, vector<15x20xf32>, vector<12x20xf32> -> vector<12x20xf32>
    %c0_168 = arith.constant 0 : index
    %c0_169 = arith.constant 0 : index
    %248 = vector.load %arg4[%c0_168, %c0_169] : memref<16x128xf32, #tpu.memory_space<vmem>>, vector<12x20xf32>
    tpu.vector_store %arg4[%c0_168, %c0_169], %247 {strides = array<i32>} : memref<16x128xf32, #tpu.memory_space<vmem>>, vector<12x20xf32>,
    %c1_170 = arith.constant 1 : index
    %c0_171 = arith.constant 0 : index
    %249 = vector.load %arg4[%c1_170, %c0_171] : memref<16x128xf32, #tpu.memory_space<vmem>>, vector<11x20xf32>
    %c120_172 = arith.constant 120 : index
    %c0_173 = arith.constant 0 : index
    %250 = vector.load %arg2[%c120_172, %c0_173] : memref<800x128xf32, #tpu.memory_space<vmem>>, vector<15x20xf32>
    %251 = vector.extract_strided_slice %245 {offsets = [0, 0], sizes = [11, 15], strides = [1, 1]} : vector<12x15xf32> to vector<11x15xf32>
    %cst_174 = arith.constant dense<0.000000e+00> : vector<11x20xf32>
    %252 = tpu.matmul %251, %250, %cst_174 {dimension_numbers = #tpu.dot_dimension_numbers<[1], [0], [0], [1], [0, 0, 1, 1], [], []>} : vector<11x15xf32>, vector<15x20xf32>, vector<11x20xf32> -> vector<11x20xf32>
    %253 = arith.addf %249, %252 : vector<11x20xf32>
    %c1_175 = arith.constant 1 : index
    %c0_176 = arith.constant 0 : index
    %254 = vector.load %arg4[%c1_175, %c0_176] : memref<16x128xf32, #tpu.memory_space<vmem>>, vector<11x20xf32>
    tpu.vector_store %arg4[%c1_175, %c0_176], %253 {strides = array<i32>} : memref<16x128xf32, #tpu.memory_space<vmem>>, vector<11x20xf32>,
    %c0_177 = arith.constant 0 : index
    %c0_178 = arith.constant 0 : index
    %255 = vector.load %arg4[%c0_177, %c0_178] : memref<16x128xf32, #tpu.memory_space<vmem>>, vector<11x20xf32>
    %c152_179 = arith.constant 152 : index
    %c0_180 = arith.constant 0 : index
    %256 = vector.load %arg2[%c152_179, %c0_180] : memref<800x128xf32, #tpu.memory_space<vmem>>, vector<15x20xf32>
    %257 = vector.extract_strided_slice %245 {offsets = [1, 0], sizes = [11, 15], strides = [1, 1]} : vector<12x15xf32> to vector<11x15xf32>
    %cst_181 = arith.constant dense<0.000000e+00> : vector<11x20xf32>
    %258 = tpu.matmul %257, %256, %cst_181 {dimension_numbers = #tpu.dot_dimension_numbers<[1], [0], [0], [1], [0, 0, 1, 1], [], []>} : vector<11x15xf32>, vector<15x20xf32>, vector<11x20xf32> -> vector<11x20xf32>
    %259 = arith.addf %255, %258 : vector<11x20xf32>
    %c0_182 = arith.constant 0 : index
    %c0_183 = arith.constant 0 : index
    %260 = vector.load %arg4[%c0_182, %c0_183] : memref<16x128xf32, #tpu.memory_space<vmem>>, vector<11x20xf32>
    tpu.vector_store %arg4[%c0_182, %c0_183], %259 {strides = array<i32>} : memref<16x128xf32, #tpu.memory_space<vmem>>, vector<11x20xf32>,
    %c0_184 = arith.constant 0 : index
    %c0_185 = arith.constant 0 : index
    %261 = vector.load %arg4[%c0_184, %c0_185] : memref<16x128xf32, #tpu.memory_space<vmem>>, vector<12x20xf32>
    %c168_186 = arith.constant 168 : index
    %c0_187 = arith.constant 0 : index
    %262 = vector.load %arg2[%c168_186, %c0_187] : memref<800x128xf32, #tpu.memory_space<vmem>>, vector<1x20xf32>
    %263 = vector.broadcast %262 : vector<1x20xf32> to vector<12x20xf32>
    %264 = arith.addf %261, %263 : vector<12x20xf32>
    %cst_188 = arith.constant 0.000000e+00 : f32
    %265 = vector.broadcast %cst_188 : f32 to vector<12x20xf32>
    %266 = arith.maximumf %264, %265 : vector<12x20xf32>
    %c200_189 = arith.constant 200 : index
    %c0_190 = arith.constant 0 : index
    %267 = vector.load %arg2[%c200_189, %c0_190] : memref<800x128xf32, #tpu.memory_space<vmem>>, vector<20x25xf32>
    %cst_191 = arith.constant dense<0.000000e+00> : vector<12x25xf32>
    %268 = tpu.matmul %266, %267, %cst_191 {dimension_numbers = #tpu.dot_dimension_numbers<[1], [0], [0], [1], [0, 0, 1, 1], [], []>} : vector<12x20xf32>, vector<20x25xf32>, vector<12x25xf32> -> vector<12x25xf32>
    %c0_192 = arith.constant 0 : index
    %c0_193 = arith.constant 0 : index
    %269 = vector.load %arg4[%c0_192, %c0_193] : memref<16x128xf32, #tpu.memory_space<vmem>>, vector<12x25xf32>
    tpu.vector_store %arg4[%c0_192, %c0_193], %268 {strides = array<i32>} : memref<16x128xf32, #tpu.memory_space<vmem>>, vector<12x25xf32>,
    %c1_194 = arith.constant 1 : index
    %c0_195 = arith.constant 0 : index
    %270 = vector.load %arg4[%c1_194, %c0_195] : memref<16x128xf32, #tpu.memory_space<vmem>>, vector<11x25xf32>
    %c176_196 = arith.constant 176 : index
    %c0_197 = arith.constant 0 : index
    %271 = vector.load %arg2[%c176_196, %c0_197] : memref<800x128xf32, #tpu.memory_space<vmem>>, vector<20x25xf32>
    %272 = vector.extract_strided_slice %266 {offsets = [0, 0], sizes = [11, 20], strides = [1, 1]} : vector<12x20xf32> to vector<11x20xf32>
    %cst_198 = arith.constant dense<0.000000e+00> : vector<11x25xf32>
    %273 = tpu.matmul %272, %271, %cst_198 {dimension_numbers = #tpu.dot_dimension_numbers<[1], [0], [0], [1], [0, 0, 1, 1], [], []>} : vector<11x20xf32>, vector<20x25xf32>, vector<11x25xf32> -> vector<11x25xf32>
    %274 = arith.addf %270, %273 : vector<11x25xf32>
    %c1_199 = arith.constant 1 : index
    %c0_200 = arith.constant 0 : index
    %275 = vector.load %arg4[%c1_199, %c0_200] : memref<16x128xf32, #tpu.memory_space<vmem>>, vector<11x25xf32>
    tpu.vector_store %arg4[%c1_199, %c0_200], %274 {strides = array<i32>} : memref<16x128xf32, #tpu.memory_space<vmem>>, vector<11x25xf32>,
    %c0_201 = arith.constant 0 : index
    %c0_202 = arith.constant 0 : index
    %276 = vector.load %arg4[%c0_201, %c0_202] : memref<16x128xf32, #tpu.memory_space<vmem>>, vector<11x25xf32>
    %c224_203 = arith.constant 224 : index
    %c0_204 = arith.constant 0 : index
    %277 = vector.load %arg2[%c224_203, %c0_204] : memref<800x128xf32, #tpu.memory_space<vmem>>, vector<20x25xf32>
    %278 = vector.extract_strided_slice %266 {offsets = [1, 0], sizes = [11, 20], strides = [1, 1]} : vector<12x20xf32> to vector<11x20xf32>
    %cst_205 = arith.constant dense<0.000000e+00> : vector<11x25xf32>
    %279 = tpu.matmul %278, %277, %cst_205 {dimension_numbers = #tpu.dot_dimension_numbers<[1], [0], [0], [1], [0, 0, 1, 1], [], []>} : vector<11x20xf32>, vector<20x25xf32>, vector<11x25xf32> -> vector<11x25xf32>
    %280 = arith.addf %276, %279 : vector<11x25xf32>
    %c0_206 = arith.constant 0 : index
    %c0_207 = arith.constant 0 : index
    %281 = vector.load %arg4[%c0_206, %c0_207] : memref<16x128xf32, #tpu.memory_space<vmem>>, vector<11x25xf32>
    tpu.vector_store %arg4[%c0_206, %c0_207], %280 {strides = array<i32>} : memref<16x128xf32, #tpu.memory_space<vmem>>, vector<11x25xf32>,
    %c0_208 = arith.constant 0 : index
    %c0_209 = arith.constant 0 : index
    %282 = vector.load %arg4[%c0_208, %c0_209] : memref<16x128xf32, #tpu.memory_space<vmem>>, vector<12x25xf32>
    %c248_210 = arith.constant 248 : index
    %c0_211 = arith.constant 0 : index
    %283 = vector.load %arg2[%c248_210, %c0_211] : memref<800x128xf32, #tpu.memory_space<vmem>>, vector<1x25xf32>
    %284 = vector.broadcast %283 : vector<1x25xf32> to vector<12x25xf32>
    %285 = arith.addf %282, %284 : vector<12x25xf32>
    %cst_212 = arith.constant 0.000000e+00 : f32
    %286 = vector.broadcast %cst_212 : f32 to vector<12x25xf32>
    %287 = arith.maximumf %285, %286 : vector<12x25xf32>
    %c256_213 = arith.constant 256 : index
    %c0_214 = arith.constant 0 : index
    %288 = vector.load %arg2[%c256_213, %c0_214] : memref<800x128xf32, #tpu.memory_space<vmem>>, vector<25x30xf32>
    %289 = vector.extract_strided_slice %287 {offsets = [0, 0], sizes = [10, 25], strides = [1, 1]} : vector<12x25xf32> to vector<10x25xf32>
    %cst_215 = arith.constant dense<0.000000e+00> : vector<10x30xf32>
    %290 = tpu.matmul %289, %288, %cst_215 {dimension_numbers = #tpu.dot_dimension_numbers<[1], [0], [0], [1], [0, 0, 1, 1], [], []>} : vector<10x25xf32>, vector<25x30xf32>, vector<10x30xf32> -> vector<10x30xf32>
    %c288_216 = arith.constant 288 : index
    %c0_217 = arith.constant 0 : index
    %291 = vector.load %arg2[%c288_216, %c0_217] : memref<800x128xf32, #tpu.memory_space<vmem>>, vector<25x30xf32>
    %292 = vector.extract_strided_slice %287 {offsets = [1, 0], sizes = [10, 25], strides = [1, 1]} : vector<12x25xf32> to vector<10x25xf32>
    %cst_218 = arith.constant dense<0.000000e+00> : vector<10x30xf32>
    %293 = tpu.matmul %292, %291, %cst_218 {dimension_numbers = #tpu.dot_dimension_numbers<[1], [0], [0], [1], [0, 0, 1, 1], [], []>} : vector<10x25xf32>, vector<25x30xf32>, vector<10x30xf32> -> vector<10x30xf32>
    %294 = arith.addf %290, %293 : vector<10x30xf32>
    %c320_219 = arith.constant 320 : index
    %c0_220 = arith.constant 0 : index
    %295 = vector.load %arg2[%c320_219, %c0_220] : memref<800x128xf32, #tpu.memory_space<vmem>>, vector<25x30xf32>
    %296 = vector.extract_strided_slice %287 {offsets = [2, 0], sizes = [10, 25], strides = [1, 1]} : vector<12x25xf32> to vector<10x25xf32>
    %cst_221 = arith.constant dense<0.000000e+00> : vector<10x30xf32>
    %297 = tpu.matmul %296, %295, %cst_221 {dimension_numbers = #tpu.dot_dimension_numbers<[1], [0], [0], [1], [0, 0, 1, 1], [], []>} : vector<10x25xf32>, vector<25x30xf32>, vector<10x30xf32> -> vector<10x30xf32>
    %298 = arith.addf %294, %297 : vector<10x30xf32>
    %c352_222 = arith.constant 352 : index
    %c0_223 = arith.constant 0 : index
    %299 = vector.load %arg2[%c352_222, %c0_223] : memref<800x128xf32, #tpu.memory_space<vmem>>, vector<1x30xf32>
    %300 = vector.broadcast %299 : vector<1x30xf32> to vector<10x30xf32>
    %301 = arith.addf %298, %300 : vector<10x30xf32>
    %cst_224 = arith.constant 0.000000e+00 : f32
    %302 = vector.broadcast %cst_224 : f32 to vector<10x30xf32>
    %303 = arith.maximumf %301, %302 : vector<10x30xf32>
    %304 = vector.extract_strided_slice %303 {offsets = [0, 0], sizes = [1, 30], strides = [1, 1]} : vector<10x30xf32> to vector<1x30xf32>
    %c360_225 = arith.constant 360 : index
    %c0_226 = arith.constant 0 : index
    %305 = vector.load %arg2[%c360_225, %c0_226] : memref<800x128xf32, #tpu.memory_space<vmem>>, vector<30x100xf32>
    %cst_227 = arith.constant dense<0.000000e+00> : vector<1x100xf32>
    %306 = tpu.matmul %304, %305, %cst_227 {dimension_numbers = #tpu.dot_dimension_numbers<[1], [0], [0], [1], [0, 0, 1, 1], [], []>} : vector<1x30xf32>, vector<30x100xf32>, vector<1x100xf32> -> vector<1x100xf32>
    %307 = vector.extract_strided_slice %303 {offsets = [1, 0], sizes = [1, 30], strides = [1, 1]} : vector<10x30xf32> to vector<1x30xf32>
    %c392_228 = arith.constant 392 : index
    %c0_229 = arith.constant 0 : index
    %308 = vector.load %arg2[%c392_228, %c0_229] : memref<800x128xf32, #tpu.memory_space<vmem>>, vector<30x100xf32>
    %cst_230 = arith.constant dense<0.000000e+00> : vector<1x100xf32>
    %309 = tpu.matmul %307, %308, %cst_230 {dimension_numbers = #tpu.dot_dimension_numbers<[1], [0], [0], [1], [0, 0, 1, 1], [], []>} : vector<1x30xf32>, vector<30x100xf32>, vector<1x100xf32> -> vector<1x100xf32>
    %310 = arith.addf %306, %309 : vector<1x100xf32>
    %311 = vector.extract_strided_slice %303 {offsets = [2, 0], sizes = [1, 30], strides = [1, 1]} : vector<10x30xf32> to vector<1x30xf32>
    %c424_231 = arith.constant 424 : index
    %c0_232 = arith.constant 0 : index
    %312 = vector.load %arg2[%c424_231, %c0_232] : memref<800x128xf32, #tpu.memory_space<vmem>>, vector<30x100xf32>
    %cst_233 = arith.constant dense<0.000000e+00> : vector<1x100xf32>
    %313 = tpu.matmul %311, %312, %cst_233 {dimension_numbers = #tpu.dot_dimension_numbers<[1], [0], [0], [1], [0, 0, 1, 1], [], []>} : vector<1x30xf32>, vector<30x100xf32>, vector<1x100xf32> -> vector<1x100xf32>
    %314 = arith.addf %310, %313 : vector<1x100xf32>
    %315 = vector.extract_strided_slice %303 {offsets = [3, 0], sizes = [1, 30], strides = [1, 1]} : vector<10x30xf32> to vector<1x30xf32>
    %c456_234 = arith.constant 456 : index
    %c0_235 = arith.constant 0 : index
    %316 = vector.load %arg2[%c456_234, %c0_235] : memref<800x128xf32, #tpu.memory_space<vmem>>, vector<30x100xf32>
    %cst_236 = arith.constant dense<0.000000e+00> : vector<1x100xf32>
    %317 = tpu.matmul %315, %316, %cst_236 {dimension_numbers = #tpu.dot_dimension_numbers<[1], [0], [0], [1], [0, 0, 1, 1], [], []>} : vector<1x30xf32>, vector<30x100xf32>, vector<1x100xf32> -> vector<1x100xf32>
    %318 = arith.addf %314, %317 : vector<1x100xf32>
    %319 = vector.extract_strided_slice %303 {offsets = [4, 0], sizes = [1, 30], strides = [1, 1]} : vector<10x30xf32> to vector<1x30xf32>
    %c488_237 = arith.constant 488 : index
    %c0_238 = arith.constant 0 : index
    %320 = vector.load %arg2[%c488_237, %c0_238] : memref<800x128xf32, #tpu.memory_space<vmem>>, vector<30x100xf32>
    %cst_239 = arith.constant dense<0.000000e+00> : vector<1x100xf32>
    %321 = tpu.matmul %319, %320, %cst_239 {dimension_numbers = #tpu.dot_dimension_numbers<[1], [0], [0], [1], [0, 0, 1, 1], [], []>} : vector<1x30xf32>, vector<30x100xf32>, vector<1x100xf32> -> vector<1x100xf32>
    %322 = arith.addf %318, %321 : vector<1x100xf32>
    %323 = vector.extract_strided_slice %303 {offsets = [5, 0], sizes = [1, 30], strides = [1, 1]} : vector<10x30xf32> to vector<1x30xf32>
    %c520_240 = arith.constant 520 : index
    %c0_241 = arith.constant 0 : index
    %324 = vector.load %arg2[%c520_240, %c0_241] : memref<800x128xf32, #tpu.memory_space<vmem>>, vector<30x100xf32>
    %cst_242 = arith.constant dense<0.000000e+00> : vector<1x100xf32>
    %325 = tpu.matmul %323, %324, %cst_242 {dimension_numbers = #tpu.dot_dimension_numbers<[1], [0], [0], [1], [0, 0, 1, 1], [], []>} : vector<1x30xf32>, vector<30x100xf32>, vector<1x100xf32> -> vector<1x100xf32>
    %326 = arith.addf %322, %325 : vector<1x100xf32>
    %327 = vector.extract_strided_slice %303 {offsets = [6, 0], sizes = [1, 30], strides = [1, 1]} : vector<10x30xf32> to vector<1x30xf32>
    %c552_243 = arith.constant 552 : index
    %c0_244 = arith.constant 0 : index
    %328 = vector.load %arg2[%c552_243, %c0_244] : memref<800x128xf32, #tpu.memory_space<vmem>>, vector<30x100xf32>
    %cst_245 = arith.constant dense<0.000000e+00> : vector<1x100xf32>
    %329 = tpu.matmul %327, %328, %cst_245 {dimension_numbers = #tpu.dot_dimension_numbers<[1], [0], [0], [1], [0, 0, 1, 1], [], []>} : vector<1x30xf32>, vector<30x100xf32>, vector<1x100xf32> -> vector<1x100xf32>
    %330 = arith.addf %326, %329 : vector<1x100xf32>
    %331 = vector.extract_strided_slice %303 {offsets = [7, 0], sizes = [1, 30], strides = [1, 1]} : vector<10x30xf32> to vector<1x30xf32>
    %c584_246 = arith.constant 584 : index
    %c0_247 = arith.constant 0 : index
    %332 = vector.load %arg2[%c584_246, %c0_247] : memref<800x128xf32, #tpu.memory_space<vmem>>, vector<30x100xf32>
    %cst_248 = arith.constant dense<0.000000e+00> : vector<1x100xf32>
    %333 = tpu.matmul %331, %332, %cst_248 {dimension_numbers = #tpu.dot_dimension_numbers<[1], [0], [0], [1], [0, 0, 1, 1], [], []>} : vector<1x30xf32>, vector<30x100xf32>, vector<1x100xf32> -> vector<1x100xf32>
    %334 = arith.addf %330, %333 : vector<1x100xf32>
    %335 = vector.extract_strided_slice %303 {offsets = [8, 0], sizes = [1, 30], strides = [1, 1]} : vector<10x30xf32> to vector<1x30xf32>
    %c616_249 = arith.constant 616 : index
    %c0_250 = arith.constant 0 : index
    %336 = vector.load %arg2[%c616_249, %c0_250] : memref<800x128xf32, #tpu.memory_space<vmem>>, vector<30x100xf32>
    %cst_251 = arith.constant dense<0.000000e+00> : vector<1x100xf32>
    %337 = tpu.matmul %335, %336, %cst_251 {dimension_numbers = #tpu.dot_dimension_numbers<[1], [0], [0], [1], [0, 0, 1, 1], [], []>} : vector<1x30xf32>, vector<30x100xf32>, vector<1x100xf32> -> vector<1x100xf32>
    %338 = arith.addf %334, %337 : vector<1x100xf32>
    %339 = vector.extract_strided_slice %303 {offsets = [9, 0], sizes = [1, 30], strides = [1, 1]} : vector<10x30xf32> to vector<1x30xf32>
    %c648_252 = arith.constant 648 : index
    %c0_253 = arith.constant 0 : index
    %340 = vector.load %arg2[%c648_252, %c0_253] : memref<800x128xf32, #tpu.memory_space<vmem>>, vector<30x100xf32>
    %cst_254 = arith.constant dense<0.000000e+00> : vector<1x100xf32>
    %341 = tpu.matmul %339, %340, %cst_254 {dimension_numbers = #tpu.dot_dimension_numbers<[1], [0], [0], [1], [0, 0, 1, 1], [], []>} : vector<1x30xf32>, vector<30x100xf32>, vector<1x100xf32> -> vector<1x100xf32>
    %342 = arith.addf %338, %341 : vector<1x100xf32>
    %c680_255 = arith.constant 680 : index
    %c0_256 = arith.constant 0 : index
    %343 = vector.load %arg2[%c680_255, %c0_256] : memref<800x128xf32, #tpu.memory_space<vmem>>, vector<1x100xf32>
    %344 = arith.addf %342, %343 : vector<1x100xf32>
    %cst_257 = arith.constant 0.000000e+00 : f32
    %345 = vector.broadcast %cst_257 : f32 to vector<1x100xf32>
    %346 = arith.maximumf %344, %345 : vector<1x100xf32>
    %c688_258 = arith.constant 688 : index
    %c0_259 = arith.constant 0 : index
    %347 = vector.load %arg2[%c688_258, %c0_259] : memref<800x128xf32, #tpu.memory_space<vmem>>, vector<100x6xf32>
    %cst_260 = arith.constant dense<0.000000e+00> : vector<1x6xf32>
    %348 = tpu.matmul %346, %347, %cst_260 {dimension_numbers = #tpu.dot_dimension_numbers<[1], [0], [0], [1], [0, 0, 1, 1], [], []>} : vector<1x100xf32>, vector<100x6xf32>, vector<1x6xf32> -> vector<1x6xf32>
    %c792_261 = arith.constant 792 : index
    %c0_262 = arith.constant 0 : index
    %349 = vector.load %arg2[%c792_261, %c0_262] : memref<800x128xf32, #tpu.memory_space<vmem>>, vector<1x6xf32>
    %350 = arith.addf %348, %349 : vector<1x6xf32>
    %351 = vector.extract_strided_slice %350 {offsets = [0, 0], sizes = [1, 1], strides = [1, 1]} : vector<1x6xf32> to vector<1x1xf32>
    %352 = vector.extract_strided_slice %350 {offsets = [0, 1], sizes = [1, 5], strides = [1, 1]} : vector<1x6xf32> to vector<1x5xf32>
    %cst_263 = arith.constant dense<0.000000e+00> : vector<1xf32>
    %353 = vector.multi_reduction <add>, %352, %cst_263 [1] : vector<1x5xf32> to vector<1xf32>
    %354 = vector.shape_cast %353 : vector<1xf32> to vector<1x1xf32>
    %cst_264 = arith.constant 5.000000e+00 : f32
    %355 = vector.broadcast %cst_264 : f32 to vector<1x1xf32>
    %356 = arith.divf %354, %355 : vector<1x1xf32>
    %357 = vector.broadcast %356 : vector<1x1xf32> to vector<1x5xf32>
    %358 = arith.subf %352, %357 : vector<1x5xf32>
    %359 = vector.broadcast %351 : vector<1x1xf32> to vector<1x5xf32>
    %360 = arith.addf %359, %358 : vector<1x5xf32>
    %c1_265 = arith.constant 1 : index
    %c0_266 = arith.constant 0 : index
    %c0_267 = arith.constant 0 : index
    %361 = vector.load %arg3[%c1_265, %c0_266, %c0_267] : memref<2x1x11xf32, #tpu.memory_space<vmem>>, vector<1x1x1xf32>
    %362 = vector.shape_cast %361 : vector<1x1x1xf32> to vector<1x1xf32>
    %363 = vector.shape_cast %351 : vector<1x1xf32> to vector<1x1x1xf32>
    tpu.vector_store %arg3[%c1_265, %c0_266, %c0_267], %363 {strides = array<i32>} : memref<2x1x11xf32, #tpu.memory_space<vmem>>, vector<1x1x1xf32>,
    %c1_268 = arith.constant 1 : index
    %c0_269 = arith.constant 0 : index
    %c1_270 = arith.constant 1 : index
    %364 = vector.load %arg3[%c1_268, %c0_269, %c1_270] : memref<2x1x11xf32, #tpu.memory_space<vmem>>, vector<1x1x5xf32>
    %365 = vector.shape_cast %364 : vector<1x1x5xf32> to vector<1x5xf32>
    %366 = vector.shape_cast %352 : vector<1x5xf32> to vector<1x1x5xf32>
    tpu.vector_store %arg3[%c1_268, %c0_269, %c1_270], %366 {strides = array<i32>} : memref<2x1x11xf32, #tpu.memory_space<vmem>>, vector<1x1x5xf32>,
    %c1_271 = arith.constant 1 : index
    %c0_272 = arith.constant 0 : index
    %c6_273 = arith.constant 6 : index
    %367 = vector.load %arg3[%c1_271, %c0_272, %c6_273] : memref<2x1x11xf32, #tpu.memory_space<vmem>>, vector<1x1x5xf32>
    %368 = vector.shape_cast %367 : vector<1x1x5xf32> to vector<1x5xf32>
    %369 = vector.shape_cast %360 : vector<1x5xf32> to vector<1x1x5xf32>
    tpu.vector_store %arg3[%c1_271, %c0_272, %c6_273], %369 {strides = array<i32>} : memref<2x1x11xf32, #tpu.memory_space<vmem>>, vector<1x1x5xf32>,
    return
  }
  func.func @transform_0(%arg0: i32) -> (i32, i32, i32) {
    %c0_i32 = arith.constant 0 : i32
    %c0_i32_0 = arith.constant 0 : i32
    %c0_i32_1 = arith.constant 0 : i32
    return %arg0, %c0_i32, %c0_i32_0 : i32, i32, i32
  }
  func.func @transform_1(%arg0: i32) -> (i32, i32) {
    %c0_i32 = arith.constant 0 : i32
    %c0_i32_0 = arith.constant 0 : i32
    %c0_i32_1 = arith.constant 0 : i32
    return %c0_i32, %c0_i32_0 : i32, i32
  }
  func.func @transform_2(%arg0: i32) -> (i32, i32, i32) {
    %c0_i32 = arith.constant 0 : i32
    %c0_i32_0 = arith.constant 0 : i32
    %c0_i32_1 = arith.constant 0 : i32
    return %arg0, %c0_i32, %c0_i32_0 : i32, i32, i32
  }
}

</mosaic_0001>

<llo_original>
// kernel: dddqn_forward.1
$region0: #{dddqn_forward.1}
  #allocation0 [shape = 'u32[]', space=smem, size = 0x4, offset = 0x4, fixed_abs, tag = 'smem constant byte address 0x4 - core index']
  #allocation1 [shape = 'u32[72,128]{1,0:T(1,128)}', space=vmem, size = 0x9000, scoped, tag = 'internal scratch']
  #allocation2 [shape = 'f32[16,128]{1,0:T(8,128)}', space=vmem, size = 0x2000, scoped, tag = 'scratch operand']
  %s0 = inlined_call_operand.vmem [shape: f32[2,16,1], index: 0, kind: input, shape index: {}]
  %s1 = inlined_call_operand.hbm [shape: f32[800,128], index: 1, kind: input, shape index: {}]
  %s2 = inlined_call_operand.vmem [shape: f32[2,1,11], index: 2, kind: output, shape index: {}]
  %s3 = sld [smem:[#allocation0]]
  $region22: #{dddqn_forward.1} parent=0
    _
  %s5 = ssub.s32 1, %s3
  %s6 = scalar_select 0, %s5, %s3
  $region1: #{dddqn_forward.1} parent=0
    #allocation3 [shape = 'u8[409600]{0}', space=vmem, size = 0x64000, scoped, tag = 'input window, operand 1, single buffered']
    #allocation4 [shape = 's32[1]{0}', space=sflag, size = 0x4, scoped, tag = 'scoped memory for dddqn_forward.1']
    %7 = vsyncpa [#allocation4], 0
    // Predicated region
    $region2: #{dddqn_forward.1} parent=1 // pred_check
      _
    $region3: #{dddqn_forward.1} parent=1 // pred_check_branch
      %9 = sbr.rel (0) target = $region5
    $region4: #{dddqn_forward.1} parent=1 // pred_region
      _
    $region5: #{dddqn_forward.1} parent=1 // pred_fallthru
      _
    // Predicated region
    $region6: #{dddqn_forward.1} parent=1 // pred_check
      _
    $region7: #{dddqn_forward.1} parent=1 // pred_check_branch
      %11 = sbr.rel (0) target = $region9
    $region8: #{dddqn_forward.1} parent=1 // pred_region
      %13 = vsyncadd [#allocation4], 0
      %s14 = sshll.u32 %s1, 4
      %s15 = int_to_ptr.hbm [resolvable:$true] %s14
      %s16 = sshll.u32 [#allocation3], 4
      %s17 = int_to_ptr.vmem [resolvable:$true] %s16
      %22 = dma.hbm_to_vmem [thread:$0]  %s15, 12800, %s17, [#allocation4], 128, 128, 8
    $region9: #{dddqn_forward.1} parent=1 // pred_fallthru
      _
    // Predicated region
    $region10: #{dddqn_forward.1} parent=1 // pred_check
      _
    $region11: #{dddqn_forward.1} parent=1 // pred_check_branch
      %24 = sbr.rel (0) target = $region13
    $region12: #{dddqn_forward.1} parent=1 // pred_region
      %26 = dma.done [#allocation4], 12800
    $region13: #{dddqn_forward.1} parent=1 // pred_fallthru
      _
    %v27 = vld [vmem:[%s0] sm:$0xff]
    %v28 = vld [vmem:[%s0 + $0x8] sm:$0xff]
    %v29 = vld [vmem:[#allocation3] sm:$0x1]
    %31 = vset.pattern.permute.xlu0 0
    %32 = vperm.xlu0 %31, %v27
    %v33 = vpop.permute.xlu0 %32
    %36 = vset.pattern.permute.xlu0 0
    %37 = vperm.xlu0 %36, %v28
    %v38 = vpop.permute.xlu0 %37
    %v40 = vperm.slane %v29, 0
    %v41 = vmul.f32 %v33, %v40
    %v42 = vmul.f32 %v38, %v40
    %v43 = vld [vmem:[#allocation3 + $0x8] sm:$0x1]
    %v44 = vperm.slane %v43, 0
    %v45 = vmul.f32 %v33, %v44
    %v46 = vmul.f32 %v38, %v44
    %vm49 = vcmask 1046528
    %v50 = vrot.slane %v45, 1
    %v51 = vrot.slane %v46, 1
    %v52 = vsel %vm49, %v50, %v51
    %v55 = vadd.f32 %v41, %v52
    %v56 = vadd.f32 %v42, %v51
    %v57 = vld [vmem:[#allocation3 + $0x10] sm:$0x1]
    %v58 = vperm.slane %v57, 0
    %v59 = vmul.f32 %v33, %v58
    %v60 = vmul.f32 %v38, %v58
    %vm63 = vcmask 1045504
    %v64 = vrot.slane %v59, 2
    %v65 = vrot.slane %v60, 2
    %v66 = vsel %vm63, %v64, %v65
    %v69 = vadd.f32 %v55, %v66
    %v70 = vadd.f32 %v56, %v65
    %v71 = vld [vmem:[#allocation3 + $0x18] sm:$0x1]
    %v72 = vperm.slane %v71, 0
    %v73 = vadd.f32 %v69, %v72
    %v74 = vadd.f32 %v70, %v72
    %v75 = vmax.f32 %v73, 0.0
    %v76 = vmax.f32 %v74, 0.0
    %v77 = vld [vmem:[#allocation3 + $0x20] sm:$0x1f]
    %v78 = vld [vmem:[#allocation3 + $0x28] sm:$0x1f]
    %v81 = vrot.slane %v75, 1
    %v82 = vrot.slane %v76, 1
    %v83 = vsel %vm49, %v81, %v82
    %vm84 = vcmask 39936
    %v85 = vsel %vm84, %v83, 0
    %v87 = vsel %vm84, %v82, 0
    %vm89 = vcmask 1044480
    %v91 = vsel %vm89, %v78, 0
    %93 = vmatpush.msra.mxu0 0.0
    %94 = vmatpush.msra.mxu0 0.0
    %95 = vmatpush.msra.mxu0 0.0
    %96 = vmatpush.msra.mxu0 0.0
    %97 = vmatpush.msra.mxu0 0.0
    %98 = vmatpush.msra.mxu0 0.0
    %99 = vmatpush.msra.mxu0 0.0
    %100 = vmatpush.msra.mxu0 0.0
    %101 = vmatpush.msra.mxu0 0.0
    %102 = vmatpush.msra.mxu0 0.0
    %103 = vmatpush.msra.mxu0 0.0
    %104 = vmatpush.msra.mxu0 0.0
    %105 = vmatpush.msra.mxu0 0.0
    %106 = vmatpush.msra.mxu0 0.0
    %107 = vmatpush.msra.mxu0 0.0
    %108 = vmatpush.msra.mxu0 %v91
    %109 = vmatmul.f32.gmra.mxu0 %v85
    %v110 = vpop.f32.mrf.mxu0
    %v111 = vadd.f32 0.0, %v110
    %112 = vmatmul.f32.gmra.mxu0 %v87
    %v113 = vpop.f32.mrf.mxu0
    %v114 = vadd.f32 0.0, %v113
    %115 = vdwg.mxu0
    %v116 = vsel %vm84, %v75, 0
    %v118 = vsel %vm84, %v76, 0
    %v121 = vsel %vm89, %v77, 0
    %123 = vmatpush.msra.mxu0 0.0
    %124 = vmatpush.msra.mxu0 0.0
    %125 = vmatpush.msra.mxu0 0.0
    %126 = vmatpush.msra.mxu0 0.0
    %127 = vmatpush.msra.mxu0 0.0
    %128 = vmatpush.msra.mxu0 0.0
    %129 = vmatpush.msra.mxu0 0.0
    %130 = vmatpush.msra.mxu0 0.0
    %131 = vmatpush.msra.mxu0 0.0
    %132 = vmatpush.msra.mxu0 0.0
    %133 = vmatpush.msra.mxu0 0.0
    %134 = vmatpush.msra.mxu0 0.0
    %135 = vmatpush.msra.mxu0 0.0
    %136 = vmatpush.msra.mxu0 0.0
    %137 = vmatpush.msra.mxu0 0.0
    %138 = vmatpush.msra.mxu0 %v121
    %139 = vmatmul.f32.gmra.mxu0 %v116
    %v140 = vpop.f32.mrf.mxu0
    %v141 = vadd.f32 %v111, %v140
    %142 = vmatmul.f32.gmra.mxu0 %v118
    %v143 = vpop.f32.mrf.mxu0
    %v144 = vadd.f32 %v114, %v143
    %145 = vdwg.mxu0
    %v146 = vld [vmem:[#allocation3 + $0x30] sm:$0x1f]
    %v147 = vrot.slane %v75, 2
    %v148 = vrot.slane %v76, 2
    %v149 = vsel %vm63, %v147, %v148
    %v150 = vsel %vm84, %v149, 0
    %v152 = vsel %vm84, %v148, 0
    %v155 = vsel %vm89, %v146, 0
    %157 = vmatpush.msra.mxu0 0.0
    %158 = vmatpush.msra.mxu0 0.0
    %159 = vmatpush.msra.mxu0 0.0
    %160 = vmatpush.msra.mxu0 0.0
    %161 = vmatpush.msra.mxu0 0.0
    %162 = vmatpush.msra.mxu0 0.0
    %163 = vmatpush.msra.mxu0 0.0
    %164 = vmatpush.msra.mxu0 0.0
    %165 = vmatpush.msra.mxu0 0.0
    %166 = vmatpush.msra.mxu0 0.0
    %167 = vmatpush.msra.mxu0 0.0
    %168 = vmatpush.msra.mxu0 0.0
    %169 = vmatpush.msra.mxu0 0.0
    %170 = vmatpush.msra.mxu0 0.0
    %171 = vmatpush.msra.mxu0 0.0
    %172 = vmatpush.msra.mxu0 %v155
    %173 = vmatmul.f32.gmra.mxu0 %v150
    %v174 = vpop.f32.mrf.mxu0
    %v175 = vadd.f32 0.0, %v174
    %176 = vmatmul.f32.gmra.mxu0 %v152
    %v177 = vpop.f32.mrf.mxu0
    %v178 = vadd.f32 0.0, %v177
    %179 = vdwg.mxu0
    %v180 = vadd.f32 %v141, %v175
    %v181 = vadd.f32 %v144, %v178
    %v182 = vld [vmem:[#allocation3 + $0x38] sm:$0x1]
    %v183 = vperm.slane %v182, 0
    %v184 = vadd.f32 %v180, %v183
    %v185 = vadd.f32 %v181, %v183
    %v186 = vmax.f32 %v184, 0.0
    %v187 = vmax.f32 %v185, 0.0
    %v188 = vld [vmem:[#allocation3 + $0x50] sm:$0xff]
    %v189 = vld [vmem:[#allocation3 + $0x58] sm:$0x3]
    %vm190 = vcmask 80896
    %v192 = vsel %vm190, %v186, 0
    %v195 = vsel %vm190, %v187, 0
    %vm197 = vcmask 1041408
    %v199 = vsel %vm197, %v189, 0
    %201 = vmatpush.msra.mxu0 0.0
    %202 = vmatpush.msra.mxu0 0.0
    %203 = vmatpush.msra.mxu0 0.0
    %204 = vmatpush.msra.mxu0 0.0
    %205 = vmatpush.msra.mxu0 0.0
    %206 = vmatpush.msra.mxu0 0.0
    %207 = vmatpush.msra.mxu0 0.0
    %208 = vmatpush.msra.mxu0 0.0
    %209 = vmatpush.msra.mxu0 0.0
    %210 = vmatpush.msra.mxu0 0.0
    %211 = vmatpush.msra.mxu0 0.0
    %212 = vmatpush.msra.mxu0 0.0
    %213 = vmatpush.msra.mxu0 0.0
    %214 = vmatpush.msra.mxu0 0.0
    %215 = vmatpush.msra.mxu0 %v199
    %216 = vmatpush.msra.mxu0 %v188
    %217 = vmatmul.f32.gmra.mxu0 %v192
    %v218 = vpop.f32.mrf.mxu0
    %v219 = vadd.f32 0.0, %v218
    %220 = vmatmul.f32.gmra.mxu0 %v195
    %v221 = vpop.f32.mrf.mxu0
    %v222 = vadd.f32 0.0, %v221
    %223 = vdwg.mxu0
    %vm224 = vcmask 121856
    %225 = vst.msk [vmem:[#allocation2] sm:$0xff] %vm224, %v219
    %vm226 = vcmask 117760
    %227 = vst.msk [vmem:[#allocation2 + $0x8] sm:$0xf] %vm226, %v222
    %v228 = vld [vmem:[#allocation2 + $0x1] sm:$0xff]
    %v229 = vld [vmem:[#allocation2 + $0x9] sm:$0x7]
    %v230 = vld [vmem:[#allocation3 + $0x40] sm:$0xff]
    %v231 = vld [vmem:[#allocation3 + $0x48] sm:$0x3]
    %v233 = vsel %vm197, %v231, 0
    %235 = vmatpush.msra.mxu0 0.0
    %236 = vmatpush.msra.mxu0 0.0
    %237 = vmatpush.msra.mxu0 0.0
    %238 = vmatpush.msra.mxu0 0.0
    %239 = vmatpush.msra.mxu0 0.0
    %240 = vmatpush.msra.mxu0 0.0
    %241 = vmatpush.msra.mxu0 0.0
    %242 = vmatpush.msra.mxu0 0.0
    %243 = vmatpush.msra.mxu0 0.0
    %244 = vmatpush.msra.mxu0 0.0
    %245 = vmatpush.msra.mxu0 0.0
    %246 = vmatpush.msra.mxu0 0.0
    %247 = vmatpush.msra.mxu0 0.0
    %248 = vmatpush.msra.mxu0 0.0
    %249 = vmatpush.msra.mxu0 %v233
    %250 = vmatpush.msra.mxu0 %v230
    %251 = vmatmul.f32.gmra.mxu0 %v192
    %v252 = vpop.f32.mrf.mxu0
    %v253 = vadd.f32 0.0, %v252
    %254 = vmatmul.f32.gmra.mxu0 %v195
    %v255 = vpop.f32.mrf.mxu0
    %v256 = vadd.f32 0.0, %v255
    %257 = vdwg.mxu0
    %v258 = vadd.f32 %v228, %v253
    %v259 = vadd.f32 %v229, %v256
    %260 = vst.msk [vmem:[#allocation2 + $0x1] sm:$0xff] %vm224, %v258
    %vm261 = vcmask 116736
    %262 = vst.msk [vmem:[#allocation2 + $0x9] sm:$0x7] %vm261, %v259
    %v263 = vld [vmem:[#allocation2] sm:$0xff]
    %v264 = vld [vmem:[#allocation2 + $0x8] sm:$0x7]
    %v265 = vld [vmem:[#allocation3 + $0x60] sm:$0xff]
    %v266 = vld [vmem:[#allocation3 + $0x68] sm:$0x3]
    %v267 = vrot.slane %v186, 1
    %v268 = vrot.slane %v187, 1
    %v269 = vsel %vm49, %v267, %v268
    %v270 = vsel %vm190, %v269, 0
    %v272 = vsel %vm190, %v268, 0
    %v275 = vsel %vm197, %v266, 0
    %277 = vmatpush.msra.mxu0 0.0
    %278 = vmatpush.msra.mxu0 0.0
    %279 = vmatpush.msra.mxu0 0.0
    %280 = vmatpush.msra.mxu0 0.0
    %281 = vmatpush.msra.mxu0 0.0
    %282 = vmatpush.msra.mxu0 0.0
    %283 = vmatpush.msra.mxu0 0.0
    %284 = vmatpush.msra.mxu0 0.0
    %285 = vmatpush.msra.mxu0 0.0
    %286 = vmatpush.msra.mxu0 0.0
    %287 = vmatpush.msra.mxu0 0.0
    %288 = vmatpush.msra.mxu0 0.0
    %289 = vmatpush.msra.mxu0 0.0
    %290 = vmatpush.msra.mxu0 0.0
    %291 = vmatpush.msra.mxu0 %v275
    %292 = vmatpush.msra.mxu0 %v265
    %293 = vmatmul.f32.gmra.mxu0 %v270
    %v294 = vpop.f32.mrf.mxu0
    %v295 = vadd.f32 0.0, %v294
    %296 = vmatmul.f32.gmra.mxu0 %v272
    %v297 = vpop.f32.mrf.mxu0
    %v298 = vadd.f32 0.0, %v297
    %299 = vdwg.mxu0
    %v300 = vadd.f32 %v263, %v295
    %v301 = vadd.f32 %v264, %v298
    %302 = vst.msk [vmem:[#allocation2] sm:$0xff] %vm224, %v300
    %303 = vst.msk [vmem:[#allocation2 + $0x8] sm:$0x7] %vm261, %v301
    %v304 = vld [vmem:[#allocation2] sm:$0xff]
    %v305 = vld [vmem:[#allocation2 + $0x8] sm:$0xf]
    %v306 = vld [vmem:[#allocation3 + $0x70] sm:$0x1]
    %v307 = vperm.slane %v306, 0
    %v308 = vadd.f32 %v304, %v307
    %v309 = vadd.f32 %v305, %v307
    %v310 = vmax.f32 %v308, 0.0
    %v311 = vmax.f32 %v309, 0.0
    %v312 = vld [vmem:[#allocation3 + $0x88] sm:$0xff]
    %v313 = vld [vmem:[#allocation3 + $0x90] sm:$0x7f]
    %v315 = vsel %vm224, %v310, 0
    %v318 = vsel %vm224, %v311, 0
    %v321 = vsel %vm49, %v313, 0
    %323 = vmatpush.msra.mxu0 0.0
    %324 = vmatpush.msra.mxu0 0.0
    %325 = vmatpush.msra.mxu0 0.0
    %326 = vmatpush.msra.mxu0 0.0
    %327 = vmatpush.msra.mxu0 0.0
    %328 = vmatpush.msra.mxu0 0.0
    %329 = vmatpush.msra.mxu0 0.0
    %330 = vmatpush.msra.mxu0 0.0
    %331 = vmatpush.msra.mxu0 0.0
    %332 = vmatpush.msra.mxu0 0.0
    %333 = vmatpush.msra.mxu0 0.0
    %334 = vmatpush.msra.mxu0 0.0
    %335 = vmatpush.msra.mxu0 0.0
    %336 = vmatpush.msra.mxu0 0.0
    %337 = vmatpush.msra.mxu0 %v321
    %338 = vmatpush.msra.mxu0 %v312
    %339 = vmatmul.f32.gmra.mxu0 %v315
    %v340 = vpop.f32.mrf.mxu0
    %v341 = vadd.f32 0.0, %v340
    %342 = vmatmul.f32.gmra.mxu0 %v318
    %v343 = vpop.f32.mrf.mxu0
    %v344 = vadd.f32 0.0, %v343
    %345 = vdwg.mxu0
    %vm346 = vcmask 162816
    %347 = vst.msk [vmem:[#allocation2] sm:$0xff] %vm346, %v341
    %vm348 = vcmask 158720
    %349 = vst.msk [vmem:[#allocation2 + $0x8] sm:$0xf] %vm348, %v344
    %v350 = vld [vmem:[#allocation2 + $0x1] sm:$0xff]
    %v351 = vld [vmem:[#allocation2 + $0x9] sm:$0x7]
    %v352 = vld [vmem:[#allocation3 + $0x78] sm:$0xff]
    %v353 = vld [vmem:[#allocation3 + $0x80] sm:$0x7f]
    %v355 = vsel %vm49, %v353, 0
    %357 = vmatpush.msra.mxu0 0.0
    %358 = vmatpush.msra.mxu0 0.0
    %359 = vmatpush.msra.mxu0 0.0
    %360 = vmatpush.msra.mxu0 0.0
    %361 = vmatpush.msra.mxu0 0.0
    %362 = vmatpush.msra.mxu0 0.0
    %363 = vmatpush.msra.mxu0 0.0
    %364 = vmatpush.msra.mxu0 0.0
    %365 = vmatpush.msra.mxu0 0.0
    %366 = vmatpush.msra.mxu0 0.0
    %367 = vmatpush.msra.mxu0 0.0
    %368 = vmatpush.msra.mxu0 0.0
    %369 = vmatpush.msra.mxu0 0.0
    %370 = vmatpush.msra.mxu0 0.0
    %371 = vmatpush.msra.mxu0 %v355
    %372 = vmatpush.msra.mxu0 %v352
    %373 = vmatmul.f32.gmra.mxu0 %v315
    %v374 = vpop.f32.mrf.mxu0
    %v375 = vadd.f32 0.0, %v374
    %376 = vmatmul.f32.gmra.mxu0 %v318
    %v377 = vpop.f32.mrf.mxu0
    %v378 = vadd.f32 0.0, %v377
    %379 = vdwg.mxu0
    %v380 = vadd.f32 %v350, %v375
    %v381 = vadd.f32 %v351, %v378
    %382 = vst.msk [vmem:[#allocation2 + $0x1] sm:$0xff] %vm346, %v380
    %vm383 = vcmask 157696
    %384 = vst.msk [vmem:[#allocation2 + $0x9] sm:$0x7] %vm383, %v381
    %v385 = vld [vmem:[#allocation2] sm:$0xff]
    %v386 = vld [vmem:[#allocation2 + $0x8] sm:$0x7]
    %v387 = vld [vmem:[#allocation3 + $0x98] sm:$0xff]
    %v388 = vld [vmem:[#allocation3 + $0xa0] sm:$0x7f]
    %v389 = vrot.slane %v310, 1
    %v390 = vrot.slane %v311, 1
    %v391 = vsel %vm49, %v389, %v390
    %v392 = vsel %vm224, %v391, 0
    %v394 = vsel %vm224, %v390, 0
    %v397 = vsel %vm49, %v388, 0
    %399 = vmatpush.msra.mxu0 0.0
    %400 = vmatpush.msra.mxu0 0.0
    %401 = vmatpush.msra.mxu0 0.0
    %402 = vmatpush.msra.mxu0 0.0
    %403 = vmatpush.msra.mxu0 0.0
    %404 = vmatpush.msra.mxu0 0.0
    %405 = vmatpush.msra.mxu0 0.0
    %406 = vmatpush.msra.mxu0 0.0
    %407 = vmatpush.msra.mxu0 0.0
    %408 = vmatpush.msra.mxu0 0.0
    %409 = vmatpush.msra.mxu0 0.0
    %410 = vmatpush.msra.mxu0 0.0
    %411 = vmatpush.msra.mxu0 0.0
    %412 = vmatpush.msra.mxu0 0.0
    %413 = vmatpush.msra.mxu0 %v397
    %414 = vmatpush.msra.mxu0 %v387
    %415 = vmatmul.f32.gmra.mxu0 %v392
    %v416 = vpop.f32.mrf.mxu0
    %v417 = vadd.f32 0.0, %v416
    %418 = vmatmul.f32.gmra.mxu0 %v394
    %v419 = vpop.f32.mrf.mxu0
    %v420 = vadd.f32 0.0, %v419
    %421 = vdwg.mxu0
    %v422 = vadd.f32 %v385, %v417
    %v423 = vadd.f32 %v386, %v420
    %424 = vst.msk [vmem:[#allocation2] sm:$0xff] %vm346, %v422
    %425 = vst.msk [vmem:[#allocation2 + $0x8] sm:$0x7] %vm383, %v423
    %v426 = vld [vmem:[#allocation2] sm:$0xff]
    %v427 = vld [vmem:[#allocation2 + $0x8] sm:$0xf]
    %v428 = vld [vmem:[#allocation3 + $0xa8] sm:$0x1]
    %v429 = vperm.slane %v428, 0
    %v430 = vadd.f32 %v426, %v429
    %v431 = vadd.f32 %v427, %v429
    %v432 = vmax.f32 %v430, 0.0
    %v433 = vmax.f32 %v431, 0.0
    %v434 = vld [vmem:[#allocation3 + $0xc8] sm:$0xff]
    %v435 = vld [vmem:[#allocation3 + $0xd0] sm:$0xff]
    %v436 = vld [vmem:[#allocation3 + $0xd8] sm:$0xf]
    %v438 = vsel %vm346, %v432, 0
    %v441 = vsel %vm346, %v433, 0
    %vm443 = vcmask 1043456
    %v445 = vsel %vm443, %v436, 0
    %447 = vmatpush.msra.mxu0 0.0
    %448 = vmatpush.msra.mxu0 0.0
    %449 = vmatpush.msra.mxu0 0.0
    %450 = vmatpush.msra.mxu0 0.0
    %451 = vmatpush.msra.mxu0 0.0
    %452 = vmatpush.msra.mxu0 0.0
    %453 = vmatpush.msra.mxu0 0.0
    %454 = vmatpush.msra.mxu0 0.0
    %455 = vmatpush.msra.mxu0 0.0
    %456 = vmatpush.msra.mxu0 0.0
    %457 = vmatpush.msra.mxu0 0.0
    %458 = vmatpush.msra.mxu0 0.0
    %459 = vmatpush.msra.mxu0 0.0
    %460 = vmatpush.msra.mxu0 %v445
    %461 = vmatpush.msra.mxu0 %v435
    %462 = vmatpush.msra.mxu0 %v434
    %463 = vmatmul.f32.gmra.mxu0 %v438
    %v464 = vpop.f32.mrf.mxu0
    %v465 = vadd.f32 0.0, %v464
    %466 = vmatmul.f32.gmra.mxu0 %v441
    %v467 = vpop.f32.mrf.mxu0
    %v468 = vadd.f32 0.0, %v467
    %469 = vdwg.mxu0
    %vm470 = vcmask 203776
    %471 = vst.msk [vmem:[#allocation2] sm:$0xff] %vm470, %v465
    %vm472 = vcmask 199680
    %473 = vst.msk [vmem:[#allocation2 + $0x8] sm:$0xf] %vm472, %v468
    %v474 = vld [vmem:[#allocation2 + $0x1] sm:$0xff]
    %v475 = vld [vmem:[#allocation2 + $0x9] sm:$0x7]
    %v476 = vld [vmem:[#allocation3 + $0xb0] sm:$0xff]
    %v477 = vld [vmem:[#allocation3 + $0xb8] sm:$0xff]
    %v478 = vld [vmem:[#allocation3 + $0xc0] sm:$0xf]
    %v480 = vsel %vm443, %v478, 0
    %482 = vmatpush.msra.mxu0 0.0
    %483 = vmatpush.msra.mxu0 0.0
    %484 = vmatpush.msra.mxu0 0.0
    %485 = vmatpush.msra.mxu0 0.0
    %486 = vmatpush.msra.mxu0 0.0
    %487 = vmatpush.msra.mxu0 0.0
    %488 = vmatpush.msra.mxu0 0.0
    %489 = vmatpush.msra.mxu0 0.0
    %490 = vmatpush.msra.mxu0 0.0
    %491 = vmatpush.msra.mxu0 0.0
    %492 = vmatpush.msra.mxu0 0.0
    %493 = vmatpush.msra.mxu0 0.0
    %494 = vmatpush.msra.mxu0 0.0
    %495 = vmatpush.msra.mxu0 %v480
    %496 = vmatpush.msra.mxu0 %v477
    %497 = vmatpush.msra.mxu0 %v476
    %498 = vmatmul.f32.gmra.mxu0 %v438
    %v499 = vpop.f32.mrf.mxu0
    %v500 = vadd.f32 0.0, %v499
    %501 = vmatmul.f32.gmra.mxu0 %v441
    %v502 = vpop.f32.mrf.mxu0
    %v503 = vadd.f32 0.0, %v502
    %504 = vdwg.mxu0
    %v505 = vadd.f32 %v474, %v500
    %v506 = vadd.f32 %v475, %v503
    %507 = vst.msk [vmem:[#allocation2 + $0x1] sm:$0xff] %vm470, %v505
    %vm508 = vcmask 198656
    %509 = vst.msk [vmem:[#allocation2 + $0x9] sm:$0x7] %vm508, %v506
    %v510 = vld [vmem:[#allocation2] sm:$0xff]
    %v511 = vld [vmem:[#allocation2 + $0x8] sm:$0x7]
    %v512 = vld [vmem:[#allocation3 + $0xe0] sm:$0xff]
    %v513 = vld [vmem:[#allocation3 + $0xe8] sm:$0xff]
    %v514 = vld [vmem:[#allocation3 + $0xf0] sm:$0xf]
    %v515 = vrot.slane %v432, 1
    %v516 = vrot.slane %v433, 1
    %v517 = vsel %vm49, %v515, %v516
    %v518 = vsel %vm346, %v517, 0
    %v520 = vsel %vm346, %v516, 0
    %v523 = vsel %vm443, %v514, 0
    %525 = vmatpush.msra.mxu0 0.0
    %526 = vmatpush.msra.mxu0 0.0
    %527 = vmatpush.msra.mxu0 0.0
    %528 = vmatpush.msra.mxu0 0.0
    %529 = vmatpush.msra.mxu0 0.0
    %530 = vmatpush.msra.mxu0 0.0
    %531 = vmatpush.msra.mxu0 0.0
    %532 = vmatpush.msra.mxu0 0.0
    %533 = vmatpush.msra.mxu0 0.0
    %534 = vmatpush.msra.mxu0 0.0
    %535 = vmatpush.msra.mxu0 0.0
    %536 = vmatpush.msra.mxu0 0.0
    %537 = vmatpush.msra.mxu0 0.0
    %538 = vmatpush.msra.mxu0 %v523
    %539 = vmatpush.msra.mxu0 %v513
    %540 = vmatpush.msra.mxu0 %v512
    %541 = vmatmul.f32.gmra.mxu0 %v518
    %v542 = vpop.f32.mrf.mxu0
    %v543 = vadd.f32 0.0, %v542
    %544 = vmatmul.f32.gmra.mxu0 %v520
    %v545 = vpop.f32.mrf.mxu0
    %v546 = vadd.f32 0.0, %v545
    %547 = vdwg.mxu0
    %v548 = vadd.f32 %v510, %v543
    %v549 = vadd.f32 %v511, %v546
    %550 = vst.msk [vmem:[#allocation2] sm:$0xff] %vm470, %v548
    %551 = vst.msk [vmem:[#allocation2 + $0x8] sm:$0x7] %vm508, %v549
    %v552 = vld [vmem:[#allocation2] sm:$0xff]
    %v553 = vld [vmem:[#allocation2 + $0x8] sm:$0xf]
    %v554 = vld [vmem:[#allocation3 + $0xf8] sm:$0x1]
    %v555 = vperm.slane %v554, 0
    %v556 = vadd.f32 %v552, %v555
    %v557 = vadd.f32 %v553, %v555
    %v558 = vmax.f32 %v556, 0.0
    %v559 = vmax.f32 %v557, 0.0
    %v560 = vld [vmem:[#allocation3 + $0x100] sm:$0xff]
    %v561 = vld [vmem:[#allocation3 + $0x108] sm:$0xff]
    %v562 = vld [vmem:[#allocation3 + $0x110] sm:$0xff]
    %v563 = vld [vmem:[#allocation3 + $0x118] sm:$0x1]
    %v564 = vld [vmem:[#allocation3 + $0x120] sm:$0xff]
    %v565 = vld [vmem:[#allocation3 + $0x128] sm:$0xff]
    %v566 = vld [vmem:[#allocation3 + $0x130] sm:$0xff]
    %v567 = vld [vmem:[#allocation3 + $0x138] sm:$0x1]
    %v570 = vrot.slane %v558, 1
    %v571 = vrot.slane %v559, 1
    %v572 = vsel %vm49, %v570, %v571
    %v573 = vsel %vm470, %v572, 0
    %v575 = vsel %vm470, %v571, 0
    %vm577 = vcmask 1040384
    %v579 = vsel %vm577, %v567, 0
    %581 = vmatpush.msra.mxu0 0.0
    %582 = vmatpush.msra.mxu0 0.0
    %583 = vmatpush.msra.mxu0 0.0
    %584 = vmatpush.msra.mxu0 0.0
    %585 = vmatpush.msra.mxu0 0.0
    %586 = vmatpush.msra.mxu0 0.0
    %587 = vmatpush.msra.mxu0 0.0
    %588 = vmatpush.msra.mxu0 0.0
    %589 = vmatpush.msra.mxu0 0.0
    %590 = vmatpush.msra.mxu0 0.0
    %591 = vmatpush.msra.mxu0 0.0
    %592 = vmatpush.msra.mxu0 0.0
    %593 = vmatpush.msra.mxu0 %v579
    %594 = vmatpush.msra.mxu0 %v566
    %595 = vmatpush.msra.mxu0 %v565
    %596 = vmatpush.msra.mxu0 %v564
    %597 = vmatmul.f32.gmra.mxu0 %v573
    %v598 = vpop.f32.mrf.mxu0
    %v599 = vadd.f32 0.0, %v598
    %600 = vmatmul.f32.gmra.mxu0 %v575
    %v601 = vpop.f32.mrf.mxu0
    %v602 = vadd.f32 0.0, %v601
    %603 = vdwg.mxu0
    %v604 = vsel %vm470, %v558, 0
    %v606 = vsel %vm470, %v559, 0
    %v609 = vsel %vm577, %v563, 0
    %611 = vmatpush.msra.mxu0 0.0
    %612 = vmatpush.msra.mxu0 0.0
    %613 = vmatpush.msra.mxu0 0.0
    %614 = vmatpush.msra.mxu0 0.0
    %615 = vmatpush.msra.mxu0 0.0
    %616 = vmatpush.msra.mxu0 0.0
    %617 = vmatpush.msra.mxu0 0.0
    %618 = vmatpush.msra.mxu0 0.0
    %619 = vmatpush.msra.mxu0 0.0
    %620 = vmatpush.msra.mxu0 0.0
    %621 = vmatpush.msra.mxu0 0.0
    %622 = vmatpush.msra.mxu0 0.0
    %623 = vmatpush.msra.mxu0 %v609
    %624 = vmatpush.msra.mxu0 %v562
    %625 = vmatpush.msra.mxu0 %v561
    %626 = vmatpush.msra.mxu0 %v560
    %627 = vmatmul.f32.gmra.mxu0 %v604
    %v628 = vpop.f32.mrf.mxu0
    %v629 = vadd.f32 %v599, %v628
    %630 = vmatmul.f32.gmra.mxu0 %v606
    %v631 = vpop.f32.mrf.mxu0
    %v632 = vadd.f32 %v602, %v631
    %633 = vdwg.mxu0
    %v634 = vld [vmem:[#allocation3 + $0x140] sm:$0xff]
    %v635 = vld [vmem:[#allocation3 + $0x148] sm:$0xff]
    %v636 = vld [vmem:[#allocation3 + $0x150] sm:$0xff]
    %v637 = vld [vmem:[#allocation3 + $0x158] sm:$0x1]
    %v638 = vrot.slane %v558, 2
    %v639 = vrot.slane %v559, 2
    %v640 = vsel %vm63, %v638, %v639
    %v641 = vsel %vm470, %v640, 0
    %v643 = vsel %vm470, %v639, 0
    %v646 = vsel %vm577, %v637, 0
    %648 = vmatpush.msra.mxu0 0.0
    %649 = vmatpush.msra.mxu0 0.0
    %650 = vmatpush.msra.mxu0 0.0
    %651 = vmatpush.msra.mxu0 0.0
    %652 = vmatpush.msra.mxu0 0.0
    %653 = vmatpush.msra.mxu0 0.0
    %654 = vmatpush.msra.mxu0 0.0
    %655 = vmatpush.msra.mxu0 0.0
    %656 = vmatpush.msra.mxu0 0.0
    %657 = vmatpush.msra.mxu0 0.0
    %658 = vmatpush.msra.mxu0 0.0
    %659 = vmatpush.msra.mxu0 0.0
    %660 = vmatpush.msra.mxu0 %v646
    %661 = vmatpush.msra.mxu0 %v636
    %662 = vmatpush.msra.mxu0 %v635
    %663 = vmatpush.msra.mxu0 %v634
    %664 = vmatmul.f32.gmra.mxu0 %v641
    %v665 = vpop.f32.mrf.mxu0
    %v666 = vadd.f32 0.0, %v665
    %667 = vmatmul.f32.gmra.mxu0 %v643
    %v668 = vpop.f32.mrf.mxu0
    %v669 = vadd.f32 0.0, %v668
    %670 = vdwg.mxu0
    %v671 = vadd.f32 %v629, %v666
    %v672 = vadd.f32 %v632, %v669
    %v673 = vld [vmem:[#allocation3 + $0x160] sm:$0x1]
    %v674 = vperm.slane %v673, 0
    %v675 = vadd.f32 %v671, %v674
    %v676 = vadd.f32 %v672, %v674
    %v677 = vmax.f32 %v675, 0.0
    %v678 = vmax.f32 %v676, 0.0
    %v679 = vld [vmem:[#allocation3 + $0x168] sm:$0xff]
    %v680 = vld [vmem:[#allocation3 + $0x170] sm:$0xff]
    %v681 = vld [vmem:[#allocation3 + $0x178] sm:$0xff]
    %v682 = vld [vmem:[#allocation3 + $0x180] sm:$0x3f]
    %v683 = vld [vmem:[#allocation3 + $0x188] sm:$0xff]
    %v684 = vld [vmem:[#allocation3 + $0x190] sm:$0xff]
    %v685 = vld [vmem:[#allocation3 + $0x198] sm:$0xff]
    %v686 = vld [vmem:[#allocation3 + $0x1a0] sm:$0x3f]
    %v688 = vrot.slane %v677, 1
    %vm689 = vcmask 244736
    %v690 = vsel %vm689, %v688, 0
    %v693 = vsel %vm63, %v686, 0
    %695 = vmatpush.msra.mxu0 0.0
    %696 = vmatpush.msra.mxu0 0.0
    %697 = vmatpush.msra.mxu0 0.0
    %698 = vmatpush.msra.mxu0 0.0
    %699 = vmatpush.msra.mxu0 0.0
    %700 = vmatpush.msra.mxu0 0.0
    %701 = vmatpush.msra.mxu0 0.0
    %702 = vmatpush.msra.mxu0 0.0
    %703 = vmatpush.msra.mxu0 0.0
    %704 = vmatpush.msra.mxu0 0.0
    %705 = vmatpush.msra.mxu0 0.0
    %706 = vmatpush.msra.mxu0 0.0
    %707 = vmatpush.msra.mxu0 %v693
    %708 = vmatpush.msra.mxu0 %v685
    %709 = vmatpush.msra.mxu0 %v684
    %710 = vmatpush.msra.mxu0 %v683
    %711 = vmatmul.f32.gmra.mxu0 %v690
    %v712 = vpop.f32.mrf.mxu0
    %v713 = vadd.f32 0.0, %v712
    %714 = vdwg.mxu0
    %v715 = vsel %vm689, %v677, 0
    %v718 = vsel %vm63, %v682, 0
    %720 = vmatpush.msra.mxu0 0.0
    %721 = vmatpush.msra.mxu0 0.0
    %722 = vmatpush.msra.mxu0 0.0
    %723 = vmatpush.msra.mxu0 0.0
    %724 = vmatpush.msra.mxu0 0.0
    %725 = vmatpush.msra.mxu0 0.0
    %726 = vmatpush.msra.mxu0 0.0
    %727 = vmatpush.msra.mxu0 0.0
    %728 = vmatpush.msra.mxu0 0.0
    %729 = vmatpush.msra.mxu0 0.0
    %730 = vmatpush.msra.mxu0 0.0
    %731 = vmatpush.msra.mxu0 0.0
    %732 = vmatpush.msra.mxu0 %v718
    %733 = vmatpush.msra.mxu0 %v681
    %734 = vmatpush.msra.mxu0 %v680
    %735 = vmatpush.msra.mxu0 %v679
    %736 = vmatmul.f32.gmra.mxu0 %v715
    %v737 = vpop.f32.mrf.mxu0
    %v738 = vadd.f32 %v713, %v737
    %739 = vdwg.mxu0
    %v740 = vld [vmem:[#allocation3 + $0x1a8] sm:$0xff]
    %v741 = vld [vmem:[#allocation3 + $0x1b0] sm:$0xff]
    %v742 = vld [vmem:[#allocation3 + $0x1b8] sm:$0xff]
    %v743 = vld [vmem:[#allocation3 + $0x1c0] sm:$0x3f]
    %v744 = vrot.slane %v677, 2
    %v745 = vsel %vm689, %v744, 0
    %v748 = vsel %vm63, %v743, 0
    %750 = vmatpush.msra.mxu0 0.0
    %751 = vmatpush.msra.mxu0 0.0
    %752 = vmatpush.msra.mxu0 0.0
    %753 = vmatpush.msra.mxu0 0.0
    %754 = vmatpush.msra.mxu0 0.0
    %755 = vmatpush.msra.mxu0 0.0
    %756 = vmatpush.msra.mxu0 0.0
    %757 = vmatpush.msra.mxu0 0.0
    %758 = vmatpush.msra.mxu0 0.0
    %759 = vmatpush.msra.mxu0 0.0
    %760 = vmatpush.msra.mxu0 0.0
    %761 = vmatpush.msra.mxu0 0.0
    %762 = vmatpush.msra.mxu0 %v748
    %763 = vmatpush.msra.mxu0 %v742
    %764 = vmatpush.msra.mxu0 %v741
    %765 = vmatpush.msra.mxu0 %v740
    %766 = vmatmul.f32.gmra.mxu0 %v745
    %v767 = vpop.f32.mrf.mxu0
    %v768 = vadd.f32 0.0, %v767
    %769 = vdwg.mxu0
    %v770 = vadd.f32 %v738, %v768
    %v771 = vld [vmem:[#allocation3 + $0x1c8] sm:$0xff]
    %v772 = vld [vmem:[#allocation3 + $0x1d0] sm:$0xff]
    %v773 = vld [vmem:[#allocation3 + $0x1d8] sm:$0xff]
    %v774 = vld [vmem:[#allocation3 + $0x1e0] sm:$0x3f]
    %v775 = vrot.slane %v677, 3
    %v776 = vsel %vm689, %v775, 0
    %v779 = vsel %vm63, %v774, 0
    %781 = vmatpush.msra.mxu0 0.0
    %782 = vmatpush.msra.mxu0 0.0
    %783 = vmatpush.msra.mxu0 0.0
    %784 = vmatpush.msra.mxu0 0.0
    %785 = vmatpush.msra.mxu0 0.0
    %786 = vmatpush.msra.mxu0 0.0
    %787 = vmatpush.msra.mxu0 0.0
    %788 = vmatpush.msra.mxu0 0.0
    %789 = vmatpush.msra.mxu0 0.0
    %790 = vmatpush.msra.mxu0 0.0
    %791 = vmatpush.msra.mxu0 0.0
    %792 = vmatpush.msra.mxu0 0.0
    %793 = vmatpush.msra.mxu0 %v779
    %794 = vmatpush.msra.mxu0 %v773
    %795 = vmatpush.msra.mxu0 %v772
    %796 = vmatpush.msra.mxu0 %v771
    %797 = vmatmul.f32.gmra.mxu0 %v776
    %v798 = vpop.f32.mrf.mxu0
    %v799 = vadd.f32 0.0, %v798
    %800 = vdwg.mxu0
    %v801 = vadd.f32 %v770, %v799
    %v802 = vld [vmem:[#allocation3 + $0x1e8] sm:$0xff]
    %v803 = vld [vmem:[#allocation3 + $0x1f0] sm:$0xff]
    %v804 = vld [vmem:[#allocation3 + $0x1f8] sm:$0xff]
    %v805 = vld [vmem:[#allocation3 + $0x200] sm:$0x3f]
    %v806 = vrot.slane %v677, 4
    %v807 = vsel %vm689, %v806, 0
    %v810 = vsel %vm63, %v805, 0
    %812 = vmatpush.msra.mxu0 0.0
    %813 = vmatpush.msra.mxu0 0.0
    %814 = vmatpush.msra.mxu0 0.0
    %815 = vmatpush.msra.mxu0 0.0
    %816 = vmatpush.msra.mxu0 0.0
    %817 = vmatpush.msra.mxu0 0.0
    %818 = vmatpush.msra.mxu0 0.0
    %819 = vmatpush.msra.mxu0 0.0
    %820 = vmatpush.msra.mxu0 0.0
    %821 = vmatpush.msra.mxu0 0.0
    %822 = vmatpush.msra.mxu0 0.0
    %823 = vmatpush.msra.mxu0 0.0
    %824 = vmatpush.msra.mxu0 %v810
    %825 = vmatpush.msra.mxu0 %v804
    %826 = vmatpush.msra.mxu0 %v803
    %827 = vmatpush.msra.mxu0 %v802
    %828 = vmatmul.f32.gmra.mxu0 %v807
    %v829 = vpop.f32.mrf.mxu0
    %v830 = vadd.f32 0.0, %v829
    %831 = vdwg.mxu0
    %v832 = vadd.f32 %v801, %v830
    %v833 = vld [vmem:[#allocation3 + $0x208] sm:$0xff]
    %v834 = vld [vmem:[#allocation3 + $0x210] sm:$0xff]
    %v835 = vld [vmem:[#allocation3 + $0x218] sm:$0xff]
    %v836 = vld [vmem:[#allocation3 + $0x220] sm:$0x3f]
    %v837 = vrot.slane %v677, 5
    %v838 = vsel %vm689, %v837, 0
    %v841 = vsel %vm63, %v836, 0
    %843 = vmatpush.msra.mxu0 0.0
    %844 = vmatpush.msra.mxu0 0.0
    %845 = vmatpush.msra.mxu0 0.0
    %846 = vmatpush.msra.mxu0 0.0
    %847 = vmatpush.msra.mxu0 0.0
    %848 = vmatpush.msra.mxu0 0.0
    %849 = vmatpush.msra.mxu0 0.0
    %850 = vmatpush.msra.mxu0 0.0
    %851 = vmatpush.msra.mxu0 0.0
    %852 = vmatpush.msra.mxu0 0.0
    %853 = vmatpush.msra.mxu0 0.0
    %854 = vmatpush.msra.mxu0 0.0
    %855 = vmatpush.msra.mxu0 %v841
    %856 = vmatpush.msra.mxu0 %v835
    %857 = vmatpush.msra.mxu0 %v834
    %858 = vmatpush.msra.mxu0 %v833
    %859 = vmatmul.f32.gmra.mxu0 %v838
    %v860 = vpop.f32.mrf.mxu0
    %v861 = vadd.f32 0.0, %v860
    %862 = vdwg.mxu0
    %v863 = vadd.f32 %v832, %v861
    %v864 = vld [vmem:[#allocation3 + $0x228] sm:$0xff]
    %v865 = vld [vmem:[#allocation3 + $0x230] sm:$0xff]
    %v866 = vld [vmem:[#allocation3 + $0x238] sm:$0xff]
    %v867 = vld [vmem:[#allocation3 + $0x240] sm:$0x3f]
    %v868 = vrot.slane %v677, 6
    %v869 = vsel %vm689, %v868, 0
    %v872 = vsel %vm63, %v867, 0
    %874 = vmatpush.msra.mxu0 0.0
    %875 = vmatpush.msra.mxu0 0.0
    %876 = vmatpush.msra.mxu0 0.0
    %877 = vmatpush.msra.mxu0 0.0
    %878 = vmatpush.msra.mxu0 0.0
    %879 = vmatpush.msra.mxu0 0.0
    %880 = vmatpush.msra.mxu0 0.0
    %881 = vmatpush.msra.mxu0 0.0
    %882 = vmatpush.msra.mxu0 0.0
    %883 = vmatpush.msra.mxu0 0.0
    %884 = vmatpush.msra.mxu0 0.0
    %885 = vmatpush.msra.mxu0 0.0
    %886 = vmatpush.msra.mxu0 %v872
    %887 = vmatpush.msra.mxu0 %v866
    %888 = vmatpush.msra.mxu0 %v865
    %889 = vmatpush.msra.mxu0 %v864
    %890 = vmatmul.f32.gmra.mxu0 %v869
    %v891 = vpop.f32.mrf.mxu0
    %v892 = vadd.f32 0.0, %v891
    %893 = vdwg.mxu0
    %v894 = vadd.f32 %v863, %v892
    %v895 = vld [vmem:[#allocation3 + $0x248] sm:$0xff]
    %v896 = vld [vmem:[#allocation3 + $0x250] sm:$0xff]
    %v897 = vld [vmem:[#allocation3 + $0x258] sm:$0xff]
    %v898 = vld [vmem:[#allocation3 + $0x260] sm:$0x3f]
    %v899 = vrot.slane %v677, 7
    %v900 = vsel %vm689, %v899, 0
    %v903 = vsel %vm63, %v898, 0
    %905 = vmatpush.msra.mxu0 0.0
    %906 = vmatpush.msra.mxu0 0.0
    %907 = vmatpush.msra.mxu0 0.0
    %908 = vmatpush.msra.mxu0 0.0
    %909 = vmatpush.msra.mxu0 0.0
    %910 = vmatpush.msra.mxu0 0.0
    %911 = vmatpush.msra.mxu0 0.0
    %912 = vmatpush.msra.mxu0 0.0
    %913 = vmatpush.msra.mxu0 0.0
    %914 = vmatpush.msra.mxu0 0.0
    %915 = vmatpush.msra.mxu0 0.0
    %916 = vmatpush.msra.mxu0 0.0
    %917 = vmatpush.msra.mxu0 %v903
    %918 = vmatpush.msra.mxu0 %v897
    %919 = vmatpush.msra.mxu0 %v896
    %920 = vmatpush.msra.mxu0 %v895
    %921 = vmatmul.f32.gmra.mxu0 %v900
    %v922 = vpop.f32.mrf.mxu0
    %v923 = vadd.f32 0.0, %v922
    %924 = vdwg.mxu0
    %v925 = vadd.f32 %v894, %v923
    %v926 = vld [vmem:[#allocation3 + $0x268] sm:$0xff]
    %v927 = vld [vmem:[#allocation3 + $0x270] sm:$0xff]
    %v928 = vld [vmem:[#allocation3 + $0x278] sm:$0xff]
    %v929 = vld [vmem:[#allocation3 + $0x280] sm:$0x3f]
    %v931 = vsel %vm689, %v678, 0
    %v934 = vsel %vm63, %v929, 0
    %936 = vmatpush.msra.mxu0 0.0
    %937 = vmatpush.msra.mxu0 0.0
    %938 = vmatpush.msra.mxu0 0.0
    %939 = vmatpush.msra.mxu0 0.0
    %940 = vmatpush.msra.mxu0 0.0
    %941 = vmatpush.msra.mxu0 0.0
    %942 = vmatpush.msra.mxu0 0.0
    %943 = vmatpush.msra.mxu0 0.0
    %944 = vmatpush.msra.mxu0 0.0
    %945 = vmatpush.msra.mxu0 0.0
    %946 = vmatpush.msra.mxu0 0.0
    %947 = vmatpush.msra.mxu0 0.0
    %948 = vmatpush.msra.mxu0 %v934
    %949 = vmatpush.msra.mxu0 %v928
    %950 = vmatpush.msra.mxu0 %v927
    %951 = vmatpush.msra.mxu0 %v926
    %952 = vmatmul.f32.gmra.mxu0 %v931
    %v953 = vpop.f32.mrf.mxu0
    %v954 = vadd.f32 0.0, %v953
    %955 = vdwg.mxu0
    %v956 = vadd.f32 %v925, %v954
    %v957 = vld [vmem:[#allocation3 + $0x288] sm:$0xff]
    %v958 = vld [vmem:[#allocation3 + $0x290] sm:$0xff]
    %v959 = vld [vmem:[#allocation3 + $0x298] sm:$0xff]
    %v960 = vld [vmem:[#allocation3 + $0x2a0] sm:$0x3f]
    %v961 = vrot.slane %v678, 1
    %v962 = vsel %vm689, %v961, 0
    %v965 = vsel %vm63, %v960, 0
    %967 = vmatpush.msra.mxu0 0.0
    %968 = vmatpush.msra.mxu0 0.0
    %969 = vmatpush.msra.mxu0 0.0
    %970 = vmatpush.msra.mxu0 0.0
    %971 = vmatpush.msra.mxu0 0.0
    %972 = vmatpush.msra.mxu0 0.0
    %973 = vmatpush.msra.mxu0 0.0
    %974 = vmatpush.msra.mxu0 0.0
    %975 = vmatpush.msra.mxu0 0.0
    %976 = vmatpush.msra.mxu0 0.0
    %977 = vmatpush.msra.mxu0 0.0
    %978 = vmatpush.msra.mxu0 0.0
    %979 = vmatpush.msra.mxu0 %v965
    %980 = vmatpush.msra.mxu0 %v959
    %981 = vmatpush.msra.mxu0 %v958
    %982 = vmatpush.msra.mxu0 %v957
    %983 = vmatmul.f32.gmra.mxu0 %v962
    %v984 = vpop.f32.mrf.mxu0
    %v985 = vadd.f32 0.0, %v984
    %986 = vdwg.mxu0
    %v987 = vadd.f32 %v956, %v985
    %v988 = vld [vmem:[#allocation3 + $0x2a8] sm:$0x1]
    %v989 = vadd.f32 %v987, %v988
    %v990 = vmax.f32 %v989, 0.0
    %v991 = vld [vmem:[#allocation3 + $0x2b0] sm:$0xff]
    %v992 = vld [vmem:[#allocation3 + $0x2b8] sm:$0xff]
    %v993 = vld [vmem:[#allocation3 + $0x2c0] sm:$0xff]
    %v994 = vld [vmem:[#allocation3 + $0x2c8] sm:$0xff]
    %v995 = vld [vmem:[#allocation3 + $0x2d0] sm:$0xff]
    %v996 = vld [vmem:[#allocation3 + $0x2d8] sm:$0xff]
    %v997 = vld [vmem:[#allocation3 + $0x2e0] sm:$0xff]
    %v998 = vld [vmem:[#allocation3 + $0x2e8] sm:$0xff]
    %v999 = vld [vmem:[#allocation3 + $0x2f0] sm:$0xff]
    %v1000 = vld [vmem:[#allocation3 + $0x2f8] sm:$0xff]
    %v1001 = vld [vmem:[#allocation3 + $0x300] sm:$0xff]
    %v1002 = vld [vmem:[#allocation3 + $0x308] sm:$0xff]
    %v1003 = vld [vmem:[#allocation3 + $0x310] sm:$0xf]
    %v1004 = vld [vmem:[#allocation3 + $0x318] sm:$0x1]
    %vm1005 = vcmask 818176
    %v1007 = vsel %vm1005, %v990, 0
    %v1010 = vsel %vm443, %v1003, 0
    %1012 = vmatpush.msra.mxu0 0.0
    %1013 = vmatpush.msra.mxu0 0.0
    %1014 = vmatpush.msra.mxu0 0.0
    %1015 = vmatpush.msra.mxu0 %v1010
    %1016 = vmatpush.msra.mxu0 %v1002
    %1017 = vmatpush.msra.mxu0 %v1001
    %1018 = vmatpush.msra.mxu0 %v1000
    %1019 = vmatpush.msra.mxu0 %v999
    %1020 = vmatpush.msra.mxu0 %v998
    %1021 = vmatpush.msra.mxu0 %v997
    %1022 = vmatpush.msra.mxu0 %v996
    %1023 = vmatpush.msra.mxu0 %v995
    %1024 = vmatpush.msra.mxu0 %v994
    %1025 = vmatpush.msra.mxu0 %v993
    %1026 = vmatpush.msra.mxu0 %v992
    %1027 = vmatpush.msra.mxu0 %v991
    %1028 = vmatmul.f32.gmra.mxu0 %v1007
    %v1029 = vpop.f32.mrf.mxu0
    %v1030 = vadd.f32 %v1004, %v1029
    %1031 = vdwg.mxu0
    %1033 = vrot.lane.b32.xlu0 %v1030, 127
    %v1034 = vpop.permute.xlu0 %1033
    %vm1036 = vcmask 32768
    %v1037 = vsel %vm1036, %v1034, 0.0
    %1038 = vadd.xlane.f32.xlu0 %v1037
    %v1039 = vpop.xlane.xlu0 %1038
    %v1040 = vrcp.pop 5.0
    %v1041 = vmul.f32 5.0, %v1040
    %v1042 = vsub.f32 1.0, %v1041
    %v1043 = vmul.f32 %v1040, %v1042
    %v1044 = vadd.f32 %v1040, %v1043
    %vm1045 = vweird.f32 %v1040
    %v1046 = vsel %vm1045, %v1040, %v1044
    %v1047 = vmul.f32 %v1039, %v1046
    %v1048 = vsub.f32 %v1030, %v1047
    %1049 = vset.pattern.permute.xlu0 0
    %1050 = vperm.xlu0 %1049, %v1030
    %v1051 = vpop.permute.xlu0 %1050
    %v1053 = vadd.f32 %v1051, %v1048
    %vm1054 = vcmask 0
    %1055 = vst.msk [vmem:[%s2] sm:$0x1] %vm1054, %v1030
    %vm1056 = vcmask 40968
    %1057 = vst.msk [vmem:[%s2] sm:$0x1] %vm1056, %v1030
    %1059 = vrot.lane.b32.xlu0 %v1053, 5
    %v1060 = vpop.permute.xlu0 %1059
    %vm1062 = vcmask 81968
    %1063 = vst.msk [vmem:[%s2] sm:$0x1] %vm1062, %v1060
    %s1064 = scalar_lea.vmem %s0, 16
    %v1065 = vld [vmem:[%s1064] sm:$0xff]
    %v1066 = vld [vmem:[%s1064 + $0x8] sm:$0xff]
    %v1067 = vld [vmem:[#allocation3] sm:$0x1]
    %1069 = vset.pattern.permute.xlu0 0
    %1070 = vperm.xlu0 %1069, %v1065
    %v1071 = vpop.permute.xlu0 %1070
    %1074 = vset.pattern.permute.xlu0 0
    %1075 = vperm.xlu0 %1074, %v1066
    %v1076 = vpop.permute.xlu0 %1075
    %v1078 = vperm.slane %v1067, 0
    %v1079 = vmul.f32 %v1071, %v1078
    %v1080 = vmul.f32 %v1076, %v1078
    %v1081 = vld [vmem:[#allocation3 + $0x8] sm:$0x1]
    %v1082 = vperm.slane %v1081, 0
    %v1083 = vmul.f32 %v1071, %v1082
    %v1084 = vmul.f32 %v1076, %v1082
    %v1087 = vrot.slane %v1083, 1
    %v1088 = vrot.slane %v1084, 1
    %v1089 = vsel %vm49, %v1087, %v1088
    %v1092 = vadd.f32 %v1079, %v1089
    %v1093 = vadd.f32 %v1080, %v1088
    %v1094 = vld [vmem:[#allocation3 + $0x10] sm:$0x1]
    %v1095 = vperm.slane %v1094, 0
    %v1096 = vmul.f32 %v1071, %v1095
    %v1097 = vmul.f32 %v1076, %v1095
    %v1100 = vrot.slane %v1096, 2
    %v1101 = vrot.slane %v1097, 2
    %v1102 = vsel %vm63, %v1100, %v1101
    %v1105 = vadd.f32 %v1092, %v1102
    %v1106 = vadd.f32 %v1093, %v1101
    %v1107 = vld [vmem:[#allocation3 + $0x18] sm:$0x1]
    %v1108 = vperm.slane %v1107, 0
    %v1109 = vadd.f32 %v1105, %v1108
    %v1110 = vadd.f32 %v1106, %v1108
    %v1111 = vmax.f32 %v1109, 0.0
    %v1112 = vmax.f32 %v1110, 0.0
    %v1113 = vld [vmem:[#allocation3 + $0x20] sm:$0x1f]
    %v1114 = vld [vmem:[#allocation3 + $0x28] sm:$0x1f]
    %v1117 = vrot.slane %v1111, 1
    %v1118 = vrot.slane %v1112, 1
    %v1119 = vsel %vm49, %v1117, %v1118
    %v1120 = vsel %vm84, %v1119, 0
    %v1122 = vsel %vm84, %v1118, 0
    %v1125 = vsel %vm89, %v1114, 0
    %1127 = vmatpush.msra.mxu0 0.0
    %1128 = vmatpush.msra.mxu0 0.0
    %1129 = vmatpush.msra.mxu0 0.0
    %1130 = vmatpush.msra.mxu0 0.0
    %1131 = vmatpush.msra.mxu0 0.0
    %1132 = vmatpush.msra.mxu0 0.0
    %1133 = vmatpush.msra.mxu0 0.0
    %1134 = vmatpush.msra.mxu0 0.0
    %1135 = vmatpush.msra.mxu0 0.0
    %1136 = vmatpush.msra.mxu0 0.0
    %1137 = vmatpush.msra.mxu0 0.0
    %1138 = vmatpush.msra.mxu0 0.0
    %1139 = vmatpush.msra.mxu0 0.0
    %1140 = vmatpush.msra.mxu0 0.0
    %1141 = vmatpush.msra.mxu0 0.0
    %1142 = vmatpush.msra.mxu0 %v1125
    %1143 = vmatmul.f32.gmra.mxu0 %v1120
    %v1144 = vpop.f32.mrf.mxu0
    %v1145 = vadd.f32 0.0, %v1144
    %1146 = vmatmul.f32.gmra.mxu0 %v1122
    %v1147 = vpop.f32.mrf.mxu0
    %v1148 = vadd.f32 0.0, %v1147
    %1149 = vdwg.mxu0
    %v1150 = vsel %vm84, %v1111, 0
    %v1152 = vsel %vm84, %v1112, 0
    %v1155 = vsel %vm89, %v1113, 0
    %1157 = vmatpush.msra.mxu0 0.0
    %1158 = vmatpush.msra.mxu0 0.0
    %1159 = vmatpush.msra.mxu0 0.0
    %1160 = vmatpush.msra.mxu0 0.0
    %1161 = vmatpush.msra.mxu0 0.0
    %1162 = vmatpush.msra.mxu0 0.0
    %1163 = vmatpush.msra.mxu0 0.0
    %1164 = vmatpush.msra.mxu0 0.0
    %1165 = vmatpush.msra.mxu0 0.0
    %1166 = vmatpush.msra.mxu0 0.0
    %1167 = vmatpush.msra.mxu0 0.0
    %1168 = vmatpush.msra.mxu0 0.0
    %1169 = vmatpush.msra.mxu0 0.0
    %1170 = vmatpush.msra.mxu0 0.0
    %1171 = vmatpush.msra.mxu0 0.0
    %1172 = vmatpush.msra.mxu0 %v1155
    %1173 = vmatmul.f32.gmra.mxu0 %v1150
    %v1174 = vpop.f32.mrf.mxu0
    %v1175 = vadd.f32 %v1145, %v1174
    %1176 = vmatmul.f32.gmra.mxu0 %v1152
    %v1177 = vpop.f32.mrf.mxu0
    %v1178 = vadd.f32 %v1148, %v1177
    %1179 = vdwg.mxu0
    %v1180 = vld [vmem:[#allocation3 + $0x30] sm:$0x1f]
    %v1181 = vrot.slane %v1111, 2
    %v1182 = vrot.slane %v1112, 2
    %v1183 = vsel %vm63, %v1181, %v1182
    %v1184 = vsel %vm84, %v1183, 0
    %v1186 = vsel %vm84, %v1182, 0
    %v1189 = vsel %vm89, %v1180, 0
    %1191 = vmatpush.msra.mxu0 0.0
    %1192 = vmatpush.msra.mxu0 0.0
    %1193 = vmatpush.msra.mxu0 0.0
    %1194 = vmatpush.msra.mxu0 0.0
    %1195 = vmatpush.msra.mxu0 0.0
    %1196 = vmatpush.msra.mxu0 0.0
    %1197 = vmatpush.msra.mxu0 0.0
    %1198 = vmatpush.msra.mxu0 0.0
    %1199 = vmatpush.msra.mxu0 0.0
    %1200 = vmatpush.msra.mxu0 0.0
    %1201 = vmatpush.msra.mxu0 0.0
    %1202 = vmatpush.msra.mxu0 0.0
    %1203 = vmatpush.msra.mxu0 0.0
    %1204 = vmatpush.msra.mxu0 0.0
    %1205 = vmatpush.msra.mxu0 0.0
    %1206 = vmatpush.msra.mxu0 %v1189
    %1207 = vmatmul.f32.gmra.mxu0 %v1184
    %v1208 = vpop.f32.mrf.mxu0
    %v1209 = vadd.f32 0.0, %v1208
    %1210 = vmatmul.f32.gmra.mxu0 %v1186
    %v1211 = vpop.f32.mrf.mxu0
    %v1212 = vadd.f32 0.0, %v1211
    %1213 = vdwg.mxu0
    %v1214 = vadd.f32 %v1175, %v1209
    %v1215 = vadd.f32 %v1178, %v1212
    %v1216 = vld [vmem:[#allocation3 + $0x38] sm:$0x1]
    %v1217 = vperm.slane %v1216, 0
    %v1218 = vadd.f32 %v1214, %v1217
    %v1219 = vadd.f32 %v1215, %v1217
    %v1220 = vmax.f32 %v1218, 0.0
    %v1221 = vmax.f32 %v1219, 0.0
    %v1222 = vld [vmem:[#allocation3 + $0x50] sm:$0xff]
    %v1223 = vld [vmem:[#allocation3 + $0x58] sm:$0x3]
    %v1225 = vsel %vm190, %v1220, 0
    %v1228 = vsel %vm190, %v1221, 0
    %v1231 = vsel %vm197, %v1223, 0
    %1233 = vmatpush.msra.mxu0 0.0
    %1234 = vmatpush.msra.mxu0 0.0
    %1235 = vmatpush.msra.mxu0 0.0
    %1236 = vmatpush.msra.mxu0 0.0
    %1237 = vmatpush.msra.mxu0 0.0
    %1238 = vmatpush.msra.mxu0 0.0
    %1239 = vmatpush.msra.mxu0 0.0
    %1240 = vmatpush.msra.mxu0 0.0
    %1241 = vmatpush.msra.mxu0 0.0
    %1242 = vmatpush.msra.mxu0 0.0
    %1243 = vmatpush.msra.mxu0 0.0
    %1244 = vmatpush.msra.mxu0 0.0
    %1245 = vmatpush.msra.mxu0 0.0
    %1246 = vmatpush.msra.mxu0 0.0
    %1247 = vmatpush.msra.mxu0 %v1231
    %1248 = vmatpush.msra.mxu0 %v1222
    %1249 = vmatmul.f32.gmra.mxu0 %v1225
    %v1250 = vpop.f32.mrf.mxu0
    %v1251 = vadd.f32 0.0, %v1250
    %1252 = vmatmul.f32.gmra.mxu0 %v1228
    %v1253 = vpop.f32.mrf.mxu0
    %v1254 = vadd.f32 0.0, %v1253
    %1255 = vdwg.mxu0
    %1256 = vst.msk [vmem:[#allocation2] sm:$0xff] %vm224, %v1251
    %1257 = vst.msk [vmem:[#allocation2 + $0x8] sm:$0xf] %vm226, %v1254
    %v1258 = vld [vmem:[#allocation2 + $0x1] sm:$0xff]
    %v1259 = vld [vmem:[#allocation2 + $0x9] sm:$0x7]
    %v1260 = vld [vmem:[#allocation3 + $0x40] sm:$0xff]
    %v1261 = vld [vmem:[#allocation3 + $0x48] sm:$0x3]
    %v1263 = vsel %vm197, %v1261, 0
    %1265 = vmatpush.msra.mxu0 0.0
    %1266 = vmatpush.msra.mxu0 0.0
    %1267 = vmatpush.msra.mxu0 0.0
    %1268 = vmatpush.msra.mxu0 0.0
    %1269 = vmatpush.msra.mxu0 0.0
    %1270 = vmatpush.msra.mxu0 0.0
    %1271 = vmatpush.msra.mxu0 0.0
    %1272 = vmatpush.msra.mxu0 0.0
    %1273 = vmatpush.msra.mxu0 0.0
    %1274 = vmatpush.msra.mxu0 0.0
    %1275 = vmatpush.msra.mxu0 0.0
    %1276 = vmatpush.msra.mxu0 0.0
    %1277 = vmatpush.msra.mxu0 0.0
    %1278 = vmatpush.msra.mxu0 0.0
    %1279 = vmatpush.msra.mxu0 %v1263
    %1280 = vmatpush.msra.mxu0 %v1260
    %1281 = vmatmul.f32.gmra.mxu0 %v1225
    %v1282 = vpop.f32.mrf.mxu0
    %v1283 = vadd.f32 0.0, %v1282
    %1284 = vmatmul.f32.gmra.mxu0 %v1228
    %v1285 = vpop.f32.mrf.mxu0
    %v1286 = vadd.f32 0.0, %v1285
    %1287 = vdwg.mxu0
    %v1288 = vadd.f32 %v1258, %v1283
    %v1289 = vadd.f32 %v1259, %v1286
    %1290 = vst.msk [vmem:[#allocation2 + $0x1] sm:$0xff] %vm224, %v1288
    %1291 = vst.msk [vmem:[#allocation2 + $0x9] sm:$0x7] %vm261, %v1289
    %v1292 = vld [vmem:[#allocation2] sm:$0xff]
    %v1293 = vld [vmem:[#allocation2 + $0x8] sm:$0x7]
    %v1294 = vld [vmem:[#allocation3 + $0x60] sm:$0xff]
    %v1295 = vld [vmem:[#allocation3 + $0x68] sm:$0x3]
    %v1296 = vrot.slane %v1220, 1
    %v1297 = vrot.slane %v1221, 1
    %v1298 = vsel %vm49, %v1296, %v1297
    %v1299 = vsel %vm190, %v1298, 0
    %v1301 = vsel %vm190, %v1297, 0
    %v1304 = vsel %vm197, %v1295, 0
    %1306 = vmatpush.msra.mxu0 0.0
    %1307 = vmatpush.msra.mxu0 0.0
    %1308 = vmatpush.msra.mxu0 0.0
    %1309 = vmatpush.msra.mxu0 0.0
    %1310 = vmatpush.msra.mxu0 0.0
    %1311 = vmatpush.msra.mxu0 0.0
    %1312 = vmatpush.msra.mxu0 0.0
    %1313 = vmatpush.msra.mxu0 0.0
    %1314 = vmatpush.msra.mxu0 0.0
    %1315 = vmatpush.msra.mxu0 0.0
    %1316 = vmatpush.msra.mxu0 0.0
    %1317 = vmatpush.msra.mxu0 0.0
    %1318 = vmatpush.msra.mxu0 0.0
    %1319 = vmatpush.msra.mxu0 0.0
    %1320 = vmatpush.msra.mxu0 %v1304
    %1321 = vmatpush.msra.mxu0 %v1294
    %1322 = vmatmul.f32.gmra.mxu0 %v1299
    %v1323 = vpop.f32.mrf.mxu0
    %v1324 = vadd.f32 0.0, %v1323
    %1325 = vmatmul.f32.gmra.mxu0 %v1301
    %v1326 = vpop.f32.mrf.mxu0
    %v1327 = vadd.f32 0.0, %v1326
    %1328 = vdwg.mxu0
    %v1329 = vadd.f32 %v1292, %v1324
    %v1330 = vadd.f32 %v1293, %v1327
    %1331 = vst.msk [vmem:[#allocation2] sm:$0xff] %vm224, %v1329
    %1332 = vst.msk [vmem:[#allocation2 + $0x8] sm:$0x7] %vm261, %v1330
    %v1333 = vld [vmem:[#allocation2] sm:$0xff]
    %v1334 = vld [vmem:[#allocation2 + $0x8] sm:$0xf]
    %v1335 = vld [vmem:[#allocation3 + $0x70] sm:$0x1]
    %v1336 = vperm.slane %v1335, 0
    %v1337 = vadd.f32 %v1333, %v1336
    %v1338 = vadd.f32 %v1334, %v1336
    %v1339 = vmax.f32 %v1337, 0.0
    %v1340 = vmax.f32 %v1338, 0.0
    %v1341 = vld [vmem:[#allocation3 + $0x88] sm:$0xff]
    %v1342 = vld [vmem:[#allocation3 + $0x90] sm:$0x7f]
    %v1344 = vsel %vm224, %v1339, 0
    %v1347 = vsel %vm224, %v1340, 0
    %v1350 = vsel %vm49, %v1342, 0
    %1352 = vmatpush.msra.mxu0 0.0
    %1353 = vmatpush.msra.mxu0 0.0
    %1354 = vmatpush.msra.mxu0 0.0
    %1355 = vmatpush.msra.mxu0 0.0
    %1356 = vmatpush.msra.mxu0 0.0
    %1357 = vmatpush.msra.mxu0 0.0
    %1358 = vmatpush.msra.mxu0 0.0
    %1359 = vmatpush.msra.mxu0 0.0
    %1360 = vmatpush.msra.mxu0 0.0
    %1361 = vmatpush.msra.mxu0 0.0
    %1362 = vmatpush.msra.mxu0 0.0
    %1363 = vmatpush.msra.mxu0 0.0
    %1364 = vmatpush.msra.mxu0 0.0
    %1365 = vmatpush.msra.mxu0 0.0
    %1366 = vmatpush.msra.mxu0 %v1350
    %1367 = vmatpush.msra.mxu0 %v1341
    %1368 = vmatmul.f32.gmra.mxu0 %v1344
    %v1369 = vpop.f32.mrf.mxu0
    %v1370 = vadd.f32 0.0, %v1369
    %1371 = vmatmul.f32.gmra.mxu0 %v1347
    %v1372 = vpop.f32.mrf.mxu0
    %v1373 = vadd.f32 0.0, %v1372
    %1374 = vdwg.mxu0
    %1375 = vst.msk [vmem:[#allocation2] sm:$0xff] %vm346, %v1370
    %1376 = vst.msk [vmem:[#allocation2 + $0x8] sm:$0xf] %vm348, %v1373
    %v1377 = vld [vmem:[#allocation2 + $0x1] sm:$0xff]
    %v1378 = vld [vmem:[#allocation2 + $0x9] sm:$0x7]
    %v1379 = vld [vmem:[#allocation3 + $0x78] sm:$0xff]
    %v1380 = vld [vmem:[#allocation3 + $0x80] sm:$0x7f]
    %v1382 = vsel %vm49, %v1380, 0
    %1384 = vmatpush.msra.mxu0 0.0
    %1385 = vmatpush.msra.mxu0 0.0
    %1386 = vmatpush.msra.mxu0 0.0
    %1387 = vmatpush.msra.mxu0 0.0
    %1388 = vmatpush.msra.mxu0 0.0
    %1389 = vmatpush.msra.mxu0 0.0
    %1390 = vmatpush.msra.mxu0 0.0
    %1391 = vmatpush.msra.mxu0 0.0
    %1392 = vmatpush.msra.mxu0 0.0
    %1393 = vmatpush.msra.mxu0 0.0
    %1394 = vmatpush.msra.mxu0 0.0
    %1395 = vmatpush.msra.mxu0 0.0
    %1396 = vmatpush.msra.mxu0 0.0
    %1397 = vmatpush.msra.mxu0 0.0
    %1398 = vmatpush.msra.mxu0 %v1382
    %1399 = vmatpush.msra.mxu0 %v1379
    %1400 = vmatmul.f32.gmra.mxu0 %v1344
    %v1401 = vpop.f32.mrf.mxu0
    %v1402 = vadd.f32 0.0, %v1401
    %1403 = vmatmul.f32.gmra.mxu0 %v1347
    %v1404 = vpop.f32.mrf.mxu0
    %v1405 = vadd.f32 0.0, %v1404
    %1406 = vdwg.mxu0
    %v1407 = vadd.f32 %v1377, %v1402
    %v1408 = vadd.f32 %v1378, %v1405
    %1409 = vst.msk [vmem:[#allocation2 + $0x1] sm:$0xff] %vm346, %v1407
    %1410 = vst.msk [vmem:[#allocation2 + $0x9] sm:$0x7] %vm383, %v1408
    %v1411 = vld [vmem:[#allocation2] sm:$0xff]
    %v1412 = vld [vmem:[#allocation2 + $0x8] sm:$0x7]
    %v1413 = vld [vmem:[#allocation3 + $0x98] sm:$0xff]
    %v1414 = vld [vmem:[#allocation3 + $0xa0] sm:$0x7f]
    %v1415 = vrot.slane %v1339, 1
    %v1416 = vrot.slane %v1340, 1
    %v1417 = vsel %vm49, %v1415, %v1416
    %v1418 = vsel %vm224, %v1417, 0
    %v1420 = vsel %vm224, %v1416, 0
    %v1423 = vsel %vm49, %v1414, 0
    %1425 = vmatpush.msra.mxu0 0.0
    %1426 = vmatpush.msra.mxu0 0.0
    %1427 = vmatpush.msra.mxu0 0.0
    %1428 = vmatpush.msra.mxu0 0.0
    %1429 = vmatpush.msra.mxu0 0.0
    %1430 = vmatpush.msra.mxu0 0.0
    %1431 = vmatpush.msra.mxu0 0.0
    %1432 = vmatpush.msra.mxu0 0.0
    %1433 = vmatpush.msra.mxu0 0.0
    %1434 = vmatpush.msra.mxu0 0.0
    %1435 = vmatpush.msra.mxu0 0.0
    %1436 = vmatpush.msra.mxu0 0.0
    %1437 = vmatpush.msra.mxu0 0.0
    %1438 = vmatpush.msra.mxu0 0.0
    %1439 = vmatpush.msra.mxu0 %v1423
    %1440 = vmatpush.msra.mxu0 %v1413
    %1441 = vmatmul.f32.gmra.mxu0 %v1418
    %v1442 = vpop.f32.mrf.mxu0
    %v1443 = vadd.f32 0.0, %v1442
    %1444 = vmatmul.f32.gmra.mxu0 %v1420
    %v1445 = vpop.f32.mrf.mxu0
    %v1446 = vadd.f32 0.0, %v1445
    %1447 = vdwg.mxu0
    %v1448 = vadd.f32 %v1411, %v1443
    %v1449 = vadd.f32 %v1412, %v1446
    %1450 = vst.msk [vmem:[#allocation2] sm:$0xff] %vm346, %v1448
    %1451 = vst.msk [vmem:[#allocation2 + $0x8] sm:$0x7] %vm383, %v1449
    %v1452 = vld [vmem:[#allocation2] sm:$0xff]
    %v1453 = vld [vmem:[#allocation2 + $0x8] sm:$0xf]
    %v1454 = vld [vmem:[#allocation3 + $0xa8] sm:$0x1]
    %v1455 = vperm.slane %v1454, 0
    %v1456 = vadd.f32 %v1452, %v1455
    %v1457 = vadd.f32 %v1453, %v1455
    %v1458 = vmax.f32 %v1456, 0.0
    %v1459 = vmax.f32 %v1457, 0.0
    %v1460 = vld [vmem:[#allocation3 + $0xc8] sm:$0xff]
    %v1461 = vld [vmem:[#allocation3 + $0xd0] sm:$0xff]
    %v1462 = vld [vmem:[#allocation3 + $0xd8] sm:$0xf]
    %v1464 = vsel %vm346, %v1458, 0
    %v1467 = vsel %vm346, %v1459, 0
    %v1470 = vsel %vm443, %v1462, 0
    %1472 = vmatpush.msra.mxu0 0.0
    %1473 = vmatpush.msra.mxu0 0.0
    %1474 = vmatpush.msra.mxu0 0.0
    %1475 = vmatpush.msra.mxu0 0.0
    %1476 = vmatpush.msra.mxu0 0.0
    %1477 = vmatpush.msra.mxu0 0.0
    %1478 = vmatpush.msra.mxu0 0.0
    %1479 = vmatpush.msra.mxu0 0.0
    %1480 = vmatpush.msra.mxu0 0.0
    %1481 = vmatpush.msra.mxu0 0.0
    %1482 = vmatpush.msra.mxu0 0.0
    %1483 = vmatpush.msra.mxu0 0.0
    %1484 = vmatpush.msra.mxu0 0.0
    %1485 = vmatpush.msra.mxu0 %v1470
    %1486 = vmatpush.msra.mxu0 %v1461
    %1487 = vmatpush.msra.mxu0 %v1460
    %1488 = vmatmul.f32.gmra.mxu0 %v1464
    %v1489 = vpop.f32.mrf.mxu0
    %v1490 = vadd.f32 0.0, %v1489
    %1491 = vmatmul.f32.gmra.mxu0 %v1467
    %v1492 = vpop.f32.mrf.mxu0
    %v1493 = vadd.f32 0.0, %v1492
    %1494 = vdwg.mxu0
    %1495 = vst.msk [vmem:[#allocation2] sm:$0xff] %vm470, %v1490
    %1496 = vst.msk [vmem:[#allocation2 + $0x8] sm:$0xf] %vm472, %v1493
    %v1497 = vld [vmem:[#allocation2 + $0x1] sm:$0xff]
    %v1498 = vld [vmem:[#allocation2 + $0x9] sm:$0x7]
    %v1499 = vld [vmem:[#allocation3 + $0xb0] sm:$0xff]
    %v1500 = vld [vmem:[#allocation3 + $0xb8] sm:$0xff]
    %v1501 = vld [vmem:[#allocation3 + $0xc0] sm:$0xf]
    %v1503 = vsel %vm443, %v1501, 0
    %1505 = vmatpush.msra.mxu0 0.0
    %1506 = vmatpush.msra.mxu0 0.0
    %1507 = vmatpush.msra.mxu0 0.0
    %1508 = vmatpush.msra.mxu0 0.0
    %1509 = vmatpush.msra.mxu0 0.0
    %1510 = vmatpush.msra.mxu0 0.0
    %1511 = vmatpush.msra.mxu0 0.0
    %1512 = vmatpush.msra.mxu0 0.0
    %1513 = vmatpush.msra.mxu0 0.0
    %1514 = vmatpush.msra.mxu0 0.0
    %1515 = vmatpush.msra.mxu0 0.0
    %1516 = vmatpush.msra.mxu0 0.0
    %1517 = vmatpush.msra.mxu0 0.0
    %1518 = vmatpush.msra.mxu0 %v1503
    %1519 = vmatpush.msra.mxu0 %v1500
    %1520 = vmatpush.msra.mxu0 %v1499
    %1521 = vmatmul.f32.gmra.mxu0 %v1464
    %v1522 = vpop.f32.mrf.mxu0
    %v1523 = vadd.f32 0.0, %v1522
    %1524 = vmatmul.f32.gmra.mxu0 %v1467
    %v1525 = vpop.f32.mrf.mxu0
    %v1526 = vadd.f32 0.0, %v1525
    %1527 = vdwg.mxu0
    %v1528 = vadd.f32 %v1497, %v1523
    %v1529 = vadd.f32 %v1498, %v1526
    %1530 = vst.msk [vmem:[#allocation2 + $0x1] sm:$0xff] %vm470, %v1528
    %1531 = vst.msk [vmem:[#allocation2 + $0x9] sm:$0x7] %vm508, %v1529
    %v1532 = vld [vmem:[#allocation2] sm:$0xff]
    %v1533 = vld [vmem:[#allocation2 + $0x8] sm:$0x7]
    %v1534 = vld [vmem:[#allocation3 + $0xe0] sm:$0xff]
    %v1535 = vld [vmem:[#allocation3 + $0xe8] sm:$0xff]
    %v1536 = vld [vmem:[#allocation3 + $0xf0] sm:$0xf]
    %v1537 = vrot.slane %v1458, 1
    %v1538 = vrot.slane %v1459, 1
    %v1539 = vsel %vm49, %v1537, %v1538
    %v1540 = vsel %vm346, %v1539, 0
    %v1542 = vsel %vm346, %v1538, 0
    %v1545 = vsel %vm443, %v1536, 0
    %1547 = vmatpush.msra.mxu0 0.0
    %1548 = vmatpush.msra.mxu0 0.0
    %1549 = vmatpush.msra.mxu0 0.0
    %1550 = vmatpush.msra.mxu0 0.0
    %1551 = vmatpush.msra.mxu0 0.0
    %1552 = vmatpush.msra.mxu0 0.0
    %1553 = vmatpush.msra.mxu0 0.0
    %1554 = vmatpush.msra.mxu0 0.0
    %1555 = vmatpush.msra.mxu0 0.0
    %1556 = vmatpush.msra.mxu0 0.0
    %1557 = vmatpush.msra.mxu0 0.0
    %1558 = vmatpush.msra.mxu0 0.0
    %1559 = vmatpush.msra.mxu0 0.0
    %1560 = vmatpush.msra.mxu0 %v1545
    %1561 = vmatpush.msra.mxu0 %v1535
    %1562 = vmatpush.msra.mxu0 %v1534
    %1563 = vmatmul.f32.gmra.mxu0 %v1540
    %v1564 = vpop.f32.mrf.mxu0
    %v1565 = vadd.f32 0.0, %v1564
    %1566 = vmatmul.f32.gmra.mxu0 %v1542
    %v1567 = vpop.f32.mrf.mxu0
    %v1568 = vadd.f32 0.0, %v1567
    %1569 = vdwg.mxu0
    %v1570 = vadd.f32 %v1532, %v1565
    %v1571 = vadd.f32 %v1533, %v1568
    %1572 = vst.msk [vmem:[#allocation2] sm:$0xff] %vm470, %v1570
    %1573 = vst.msk [vmem:[#allocation2 + $0x8] sm:$0x7] %vm508, %v1571
    %v1574 = vld [vmem:[#allocation2] sm:$0xff]
    %v1575 = vld [vmem:[#allocation2 + $0x8] sm:$0xf]
    %v1576 = vld [vmem:[#allocation3 + $0xf8] sm:$0x1]
    %v1577 = vperm.slane %v1576, 0
    %v1578 = vadd.f32 %v1574, %v1577
    %v1579 = vadd.f32 %v1575, %v1577
    %v1580 = vmax.f32 %v1578, 0.0
    %v1581 = vmax.f32 %v1579, 0.0
    %v1582 = vld [vmem:[#allocation3 + $0x100] sm:$0xff]
    %v1583 = vld [vmem:[#allocation3 + $0x108] sm:$0xff]
    %v1584 = vld [vmem:[#allocation3 + $0x110] sm:$0xff]
    %v1585 = vld [vmem:[#allocation3 + $0x118] sm:$0x1]
    %v1586 = vld [vmem:[#allocation3 + $0x120] sm:$0xff]
    %v1587 = vld [vmem:[#allocation3 + $0x128] sm:$0xff]
    %v1588 = vld [vmem:[#allocation3 + $0x130] sm:$0xff]
    %v1589 = vld [vmem:[#allocation3 + $0x138] sm:$0x1]
    %v1592 = vrot.slane %v1580, 1
    %v1593 = vrot.slane %v1581, 1
    %v1594 = vsel %vm49, %v1592, %v1593
    %v1595 = vsel %vm470, %v1594, 0
    %v1597 = vsel %vm470, %v1593, 0
    %v1600 = vsel %vm577, %v1589, 0
    %1602 = vmatpush.msra.mxu0 0.0
    %1603 = vmatpush.msra.mxu0 0.0
    %1604 = vmatpush.msra.mxu0 0.0
    %1605 = vmatpush.msra.mxu0 0.0
    %1606 = vmatpush.msra.mxu0 0.0
    %1607 = vmatpush.msra.mxu0 0.0
    %1608 = vmatpush.msra.mxu0 0.0
    %1609 = vmatpush.msra.mxu0 0.0
    %1610 = vmatpush.msra.mxu0 0.0
    %1611 = vmatpush.msra.mxu0 0.0
    %1612 = vmatpush.msra.mxu0 0.0
    %1613 = vmatpush.msra.mxu0 0.0
    %1614 = vmatpush.msra.mxu0 %v1600
    %1615 = vmatpush.msra.mxu0 %v1588
    %1616 = vmatpush.msra.mxu0 %v1587
    %1617 = vmatpush.msra.mxu0 %v1586
    %1618 = vmatmul.f32.gmra.mxu0 %v1595
    %v1619 = vpop.f32.mrf.mxu0
    %v1620 = vadd.f32 0.0, %v1619
    %1621 = vmatmul.f32.gmra.mxu0 %v1597
    %v1622 = vpop.f32.mrf.mxu0
    %v1623 = vadd.f32 0.0, %v1622
    %1624 = vdwg.mxu0
    %v1625 = vsel %vm470, %v1580, 0
    %v1627 = vsel %vm470, %v1581, 0
    %v1630 = vsel %vm577, %v1585, 0
    %1632 = vmatpush.msra.mxu0 0.0
    %1633 = vmatpush.msra.mxu0 0.0
    %1634 = vmatpush.msra.mxu0 0.0
    %1635 = vmatpush.msra.mxu0 0.0
    %1636 = vmatpush.msra.mxu0 0.0
    %1637 = vmatpush.msra.mxu0 0.0
    %1638 = vmatpush.msra.mxu0 0.0
    %1639 = vmatpush.msra.mxu0 0.0
    %1640 = vmatpush.msra.mxu0 0.0
    %1641 = vmatpush.msra.mxu0 0.0
    %1642 = vmatpush.msra.mxu0 0.0
    %1643 = vmatpush.msra.mxu0 0.0
    %1644 = vmatpush.msra.mxu0 %v1630
    %1645 = vmatpush.msra.mxu0 %v1584
    %1646 = vmatpush.msra.mxu0 %v1583
    %1647 = vmatpush.msra.mxu0 %v1582
    %1648 = vmatmul.f32.gmra.mxu0 %v1625
    %v1649 = vpop.f32.mrf.mxu0
    %v1650 = vadd.f32 %v1620, %v1649
    %1651 = vmatmul.f32.gmra.mxu0 %v1627
    %v1652 = vpop.f32.mrf.mxu0
    %v1653 = vadd.f32 %v1623, %v1652
    %1654 = vdwg.mxu0
    %v1655 = vld [vmem:[#allocation3 + $0x140] sm:$0xff]
    %v1656 = vld [vmem:[#allocation3 + $0x148] sm:$0xff]
    %v1657 = vld [vmem:[#allocation3 + $0x150] sm:$0xff]
    %v1658 = vld [vmem:[#allocation3 + $0x158] sm:$0x1]
    %v1659 = vrot.slane %v1580, 2
    %v1660 = vrot.slane %v1581, 2
    %v1661 = vsel %vm63, %v1659, %v1660
    %v1662 = vsel %vm470, %v1661, 0
    %v1664 = vsel %vm470, %v1660, 0
    %v1667 = vsel %vm577, %v1658, 0
    %1669 = vmatpush.msra.mxu0 0.0
    %1670 = vmatpush.msra.mxu0 0.0
    %1671 = vmatpush.msra.mxu0 0.0
    %1672 = vmatpush.msra.mxu0 0.0
    %1673 = vmatpush.msra.mxu0 0.0
    %1674 = vmatpush.msra.mxu0 0.0
    %1675 = vmatpush.msra.mxu0 0.0
    %1676 = vmatpush.msra.mxu0 0.0
    %1677 = vmatpush.msra.mxu0 0.0
    %1678 = vmatpush.msra.mxu0 0.0
    %1679 = vmatpush.msra.mxu0 0.0
    %1680 = vmatpush.msra.mxu0 0.0
    %1681 = vmatpush.msra.mxu0 %v1667
    %1682 = vmatpush.msra.mxu0 %v1657
    %1683 = vmatpush.msra.mxu0 %v1656
    %1684 = vmatpush.msra.mxu0 %v1655
    %1685 = vmatmul.f32.gmra.mxu0 %v1662
    %v1686 = vpop.f32.mrf.mxu0
    %v1687 = vadd.f32 0.0, %v1686
    %1688 = vmatmul.f32.gmra.mxu0 %v1664
    %v1689 = vpop.f32.mrf.mxu0
    %v1690 = vadd.f32 0.0, %v1689
    %1691 = vdwg.mxu0
    %v1692 = vadd.f32 %v1650, %v1687
    %v1693 = vadd.f32 %v1653, %v1690
    %v1694 = vld [vmem:[#allocation3 + $0x160] sm:$0x1]
    %v1695 = vperm.slane %v1694, 0
    %v1696 = vadd.f32 %v1692, %v1695
    %v1697 = vadd.f32 %v1693, %v1695
    %v1698 = vmax.f32 %v1696, 0.0
    %v1699 = vmax.f32 %v1697, 0.0
    %v1700 = vld [vmem:[#allocation3 + $0x168] sm:$0xff]
    %v1701 = vld [vmem:[#allocation3 + $0x170] sm:$0xff]
    %v1702 = vld [vmem:[#allocation3 + $0x178] sm:$0xff]
    %v1703 = vld [vmem:[#allocation3 + $0x180] sm:$0x3f]
    %v1704 = vld [vmem:[#allocation3 + $0x188] sm:$0xff]
    %v1705 = vld [vmem:[#allocation3 + $0x190] sm:$0xff]
    %v1706 = vld [vmem:[#allocation3 + $0x198] sm:$0xff]
    %v1707 = vld [vmem:[#allocation3 + $0x1a0] sm:$0x3f]
    %v1709 = vrot.slane %v1698, 1
    %v1710 = vsel %vm689, %v1709, 0
    %v1713 = vsel %vm63, %v1707, 0
    %1715 = vmatpush.msra.mxu0 0.0
    %1716 = vmatpush.msra.mxu0 0.0
    %1717 = vmatpush.msra.mxu0 0.0
    %1718 = vmatpush.msra.mxu0 0.0
    %1719 = vmatpush.msra.mxu0 0.0
    %1720 = vmatpush.msra.mxu0 0.0
    %1721 = vmatpush.msra.mxu0 0.0
    %1722 = vmatpush.msra.mxu0 0.0
    %1723 = vmatpush.msra.mxu0 0.0
    %1724 = vmatpush.msra.mxu0 0.0
    %1725 = vmatpush.msra.mxu0 0.0
    %1726 = vmatpush.msra.mxu0 0.0
    %1727 = vmatpush.msra.mxu0 %v1713
    %1728 = vmatpush.msra.mxu0 %v1706
    %1729 = vmatpush.msra.mxu0 %v1705
    %1730 = vmatpush.msra.mxu0 %v1704
    %1731 = vmatmul.f32.gmra.mxu0 %v1710
    %v1732 = vpop.f32.mrf.mxu0
    %v1733 = vadd.f32 0.0, %v1732
    %1734 = vdwg.mxu0
    %v1735 = vsel %vm689, %v1698, 0
    %v1738 = vsel %vm63, %v1703, 0
    %1740 = vmatpush.msra.mxu0 0.0
    %1741 = vmatpush.msra.mxu0 0.0
    %1742 = vmatpush.msra.mxu0 0.0
    %1743 = vmatpush.msra.mxu0 0.0
    %1744 = vmatpush.msra.mxu0 0.0
    %1745 = vmatpush.msra.mxu0 0.0
    %1746 = vmatpush.msra.mxu0 0.0
    %1747 = vmatpush.msra.mxu0 0.0
    %1748 = vmatpush.msra.mxu0 0.0
    %1749 = vmatpush.msra.mxu0 0.0
    %1750 = vmatpush.msra.mxu0 0.0
    %1751 = vmatpush.msra.mxu0 0.0
    %1752 = vmatpush.msra.mxu0 %v1738
    %1753 = vmatpush.msra.mxu0 %v1702
    %1754 = vmatpush.msra.mxu0 %v1701
    %1755 = vmatpush.msra.mxu0 %v1700
    %1756 = vmatmul.f32.gmra.mxu0 %v1735
    %v1757 = vpop.f32.mrf.mxu0
    %v1758 = vadd.f32 %v1733, %v1757
    %1759 = vdwg.mxu0
    %v1760 = vld [vmem:[#allocation3 + $0x1a8] sm:$0xff]
    %v1761 = vld [vmem:[#allocation3 + $0x1b0] sm:$0xff]
    %v1762 = vld [vmem:[#allocation3 + $0x1b8] sm:$0xff]
    %v1763 = vld [vmem:[#allocation3 + $0x1c0] sm:$0x3f]
    %v1764 = vrot.slane %v1698, 2
    %v1765 = vsel %vm689, %v1764, 0
    %v1768 = vsel %vm63, %v1763, 0
    %1770 = vmatpush.msra.mxu0 0.0
    %1771 = vmatpush.msra.mxu0 0.0
    %1772 = vmatpush.msra.mxu0 0.0
    %1773 = vmatpush.msra.mxu0 0.0
    %1774 = vmatpush.msra.mxu0 0.0
    %1775 = vmatpush.msra.mxu0 0.0
    %1776 = vmatpush.msra.mxu0 0.0
    %1777 = vmatpush.msra.mxu0 0.0
    %1778 = vmatpush.msra.mxu0 0.0
    %1779 = vmatpush.msra.mxu0 0.0
    %1780 = vmatpush.msra.mxu0 0.0
    %1781 = vmatpush.msra.mxu0 0.0
    %1782 = vmatpush.msra.mxu0 %v1768
    %1783 = vmatpush.msra.mxu0 %v1762
    %1784 = vmatpush.msra.mxu0 %v1761
    %1785 = vmatpush.msra.mxu0 %v1760
    %1786 = vmatmul.f32.gmra.mxu0 %v1765
    %v1787 = vpop.f32.mrf.mxu0
    %v1788 = vadd.f32 0.0, %v1787
    %1789 = vdwg.mxu0
    %v1790 = vadd.f32 %v1758, %v1788
    %v1791 = vld [vmem:[#allocation3 + $0x1c8] sm:$0xff]
    %v1792 = vld [vmem:[#allocation3 + $0x1d0] sm:$0xff]
    %v1793 = vld [vmem:[#allocation3 + $0x1d8] sm:$0xff]
    %v1794 = vld [vmem:[#allocation3 + $0x1e0] sm:$0x3f]
    %v1795 = vrot.slane %v1698, 3
    %v1796 = vsel %vm689, %v1795, 0
    %v1799 = vsel %vm63, %v1794, 0
    %1801 = vmatpush.msra.mxu0 0.0
    %1802 = vmatpush.msra.mxu0 0.0
    %1803 = vmatpush.msra.mxu0 0.0
    %1804 = vmatpush.msra.mxu0 0.0
    %1805 = vmatpush.msra.mxu0 0.0
    %1806 = vmatpush.msra.mxu0 0.0
    %1807 = vmatpush.msra.mxu0 0.0
    %1808 = vmatpush.msra.mxu0 0.0
    %1809 = vmatpush.msra.mxu0 0.0
    %1810 = vmatpush.msra.mxu0 0.0
    %1811 = vmatpush.msra.mxu0 0.0
    %1812 = vmatpush.msra.mxu0 0.0
    %1813 = vmatpush.msra.mxu0 %v1799
    %1814 = vmatpush.msra.mxu0 %v1793
    %1815 = vmatpush.msra.mxu0 %v1792
    %1816 = vmatpush.msra.mxu0 %v1791
    %1817 = vmatmul.f32.gmra.mxu0 %v1796
    %v1818 = vpop.f32.mrf.mxu0
    %v1819 = vadd.f32 0.0, %v1818
    %1820 = vdwg.mxu0
    %v1821 = vadd.f32 %v1790, %v1819
    %v1822 = vld [vmem:[#allocation3 + $0x1e8] sm:$0xff]
    %v1823 = vld [vmem:[#allocation3 + $0x1f0] sm:$0xff]
    %v1824 = vld [vmem:[#allocation3 + $0x1f8] sm:$0xff]
    %v1825 = vld [vmem:[#allocation3 + $0x200] sm:$0x3f]
    %v1826 = vrot.slane %v1698, 4
    %v1827 = vsel %vm689, %v1826, 0
    %v1830 = vsel %vm63, %v1825, 0
    %1832 = vmatpush.msra.mxu0 0.0
    %1833 = vmatpush.msra.mxu0 0.0
    %1834 = vmatpush.msra.mxu0 0.0
    %1835 = vmatpush.msra.mxu0 0.0
    %1836 = vmatpush.msra.mxu0 0.0
    %1837 = vmatpush.msra.mxu0 0.0
    %1838 = vmatpush.msra.mxu0 0.0
    %1839 = vmatpush.msra.mxu0 0.0
    %1840 = vmatpush.msra.mxu0 0.0
    %1841 = vmatpush.msra.mxu0 0.0
    %1842 = vmatpush.msra.mxu0 0.0
    %1843 = vmatpush.msra.mxu0 0.0
    %1844 = vmatpush.msra.mxu0 %v1830
    %1845 = vmatpush.msra.mxu0 %v1824
    %1846 = vmatpush.msra.mxu0 %v1823
    %1847 = vmatpush.msra.mxu0 %v1822
    %1848 = vmatmul.f32.gmra.mxu0 %v1827
    %v1849 = vpop.f32.mrf.mxu0
    %v1850 = vadd.f32 0.0, %v1849
    %1851 = vdwg.mxu0
    %v1852 = vadd.f32 %v1821, %v1850
    %v1853 = vld [vmem:[#allocation3 + $0x208] sm:$0xff]
    %v1854 = vld [vmem:[#allocation3 + $0x210] sm:$0xff]
    %v1855 = vld [vmem:[#allocation3 + $0x218] sm:$0xff]
    %v1856 = vld [vmem:[#allocation3 + $0x220] sm:$0x3f]
    %v1857 = vrot.slane %v1698, 5
    %v1858 = vsel %vm689, %v1857, 0
    %v1861 = vsel %vm63, %v1856, 0
    %1863 = vmatpush.msra.mxu0 0.0
    %1864 = vmatpush.msra.mxu0 0.0
    %1865 = vmatpush.msra.mxu0 0.0
    %1866 = vmatpush.msra.mxu0 0.0
    %1867 = vmatpush.msra.mxu0 0.0
    %1868 = vmatpush.msra.mxu0 0.0
    %1869 = vmatpush.msra.mxu0 0.0
    %1870 = vmatpush.msra.mxu0 0.0
    %1871 = vmatpush.msra.mxu0 0.0
    %1872 = vmatpush.msra.mxu0 0.0
    %1873 = vmatpush.msra.mxu0 0.0
    %1874 = vmatpush.msra.mxu0 0.0
    %1875 = vmatpush.msra.mxu0 %v1861
    %1876 = vmatpush.msra.mxu0 %v1855
    %1877 = vmatpush.msra.mxu0 %v1854
    %1878 = vmatpush.msra.mxu0 %v1853
    %1879 = vmatmul.f32.gmra.mxu0 %v1858
    %v1880 = vpop.f32.mrf.mxu0
    %v1881 = vadd.f32 0.0, %v1880
    %1882 = vdwg.mxu0
    %v1883 = vadd.f32 %v1852, %v1881
    %v1884 = vld [vmem:[#allocation3 + $0x228] sm:$0xff]
    %v1885 = vld [vmem:[#allocation3 + $0x230] sm:$0xff]
    %v1886 = vld [vmem:[#allocation3 + $0x238] sm:$0xff]
    %v1887 = vld [vmem:[#allocation3 + $0x240] sm:$0x3f]
    %v1888 = vrot.slane %v1698, 6
    %v1889 = vsel %vm689, %v1888, 0
    %v1892 = vsel %vm63, %v1887, 0
    %1894 = vmatpush.msra.mxu0 0.0
    %1895 = vmatpush.msra.mxu0 0.0
    %1896 = vmatpush.msra.mxu0 0.0
    %1897 = vmatpush.msra.mxu0 0.0
    %1898 = vmatpush.msra.mxu0 0.0
    %1899 = vmatpush.msra.mxu0 0.0
    %1900 = vmatpush.msra.mxu0 0.0
    %1901 = vmatpush.msra.mxu0 0.0
    %1902 = vmatpush.msra.mxu0 0.0
    %1903 = vmatpush.msra.mxu0 0.0
    %1904 = vmatpush.msra.mxu0 0.0
    %1905 = vmatpush.msra.mxu0 0.0
    %1906 = vmatpush.msra.mxu0 %v1892
    %1907 = vmatpush.msra.mxu0 %v1886
    %1908 = vmatpush.msra.mxu0 %v1885
    %1909 = vmatpush.msra.mxu0 %v1884
    %1910 = vmatmul.f32.gmra.mxu0 %v1889
    %v1911 = vpop.f32.mrf.mxu0
    %v1912 = vadd.f32 0.0, %v1911
    %1913 = vdwg.mxu0
    %v1914 = vadd.f32 %v1883, %v1912
    %v1915 = vld [vmem:[#allocation3 + $0x248] sm:$0xff]
    %v1916 = vld [vmem:[#allocation3 + $0x250] sm:$0xff]
    %v1917 = vld [vmem:[#allocation3 + $0x258] sm:$0xff]
    %v1918 = vld [vmem:[#allocation3 + $0x260] sm:$0x3f]
    %v1919 = vrot.slane %v1698, 7
    %v1920 = vsel %vm689, %v1919, 0
    %v1923 = vsel %vm63, %v1918, 0
    %1925 = vmatpush.msra.mxu0 0.0
    %1926 = vmatpush.msra.mxu0 0.0
    %1927 = vmatpush.msra.mxu0 0.0
    %1928 = vmatpush.msra.mxu0 0.0
    %1929 = vmatpush.msra.mxu0 0.0
    %1930 = vmatpush.msra.mxu0 0.0
    %1931 = vmatpush.msra.mxu0 0.0
    %1932 = vmatpush.msra.mxu0 0.0
    %1933 = vmatpush.msra.mxu0 0.0
    %1934 = vmatpush.msra.mxu0 0.0
    %1935 = vmatpush.msra.mxu0 0.0
    %1936 = vmatpush.msra.mxu0 0.0
    %1937 = vmatpush.msra.mxu0 %v1923
    %1938 = vmatpush.msra.mxu0 %v1917
    %1939 = vmatpush.msra.mxu0 %v1916
    %1940 = vmatpush.msra.mxu0 %v1915
    %1941 = vmatmul.f32.gmra.mxu0 %v1920
    %v1942 = vpop.f32.mrf.mxu0
    %v1943 = vadd.f32 0.0, %v1942
    %1944 = vdwg.mxu0
    %v1945 = vadd.f32 %v1914, %v1943
    %v1946 = vld [vmem:[#allocation3 + $0x268] sm:$0xff]
    %v1947 = vld [vmem:[#allocation3 + $0x270] sm:$0xff]
    %v1948 = vld [vmem:[#allocation3 + $0x278] sm:$0xff]
    %v1949 = vld [vmem:[#allocation3 + $0x280] sm:$0x3f]
    %v1951 = vsel %vm689, %v1699, 0
    %v1954 = vsel %vm63, %v1949, 0
    %1956 = vmatpush.msra.mxu0 0.0
    %1957 = vmatpush.msra.mxu0 0.0
    %1958 = vmatpush.msra.mxu0 0.0
    %1959 = vmatpush.msra.mxu0 0.0
    %1960 = vmatpush.msra.mxu0 0.0
    %1961 = vmatpush.msra.mxu0 0.0
    %1962 = vmatpush.msra.mxu0 0.0
    %1963 = vmatpush.msra.mxu0 0.0
    %1964 = vmatpush.msra.mxu0 0.0
    %1965 = vmatpush.msra.mxu0 0.0
    %1966 = vmatpush.msra.mxu0 0.0
    %1967 = vmatpush.msra.mxu0 0.0
    %1968 = vmatpush.msra.mxu0 %v1954
    %1969 = vmatpush.msra.mxu0 %v1948
    %1970 = vmatpush.msra.mxu0 %v1947
    %1971 = vmatpush.msra.mxu0 %v1946
    %1972 = vmatmul.f32.gmra.mxu0 %v1951
    %v1973 = vpop.f32.mrf.mxu0
    %v1974 = vadd.f32 0.0, %v1973
    %1975 = vdwg.mxu0
    %v1976 = vadd.f32 %v1945, %v1974
    %v1977 = vld [vmem:[#allocation3 + $0x288] sm:$0xff]
    %v1978 = vld [vmem:[#allocation3 + $0x290] sm:$0xff]
    %v1979 = vld [vmem:[#allocation3 + $0x298] sm:$0xff]
    %v1980 = vld [vmem:[#allocation3 + $0x2a0] sm:$0x3f]
    %v1981 = vrot.slane %v1699, 1
    %v1982 = vsel %vm689, %v1981, 0
    %v1985 = vsel %vm63, %v1980, 0
    %1987 = vmatpush.msra.mxu0 0.0
    %1988 = vmatpush.msra.mxu0 0.0
    %1989 = vmatpush.msra.mxu0 0.0
    %1990 = vmatpush.msra.mxu0 0.0
    %1991 = vmatpush.msra.mxu0 0.0
    %1992 = vmatpush.msra.mxu0 0.0
    %1993 = vmatpush.msra.mxu0 0.0
    %1994 = vmatpush.msra.mxu0 0.0
    %1995 = vmatpush.msra.mxu0 0.0
    %1996 = vmatpush.msra.mxu0 0.0
    %1997 = vmatpush.msra.mxu0 0.0
    %1998 = vmatpush.msra.mxu0 0.0
    %1999 = vmatpush.msra.mxu0 %v1985
    %2000 = vmatpush.msra.mxu0 %v1979
    %2001 = vmatpush.msra.mxu0 %v1978
    %2002 = vmatpush.msra.mxu0 %v1977
    %2003 = vmatmul.f32.gmra.mxu0 %v1982
    %v2004 = vpop.f32.mrf.mxu0
    %v2005 = vadd.f32 0.0, %v2004
    %2006 = vdwg.mxu0
    %v2007 = vadd.f32 %v1976, %v2005
    %v2008 = vld [vmem:[#allocation3 + $0x2a8] sm:$0x1]
    %v2009 = vadd.f32 %v2007, %v2008
    %v2010 = vmax.f32 %v2009, 0.0
    %v2011 = vld [vmem:[#allocation3 + $0x2b0] sm:$0xff]
    %v2012 = vld [vmem:[#allocation3 + $0x2b8] sm:$0xff]
    %v2013 = vld [vmem:[#allocation3 + $0x2c0] sm:$0xff]
    %v2014 = vld [vmem:[#allocation3 + $0x2c8] sm:$0xff]
    %v2015 = vld [vmem:[#allocation3 + $0x2d0] sm:$0xff]
    %v2016 = vld [vmem:[#allocation3 + $0x2d8] sm:$0xff]
    %v2017 = vld [vmem:[#allocation3 + $0x2e0] sm:$0xff]
    %v2018 = vld [vmem:[#allocation3 + $0x2e8] sm:$0xff]
    %v2019 = vld [vmem:[#allocation3 + $0x2f0] sm:$0xff]
    %v2020 = vld [vmem:[#allocation3 + $0x2f8] sm:$0xff]
    %v2021 = vld [vmem:[#allocation3 + $0x300] sm:$0xff]
    %v2022 = vld [vmem:[#allocation3 + $0x308] sm:$0xff]
    %v2023 = vld [vmem:[#allocation3 + $0x310] sm:$0xf]
    %v2024 = vld [vmem:[#allocation3 + $0x318] sm:$0x1]
    %v2026 = vsel %vm1005, %v2010, 0
    %v2029 = vsel %vm443, %v2023, 0
    %2031 = vmatpush.msra.mxu0 0.0
    %2032 = vmatpush.msra.mxu0 0.0
    %2033 = vmatpush.msra.mxu0 0.0
    %2034 = vmatpush.msra.mxu0 %v2029
    %2035 = vmatpush.msra.mxu0 %v2022
    %2036 = vmatpush.msra.mxu0 %v2021
    %2037 = vmatpush.msra.mxu0 %v2020
    %2038 = vmatpush.msra.mxu0 %v2019
    %2039 = vmatpush.msra.mxu0 %v2018
    %2040 = vmatpush.msra.mxu0 %v2017
    %2041 = vmatpush.msra.mxu0 %v2016
    %2042 = vmatpush.msra.mxu0 %v2015
    %2043 = vmatpush.msra.mxu0 %v2014
    %2044 = vmatpush.msra.mxu0 %v2013
    %2045 = vmatpush.msra.mxu0 %v2012
    %2046 = vmatpush.msra.mxu0 %v2011
    %2047 = vmatmul.f32.gmra.mxu0 %v2026
    %v2048 = vpop.f32.mrf.mxu0
    %v2049 = vadd.f32 %v2024, %v2048
    %2050 = vdwg.mxu0
    %2052 = vrot.lane.b32.xlu0 %v2049, 127
    %v2053 = vpop.permute.xlu0 %2052
    %v2055 = vsel %vm1036, %v2053, 0.0
    %2056 = vadd.xlane.f32.xlu0 %v2055
    %v2057 = vpop.xlane.xlu0 %2056
    %v2058 = vmul.f32 %v2057, %v1046
    %v2059 = vsub.f32 %v2049, %v2058
    %2060 = vset.pattern.permute.xlu0 0
    %2061 = vperm.xlu0 %2060, %v2049
    %v2062 = vpop.permute.xlu0 %2061
    %v2064 = vadd.f32 %v2062, %v2059
    %s2065 = scalar_lea.vmem %s2, 1
    %2066 = vst.msk [vmem:[%s2065] sm:$0x1] %vm1054, %v2049
    %2067 = vst.msk [vmem:[%s2065] sm:$0x1] %vm1056, %v2049
    %2069 = vrot.lane.b32.xlu0 %v2064, 5
    %v2070 = vpop.permute.xlu0 %2069
    %2072 = vst.msk [vmem:[%s2065] sm:$0x1] %vm1062, %v2070
    // Predicated region
    $region14: #{dddqn_forward.1} parent=1 // pred_check
      _
    $region15: #{dddqn_forward.1} parent=1 // pred_check_branch
      %2074 = sbr.rel (0) target = $region17
    $region16: #{dddqn_forward.1} parent=1 // pred_region
      _
    $region17: #{dddqn_forward.1} parent=1 // pred_fallthru
      _
    // Predicated region
    $region18: #{dddqn_forward.1} parent=1 // pred_check
      _
    $region19: #{dddqn_forward.1} parent=1 // pred_check_branch
      %2076 = sbr.rel (0) target = $region21
    $region20: #{dddqn_forward.1} parent=1 // pred_region
      _
    $region21: #{dddqn_forward.1} parent=1 // pred_fallthru
      _
    %2077 = vsyncpa [#allocation4], 1

</llo_original>
